<compile_context>
chip_gen: v7x
topology: tpu7x:2x2x1
jax: 0.10.0
libtpu: 0.0.40
codegen_flags: <defaults>
</compile_context>

<pallas_src>
import jax
import jax.numpy as jnp
import numpy as np
from jax import lax
from jax.experimental import pallas as pl
from jax.experimental.pallas import tpu as pltpu


def _round_up(x, m):
    return ((x + m - 1) // m) * m


# ----------------------------- Pallas kernel ---------------------------------

def _make_qst_kernel(num_layers: int, seq_len: int, batch_tile: int,
                     hidden_size: int, vocab_pad: int):
    """Ref order:
       inputs : ids (nb, T*Bt, 1) int32 block -> kernel sees (1, T*Bt, 1),
                [w_in_l (in_l,4H), whh_l (H,4H) f32, bias_l (1,4H)] * L,
                wfc_t (2*L*H, E_pad), bfc (1, E_pad)
       outputs: out (Bt, E_pad)
       scratch: pre_scr (T*Bt, 4H) [, seq_scr (T*Bt, H) if L > 1]
       Row layout inside a batch block is time-major: row = t*Bt + b.
       Gate columns of all weights/biases are pre-permuted to [i | f | o | g].
       Layer 0's w_in is the fused table: row v = tanh(emb[v]) @ W_ih0^T.
    """
    H = hidden_size
    Bt = batch_tile
    T = seq_len
    L = num_layers
    Vp = vocab_pad
    R = T * Bt

    def kernel(*refs):
        ids_ref = refs[0]
        layer_refs = refs[1:1 + 3 * L]
        wfc_ref = refs[1 + 3 * L]
        bfc_ref = refs[2 + 3 * L]
        out_ref = refs[3 + 3 * L]
        scratch = refs[4 + 3 * L:]
        pre_scr = scratch[0]
        seq_scr = scratch[1] if L > 1 else None

        finals = []  # [h_0, c_0, h_1, c_1, ...] as SSA values
        for l in range(L):
            w_in_ref = layer_refs[3 * l]       # (in_l, 4H)
            whh_ref = layer_refs[3 * l + 1]    # (H, 4H) f32
            bias_ref = layer_refs[3 * l + 2]   # (1, 4H) = b_ih + b_hh (permuted)

            # ---- hoisted input->hidden projection: one big MXU matmul ----
            if l == 0:
                # in-kernel embedding "gather": one-hot(ids) @ fused table.
                ids = ids_ref[0]                                   # (R, 1) int32
                vpos = lax.broadcasted_iota(jnp.int32, (R, Vp), 1)
                onehot = (vpos == ids).astype(w_in_ref.dtype)      # (R, Vp)
                pre_scr[...] = (
                    jnp.dot(onehot, w_in_ref[...],
                            preferred_element_type=jnp.float32)
                    + bias_ref[...])
            else:
                pre_scr[...] = (
                    jnp.dot(seq_scr[...].astype(w_in_ref.dtype), w_in_ref[...],
                            preferred_element_type=jnp.float32)
                    + bias_ref[...])

            # Recurrent weight loaded once per layer (hoisted out of the loop).
            whh = whh_ref[...]                                     # (H, 4H) f32

            def step(h, c, r0, l=l):
                gates = pre_scr[pl.ds(r0, Bt), :] + jnp.dot(
                    h, whh, preferred_element_type=jnp.float32)    # (Bt, 4H)
                # gate columns are pre-permuted to [i | f | o | g]:
                sig = jax.nn.sigmoid(gates[:, :3 * H])             # i, f, o
                g_g = jnp.tanh(gates[:, 3 * H:])                   # g
                c_new = sig[:, H:2 * H] * c + sig[:, :H] * g_g
                h_new = sig[:, 2 * H:3 * H] * jnp.tanh(c_new)
                if l + 1 < L:
                    seq_scr[pl.ds(r0, Bt), :] = h_new              # next layer's input
                return h_new, c_new

            h = jnp.zeros((Bt, H), jnp.float32)
            c = jnp.zeros((Bt, H), jnp.float32)
            if T <= 32:
                # Fully unrolled: LLO overlaps next step's Whh matmul with gate
                # math; h/c stay in vregs (no per-step VMEM round-trips).
                for t in range(T):
                    h, c = step(h, c, t * Bt)
            else:
                def body(t, carry):
                    h_, c_ = carry
                    r0 = pl.multiple_of(t * Bt, Bt)
                    return step(h_, c_, r0)
                h, c = lax.fori_loop(0, T, body, (h, c), unroll=4)

            finals += [h, c]

        # tanh(cat(h,c)) @ Wfc^T + b  ==  sum_k tanh(part_k) @ Wfc^T[k*H:(k+1)*H]
        # (2*L small lane-dense matmuls; no lane-concat shuffles, no feat scratch)
        acc = bfc_ref[...].astype(jnp.float32)                     # (1, E_pad)
        acc = acc + jnp.dot(jnp.tanh(finals[0]).astype(wfc_ref.dtype),
                            wfc_ref[0:H, :],
                            preferred_element_type=jnp.float32)
        for k in range(1, 2 * L):
            acc = acc + jnp.dot(jnp.tanh(finals[k]).astype(wfc_ref.dtype),
                                wfc_ref[k * H:(k + 1) * H, :],
                                preferred_element_type=jnp.float32)
        out_ref[...] = acc.astype(out_ref.dtype)

    return kernel


# ------------------------------ Wrapper ---------------------------------------

def qst_encoder_forward(question, params, *, num_layers, hidden_size, embed_size,
                        batch_tile=None, use_bf16=False):
    B, T = question.shape
    V, E = params["emb"].shape
    H = hidden_size
    L = num_layers

    # Batch padding / tiling: fill f32 sublanes (>=8) and expose a parallel grid
    # axis.  min(128, ...) guarantees nb >= 2 once B_pad >= 256 (v7x megacore);
    # on v5e pass batch_tile=256 explicitly for fewer, bigger grid steps.
    if batch_tile is None:
        batch_tile = min(128, _round_up(B, 8))
    Bt = batch_tile
    B_pad = _round_up(max(B, Bt), Bt)
    nb = B_pad // Bt

    V_pad = _round_up(V, 128)
    E_out_pad = _round_up(embed_size, 128)   # lane-dense HBM output store

    # bf16 is used only on the non-recurrent MXU operands (table0 / W_ih / W_fc);
    # W_hh and all gate/state math stay f32 (v5e has no bf16 VPU/EUP, and bf16
    # on the recurrent path drifts over long sequences).
    wdtype = jnp.bfloat16 if use_bf16 else jnp.float32

    # ids: (B,T) -> time-major, batch-padded, per-block slabs with row = t*Bt + b.
    # This tiny int32 reshuffle is the ONLY host-side activation rearrangement;
    # the (B,T,E) embedding activations are never materialized in HBM.
    q_tm = jnp.transpose(question.astype(jnp.int32))               # (T, B)
    if B_pad != B:
        q_tm = jnp.pad(q_tm, ((0, 0), (0, B_pad - B)))
    ids = (q_tm.reshape(T, nb, Bt).transpose(1, 0, 2)
               .reshape(nb, T * Bt, 1))                            # (nb, T*Bt, 1)

    def permute_gates(w):
        # torch gate order [i, f, g, o] (along leading 4H dim) -> [i, f, o, g]
        return jnp.concatenate([w[0:H], w[H:2 * H], w[3 * H:4 * H], w[2 * H:3 * H]],
                               axis=0)

    kernel_args = [ids]
    in_specs = [pl.BlockSpec((1, T * Bt, 1), lambda i: (i, 0, 0))]
    for l in range(L):
        wih, whh, bih, bhh = params["layers"][l]   # (4H,in),(4H,H),(4H,),(4H,)
        wih_p = permute_gates(wih)
        whh_p = permute_gates(whh)
        bias_p = permute_gates(bih + bhh)
        if l == 0:
            # Fused gather table: row v = tanh(emb[v]) @ W_ih0^T (gate-permuted).
            table0 = jnp.dot(jnp.tanh(params["emb"].astype(jnp.float32)),
                             jnp.transpose(wih_p),
                             preferred_element_type=jnp.float32)    # (V, 4H)
            w_in = jnp.pad(table0, ((0, V_pad - V), (0, 0))).astype(wdtype)
            in_rows = V_pad
        else:
            w_in = jnp.transpose(wih_p).astype(wdtype)              # (H, 4H)
            in_rows = H
        kernel_args += [
            w_in,
            jnp.transpose(whh_p).astype(jnp.float32),               # recurrent: f32
            bias_p[None, :].astype(jnp.float32),                    # (1, 4H)
        ]
        in_specs += [
            pl.BlockSpec((in_rows, 4 * H), lambda i: (0, 0)),
            pl.BlockSpec((H, 4 * H), lambda i: (0, 0)),
            pl.BlockSpec((1, 4 * H), lambda i: (0, 0)),
        ]

    wfc_t = jnp.transpose(params["wfc"]).astype(wdtype)             # (2LH, embed)
    wfc_t = jnp.pad(wfc_t, ((0, 0), (0, E_out_pad - embed_size)))
    bfc = jnp.pad(params["bfc"].astype(jnp.float32),
                  (0, E_out_pad - embed_size))[None, :]             # (1, E_pad)
    kernel_args += [wfc_t, bfc]
    in_specs += [
        pl.BlockSpec((2 * L * H, E_out_pad), lambda i: (0, 0)),
        pl.BlockSpec((1, E_out_pad), lambda i: (0, 0)),
    ]

    scratch_shapes = [pltpu.VMEM((T * Bt, 4 * H), jnp.float32)]     # pre-gates
    if L > 1:
        scratch_shapes.append(pltpu.VMEM((T * Bt, H), jnp.float32))  # layer out seq

    kernel = _make_qst_kernel(L, T, Bt, H, V_pad)

    out = pl.pallas_call(
        kernel,
        out_shape=jax.ShapeDtypeStruct((B_pad, E_out_pad), jnp.float32),
        grid_spec=pltpu.PrefetchScalarGridSpec(
            num_scalar_prefetch=0,
            grid=(nb,),
            in_specs=in_specs,
            out_specs=pl.BlockSpec((Bt, E_out_pad), lambda i: (i, 0)),
            scratch_shapes=scratch_shapes,
        ),
        compiler_params=pltpu.CompilerParams(
            dimension_semantics=("parallel",),
            vmem_limit_bytes=32 * 1024 * 1024),
    )(*kernel_args)

    return out[:B, :embed_size]


# --------------------------- Pure-JAX reference -------------------------------

def qst_encoder_reference(question, params, *, num_layers, hidden_size):
    H = hidden_size
    x = jnp.tanh(params["emb"][question])           # (B, T, E)
    x = jnp.transpose(x, (1, 0, 2))                 # (T, B, E)
    B = question.shape[0]
    finals = []
    inp = x
    for l in range(num_layers):
        wih, whh, bih, bhh = params["layers"][l]

        def step(carry, x_t, wih=wih, whh=whh, bih=bih, bhh=bhh):
            h, c = carry
            gates = (jnp.dot(x_t, wih.T, preferred_element_type=jnp.float32) + bih
                     + jnp.dot(h, whh.T, preferred_element_type=jnp.float32) + bhh)
            i_g = jax.nn.sigmoid(gates[:, 0 * H:1 * H])
            f_g = jax.nn.sigmoid(gates[:, 1 * H:2 * H])
            g_g = jnp.tanh(gates[:, 2 * H:3 * H])
            o_g = jax.nn.sigmoid(gates[:, 3 * H:4 * H])
            c = f_g * c + i_g * g_g
            h = o_g * jnp.tanh(c)
            return (h, c), h

        h0 = jnp.zeros((B, H), jnp.float32)
        c0 = jnp.zeros((B, H), jnp.float32)
        (h, c), outs = lax.scan(step, (h0, c0), inp)
        inp = outs
        finals.append(h)
        finals.append(c)
    feat = jnp.tanh(jnp.concatenate(finals, axis=-1))
    return jnp.dot(feat, params["wfc"].T, preferred_element_type=jnp.float32) + params["bfc"]


# ---------------------------------- Main ---------------------------------------

if __name__ == "__main__":
    qst_vocab_size = 50
    word_embed_size = 32
    hidden_size = 32
    num_layers = 2
    embed_size = 32
    B, T = 2, 8

    key = jax.random.PRNGKey(0)
    keys = jax.random.split(key, 4 + 4 * num_layers)

    params = {
        "emb": 0.1 * jax.random.normal(keys[0], (qst_vocab_size, word_embed_size), jnp.float32),
        "wfc": 0.1 * jax.random.normal(keys[1], (embed_size, 2 * num_layers * hidden_size), jnp.float32),
        "bfc": 0.1 * jax.random.normal(keys[2], (embed_size,), jnp.float32),
        "layers": [],
    }
    for l in range(num_layers):
        in_l = word_embed_size if l == 0 else hidden_size
        k0, k1, k2, k3 = keys[4 + 4 * l: 8 + 4 * l]
        params["layers"].append((
            0.1 * jax.random.normal(k0, (4 * hidden_size, in_l), jnp.float32),        # weight_ih_l{l}
            0.1 * jax.random.normal(k1, (4 * hidden_size, hidden_size), jnp.float32),  # weight_hh_l{l}
            0.1 * jax.random.normal(k2, (4 * hidden_size,), jnp.float32),              # bias_ih_l{l}
            0.1 * jax.random.normal(k3, (4 * hidden_size,), jnp.float32),              # bias_hh_l{l}
        ))

    question = jax.random.randint(keys[3], (B, T), 0, qst_vocab_size, dtype=jnp.int32)

    out = qst_encoder_forward(
        question, params,
        num_layers=num_layers, hidden_size=hidden_size, embed_size=embed_size,
    )
    out = jax.block_until_ready(out)

    ref = jax.block_until_ready(
        qst_encoder_reference(question, params, num_layers=num_layers, hidden_size=hidden_size)
    )
    np.testing.assert_allclose(np.asarray(out), np.asarray(ref), rtol=2e-2, atol=2e-2)

    print("KERNEL_OK")
</pallas_src>

<mosaic_0001>
module attributes {stable_mosaic.version = 11 : i64} {
  func.func @kernel(%arg0: i32, %arg1: memref<1x64x1xi32, #tpu.memory_space<vmem>>, %arg2: memref<128x128xf32, #tpu.memory_space<vmem>>, %arg3: memref<32x128xf32, #tpu.memory_space<vmem>>, %arg4: memref<1x128xf32, #tpu.memory_space<vmem>>, %arg5: memref<32x128xf32, #tpu.memory_space<vmem>>, %arg6: memref<32x128xf32, #tpu.memory_space<vmem>>, %arg7: memref<1x128xf32, #tpu.memory_space<vmem>>, %arg8: memref<128x128xf32, #tpu.memory_space<vmem>>, %arg9: memref<1x128xf32, #tpu.memory_space<vmem>>, %arg10: memref<8x128xf32, #tpu.memory_space<vmem>>, %arg11: memref<64x128xf32, #tpu.memory_space<vmem>>, %arg12: memref<64x32xf32, #tpu.memory_space<vmem>>) attributes {dimension_semantics = [#tpu.dimension_semantics<parallel>], iteration_bounds = array<i64: 1>, scalar_prefetch = 0 : i64, scratch_operands = 2 : i64, tpu.core_type = #tpu.core_type<tc>, window_params = [{transform_indices = @transform_0, window_bounds = array<i64: 1, 64, 1>}, {pipeline_mode = #tpu.pipeline_mode<synchronous>, transform_indices = @transform_1, window_bounds = array<i64: 128, 128>}, {pipeline_mode = #tpu.pipeline_mode<synchronous>, transform_indices = @transform_2, window_bounds = array<i64: 32, 128>}, {pipeline_mode = #tpu.pipeline_mode<synchronous>, transform_indices = @transform_3, window_bounds = array<i64: 1, 128>}, {pipeline_mode = #tpu.pipeline_mode<synchronous>, transform_indices = @transform_4, window_bounds = array<i64: 32, 128>}, {pipeline_mode = #tpu.pipeline_mode<synchronous>, transform_indices = @transform_5, window_bounds = array<i64: 32, 128>}, {pipeline_mode = #tpu.pipeline_mode<synchronous>, transform_indices = @transform_6, window_bounds = array<i64: 1, 128>}, {pipeline_mode = #tpu.pipeline_mode<synchronous>, transform_indices = @transform_7, window_bounds = array<i64: 128, 128>}, {pipeline_mode = #tpu.pipeline_mode<synchronous>, transform_indices = @transform_8, window_bounds = array<i64: 1, 128>}, {transform_indices = @transform_9, window_bounds = array<i64: 8, 128>}]} {
    %c0 = arith.constant 0 : index
    %c0_0 = arith.constant 0 : index
    %c0_1 = arith.constant 0 : index
    %0 = vector.load %arg1[%c0, %c0_0, %c0_1] : memref<1x64x1xi32, #tpu.memory_space<vmem>>, vector<1x64x1xi32>
    %1 = vector.shape_cast %0 : vector<1x64x1xi32> to vector<64x1xi32>
    %2 = tpu.iota {dimensions = array<i32: 1>} : vector<64x128xi32>
    %3 = vector.broadcast %1 : vector<64x1xi32> to vector<64x128xi32>
    %4 = arith.cmpi eq, %2, %3 : vector<64x128xi32>
    %5 = arith.extui %4 : vector<64x128xi1> to vector<64x128xi32>
    %6 = arith.sitofp %5 : vector<64x128xi32> to vector<64x128xf32>
    %c0_2 = arith.constant 0 : index
    %c0_3 = arith.constant 0 : index
    %7 = vector.load %arg2[%c0_2, %c0_3] : memref<128x128xf32, #tpu.memory_space<vmem>>, vector<128x128xf32>
    %cst = arith.constant dense<0.000000e+00> : vector<64x128xf32>
    %8 = tpu.matmul %6, %7, %cst {dimension_numbers = #tpu.dot_dimension_numbers<[1], [0], [0], [1], [0, 0, 1, 1], [], []>} : vector<64x128xf32>, vector<128x128xf32>, vector<64x128xf32> -> vector<64x128xf32>
    %c0_4 = arith.constant 0 : index
    %c0_5 = arith.constant 0 : index
    %9 = vector.load %arg4[%c0_4, %c0_5] : memref<1x128xf32, #tpu.memory_space<vmem>>, vector<1x128xf32>
    %10 = vector.broadcast %9 : vector<1x128xf32> to vector<64x128xf32>
    %11 = arith.addf %8, %10 : vector<64x128xf32>
    %c0_6 = arith.constant 0 : index
    %c0_7 = arith.constant 0 : index
    %12 = vector.load %arg11[%c0_6, %c0_7] : memref<64x128xf32, #tpu.memory_space<vmem>>, vector<64x128xf32>
    tpu.vector_store %arg11[%c0_6, %c0_7], %11 {strides = array<i32>} : memref<64x128xf32, #tpu.memory_space<vmem>>, vector<64x128xf32>,
    %c0_8 = arith.constant 0 : index
    %c0_9 = arith.constant 0 : index
    %13 = vector.load %arg3[%c0_8, %c0_9] : memref<32x128xf32, #tpu.memory_space<vmem>>, vector<32x128xf32>
    %cst_10 = arith.constant 0.000000e+00 : f32
    %14 = vector.broadcast %cst_10 : f32 to vector<8x32xf32>
    %cst_11 = arith.constant 0.000000e+00 : f32
    %15 = vector.broadcast %cst_11 : f32 to vector<8x32xf32>
    %c0_12 = arith.constant 0 : index
    %c0_13 = arith.constant 0 : index
    %16 = vector.load %arg11[%c0_12, %c0_13] : memref<64x128xf32, #tpu.memory_space<vmem>>, vector<8x128xf32>
    %cst_14 = arith.constant dense<0.000000e+00> : vector<8x128xf32>
    %17 = tpu.matmul %14, %13, %cst_14 {dimension_numbers = #tpu.dot_dimension_numbers<[1], [0], [0], [1], [0, 0, 1, 1], [], []>} : vector<8x32xf32>, vector<32x128xf32>, vector<8x128xf32> -> vector<8x128xf32>
    %18 = arith.addf %16, %17 : vector<8x128xf32>
    %19 = vector.extract_strided_slice %18 {offsets = [0, 0], sizes = [8, 96], strides = [1, 1]} : vector<8x128xf32> to vector<8x96xf32>
    %20 = arith.negf %19 : vector<8x96xf32>
    %21 = math.exp %20 : vector<8x96xf32>
    %cst_15 = arith.constant 1.000000e+00 : f32
    %22 = vector.broadcast %cst_15 : f32 to vector<8x96xf32>
    %23 = arith.addf %22, %21 : vector<8x96xf32>
    %24 = arith.divf %22, %23 : vector<8x96xf32>
    %25 = vector.extract_strided_slice %18 {offsets = [0, 96], sizes = [8, 32], strides = [1, 1]} : vector<8x128xf32> to vector<8x32xf32>
    %26 = math.tanh %25 : vector<8x32xf32>
    %27 = vector.extract_strided_slice %24 {offsets = [0, 32], sizes = [8, 32], strides = [1, 1]} : vector<8x96xf32> to vector<8x32xf32>
    %28 = arith.mulf %27, %15 : vector<8x32xf32>
    %29 = vector.extract_strided_slice %24 {offsets = [0, 0], sizes = [8, 32], strides = [1, 1]} : vector<8x96xf32> to vector<8x32xf32>
    %30 = arith.mulf %29, %26 : vector<8x32xf32>
    %31 = arith.addf %28, %30 : vector<8x32xf32>
    %32 = vector.extract_strided_slice %24 {offsets = [0, 64], sizes = [8, 32], strides = [1, 1]} : vector<8x96xf32> to vector<8x32xf32>
    %33 = math.tanh %31 : vector<8x32xf32>
    %34 = arith.mulf %32, %33 : vector<8x32xf32>
    %c0_16 = arith.constant 0 : index
    %c0_17 = arith.constant 0 : index
    %35 = vector.load %arg12[%c0_16, %c0_17] : memref<64x32xf32, #tpu.memory_space<vmem>>, vector<8x32xf32>
    tpu.vector_store %arg12[%c0_16, %c0_17], %34 {strides = array<i32>} : memref<64x32xf32, #tpu.memory_space<vmem>>, vector<8x32xf32>,
    %c8 = arith.constant 8 : index
    %c0_18 = arith.constant 0 : index
    %36 = vector.load %arg11[%c8, %c0_18] : memref<64x128xf32, #tpu.memory_space<vmem>>, vector<8x128xf32>
    %cst_19 = arith.constant dense<0.000000e+00> : vector<8x128xf32>
    %37 = tpu.matmul %34, %13, %cst_19 {dimension_numbers = #tpu.dot_dimension_numbers<[1], [0], [0], [1], [0, 0, 1, 1], [], []>} : vector<8x32xf32>, vector<32x128xf32>, vector<8x128xf32> -> vector<8x128xf32>
    %38 = arith.addf %36, %37 : vector<8x128xf32>
    %39 = vector.extract_strided_slice %38 {offsets = [0, 0], sizes = [8, 96], strides = [1, 1]} : vector<8x128xf32> to vector<8x96xf32>
    %40 = arith.negf %39 : vector<8x96xf32>
    %41 = math.exp %40 : vector<8x96xf32>
    %cst_20 = arith.constant 1.000000e+00 : f32
    %42 = vector.broadcast %cst_20 : f32 to vector<8x96xf32>
    %43 = arith.addf %42, %41 : vector<8x96xf32>
    %44 = arith.divf %42, %43 : vector<8x96xf32>
    %45 = vector.extract_strided_slice %38 {offsets = [0, 96], sizes = [8, 32], strides = [1, 1]} : vector<8x128xf32> to vector<8x32xf32>
    %46 = math.tanh %45 : vector<8x32xf32>
    %47 = vector.extract_strided_slice %44 {offsets = [0, 32], sizes = [8, 32], strides = [1, 1]} : vector<8x96xf32> to vector<8x32xf32>
    %48 = arith.mulf %47, %31 : vector<8x32xf32>
    %49 = vector.extract_strided_slice %44 {offsets = [0, 0], sizes = [8, 32], strides = [1, 1]} : vector<8x96xf32> to vector<8x32xf32>
    %50 = arith.mulf %49, %46 : vector<8x32xf32>
    %51 = arith.addf %48, %50 : vector<8x32xf32>
    %52 = vector.extract_strided_slice %44 {offsets = [0, 64], sizes = [8, 32], strides = [1, 1]} : vector<8x96xf32> to vector<8x32xf32>
    %53 = math.tanh %51 : vector<8x32xf32>
    %54 = arith.mulf %52, %53 : vector<8x32xf32>
    %c8_21 = arith.constant 8 : index
    %c0_22 = arith.constant 0 : index
    %55 = vector.load %arg12[%c8_21, %c0_22] : memref<64x32xf32, #tpu.memory_space<vmem>>, vector<8x32xf32>
    tpu.vector_store %arg12[%c8_21, %c0_22], %54 {strides = array<i32>} : memref<64x32xf32, #tpu.memory_space<vmem>>, vector<8x32xf32>,
    %c16 = arith.constant 16 : index
    %c0_23 = arith.constant 0 : index
    %56 = vector.load %arg11[%c16, %c0_23] : memref<64x128xf32, #tpu.memory_space<vmem>>, vector<8x128xf32>
    %cst_24 = arith.constant dense<0.000000e+00> : vector<8x128xf32>
    %57 = tpu.matmul %54, %13, %cst_24 {dimension_numbers = #tpu.dot_dimension_numbers<[1], [0], [0], [1], [0, 0, 1, 1], [], []>} : vector<8x32xf32>, vector<32x128xf32>, vector<8x128xf32> -> vector<8x128xf32>
    %58 = arith.addf %56, %57 : vector<8x128xf32>
    %59 = vector.extract_strided_slice %58 {offsets = [0, 0], sizes = [8, 96], strides = [1, 1]} : vector<8x128xf32> to vector<8x96xf32>
    %60 = arith.negf %59 : vector<8x96xf32>
    %61 = math.exp %60 : vector<8x96xf32>
    %cst_25 = arith.constant 1.000000e+00 : f32
    %62 = vector.broadcast %cst_25 : f32 to vector<8x96xf32>
    %63 = arith.addf %62, %61 : vector<8x96xf32>
    %64 = arith.divf %62, %63 : vector<8x96xf32>
    %65 = vector.extract_strided_slice %58 {offsets = [0, 96], sizes = [8, 32], strides = [1, 1]} : vector<8x128xf32> to vector<8x32xf32>
    %66 = math.tanh %65 : vector<8x32xf32>
    %67 = vector.extract_strided_slice %64 {offsets = [0, 32], sizes = [8, 32], strides = [1, 1]} : vector<8x96xf32> to vector<8x32xf32>
    %68 = arith.mulf %67, %51 : vector<8x32xf32>
    %69 = vector.extract_strided_slice %64 {offsets = [0, 0], sizes = [8, 32], strides = [1, 1]} : vector<8x96xf32> to vector<8x32xf32>
    %70 = arith.mulf %69, %66 : vector<8x32xf32>
    %71 = arith.addf %68, %70 : vector<8x32xf32>
    %72 = vector.extract_strided_slice %64 {offsets = [0, 64], sizes = [8, 32], strides = [1, 1]} : vector<8x96xf32> to vector<8x32xf32>
    %73 = math.tanh %71 : vector<8x32xf32>
    %74 = arith.mulf %72, %73 : vector<8x32xf32>
    %c16_26 = arith.constant 16 : index
    %c0_27 = arith.constant 0 : index
    %75 = vector.load %arg12[%c16_26, %c0_27] : memref<64x32xf32, #tpu.memory_space<vmem>>, vector<8x32xf32>
    tpu.vector_store %arg12[%c16_26, %c0_27], %74 {strides = array<i32>} : memref<64x32xf32, #tpu.memory_space<vmem>>, vector<8x32xf32>,
    %c24 = arith.constant 24 : index
    %c0_28 = arith.constant 0 : index
    %76 = vector.load %arg11[%c24, %c0_28] : memref<64x128xf32, #tpu.memory_space<vmem>>, vector<8x128xf32>
    %cst_29 = arith.constant dense<0.000000e+00> : vector<8x128xf32>
    %77 = tpu.matmul %74, %13, %cst_29 {dimension_numbers = #tpu.dot_dimension_numbers<[1], [0], [0], [1], [0, 0, 1, 1], [], []>} : vector<8x32xf32>, vector<32x128xf32>, vector<8x128xf32> -> vector<8x128xf32>
    %78 = arith.addf %76, %77 : vector<8x128xf32>
    %79 = vector.extract_strided_slice %78 {offsets = [0, 0], sizes = [8, 96], strides = [1, 1]} : vector<8x128xf32> to vector<8x96xf32>
    %80 = arith.negf %79 : vector<8x96xf32>
    %81 = math.exp %80 : vector<8x96xf32>
    %cst_30 = arith.constant 1.000000e+00 : f32
    %82 = vector.broadcast %cst_30 : f32 to vector<8x96xf32>
    %83 = arith.addf %82, %81 : vector<8x96xf32>
    %84 = arith.divf %82, %83 : vector<8x96xf32>
    %85 = vector.extract_strided_slice %78 {offsets = [0, 96], sizes = [8, 32], strides = [1, 1]} : vector<8x128xf32> to vector<8x32xf32>
    %86 = math.tanh %85 : vector<8x32xf32>
    %87 = vector.extract_strided_slice %84 {offsets = [0, 32], sizes = [8, 32], strides = [1, 1]} : vector<8x96xf32> to vector<8x32xf32>
    %88 = arith.mulf %87, %71 : vector<8x32xf32>
    %89 = vector.extract_strided_slice %84 {offsets = [0, 0], sizes = [8, 32], strides = [1, 1]} : vector<8x96xf32> to vector<8x32xf32>
    %90 = arith.mulf %89, %86 : vector<8x32xf32>
    %91 = arith.addf %88, %90 : vector<8x32xf32>
    %92 = vector.extract_strided_slice %84 {offsets = [0, 64], sizes = [8, 32], strides = [1, 1]} : vector<8x96xf32> to vector<8x32xf32>
    %93 = math.tanh %91 : vector<8x32xf32>
    %94 = arith.mulf %92, %93 : vector<8x32xf32>
    %c24_31 = arith.constant 24 : index
    %c0_32 = arith.constant 0 : index
    %95 = vector.load %arg12[%c24_31, %c0_32] : memref<64x32xf32, #tpu.memory_space<vmem>>, vector<8x32xf32>
    tpu.vector_store %arg12[%c24_31, %c0_32], %94 {strides = array<i32>} : memref<64x32xf32, #tpu.memory_space<vmem>>, vector<8x32xf32>,
    %c32 = arith.constant 32 : index
    %c0_33 = arith.constant 0 : index
    %96 = vector.load %arg11[%c32, %c0_33] : memref<64x128xf32, #tpu.memory_space<vmem>>, vector<8x128xf32>
    %cst_34 = arith.constant dense<0.000000e+00> : vector<8x128xf32>
    %97 = tpu.matmul %94, %13, %cst_34 {dimension_numbers = #tpu.dot_dimension_numbers<[1], [0], [0], [1], [0, 0, 1, 1], [], []>} : vector<8x32xf32>, vector<32x128xf32>, vector<8x128xf32> -> vector<8x128xf32>
    %98 = arith.addf %96, %97 : vector<8x128xf32>
    %99 = vector.extract_strided_slice %98 {offsets = [0, 0], sizes = [8, 96], strides = [1, 1]} : vector<8x128xf32> to vector<8x96xf32>
    %100 = arith.negf %99 : vector<8x96xf32>
    %101 = math.exp %100 : vector<8x96xf32>
    %cst_35 = arith.constant 1.000000e+00 : f32
    %102 = vector.broadcast %cst_35 : f32 to vector<8x96xf32>
    %103 = arith.addf %102, %101 : vector<8x96xf32>
    %104 = arith.divf %102, %103 : vector<8x96xf32>
    %105 = vector.extract_strided_slice %98 {offsets = [0, 96], sizes = [8, 32], strides = [1, 1]} : vector<8x128xf32> to vector<8x32xf32>
    %106 = math.tanh %105 : vector<8x32xf32>
    %107 = vector.extract_strided_slice %104 {offsets = [0, 32], sizes = [8, 32], strides = [1, 1]} : vector<8x96xf32> to vector<8x32xf32>
    %108 = arith.mulf %107, %91 : vector<8x32xf32>
    %109 = vector.extract_strided_slice %104 {offsets = [0, 0], sizes = [8, 32], strides = [1, 1]} : vector<8x96xf32> to vector<8x32xf32>
    %110 = arith.mulf %109, %106 : vector<8x32xf32>
    %111 = arith.addf %108, %110 : vector<8x32xf32>
    %112 = vector.extract_strided_slice %104 {offsets = [0, 64], sizes = [8, 32], strides = [1, 1]} : vector<8x96xf32> to vector<8x32xf32>
    %113 = math.tanh %111 : vector<8x32xf32>
    %114 = arith.mulf %112, %113 : vector<8x32xf32>
    %c32_36 = arith.constant 32 : index
    %c0_37 = arith.constant 0 : index
    %115 = vector.load %arg12[%c32_36, %c0_37] : memref<64x32xf32, #tpu.memory_space<vmem>>, vector<8x32xf32>
    tpu.vector_store %arg12[%c32_36, %c0_37], %114 {strides = array<i32>} : memref<64x32xf32, #tpu.memory_space<vmem>>, vector<8x32xf32>,
    %c40 = arith.constant 40 : index
    %c0_38 = arith.constant 0 : index
    %116 = vector.load %arg11[%c40, %c0_38] : memref<64x128xf32, #tpu.memory_space<vmem>>, vector<8x128xf32>
    %cst_39 = arith.constant dense<0.000000e+00> : vector<8x128xf32>
    %117 = tpu.matmul %114, %13, %cst_39 {dimension_numbers = #tpu.dot_dimension_numbers<[1], [0], [0], [1], [0, 0, 1, 1], [], []>} : vector<8x32xf32>, vector<32x128xf32>, vector<8x128xf32> -> vector<8x128xf32>
    %118 = arith.addf %116, %117 : vector<8x128xf32>
    %119 = vector.extract_strided_slice %118 {offsets = [0, 0], sizes = [8, 96], strides = [1, 1]} : vector<8x128xf32> to vector<8x96xf32>
    %120 = arith.negf %119 : vector<8x96xf32>
    %121 = math.exp %120 : vector<8x96xf32>
    %cst_40 = arith.constant 1.000000e+00 : f32
    %122 = vector.broadcast %cst_40 : f32 to vector<8x96xf32>
    %123 = arith.addf %122, %121 : vector<8x96xf32>
    %124 = arith.divf %122, %123 : vector<8x96xf32>
    %125 = vector.extract_strided_slice %118 {offsets = [0, 96], sizes = [8, 32], strides = [1, 1]} : vector<8x128xf32> to vector<8x32xf32>
    %126 = math.tanh %125 : vector<8x32xf32>
    %127 = vector.extract_strided_slice %124 {offsets = [0, 32], sizes = [8, 32], strides = [1, 1]} : vector<8x96xf32> to vector<8x32xf32>
    %128 = arith.mulf %127, %111 : vector<8x32xf32>
    %129 = vector.extract_strided_slice %124 {offsets = [0, 0], sizes = [8, 32], strides = [1, 1]} : vector<8x96xf32> to vector<8x32xf32>
    %130 = arith.mulf %129, %126 : vector<8x32xf32>
    %131 = arith.addf %128, %130 : vector<8x32xf32>
    %132 = vector.extract_strided_slice %124 {offsets = [0, 64], sizes = [8, 32], strides = [1, 1]} : vector<8x96xf32> to vector<8x32xf32>
    %133 = math.tanh %131 : vector<8x32xf32>
    %134 = arith.mulf %132, %133 : vector<8x32xf32>
    %c40_41 = arith.constant 40 : index
    %c0_42 = arith.constant 0 : index
    %135 = vector.load %arg12[%c40_41, %c0_42] : memref<64x32xf32, #tpu.memory_space<vmem>>, vector<8x32xf32>
    tpu.vector_store %arg12[%c40_41, %c0_42], %134 {strides = array<i32>} : memref<64x32xf32, #tpu.memory_space<vmem>>, vector<8x32xf32>,
    %c48 = arith.constant 48 : index
    %c0_43 = arith.constant 0 : index
    %136 = vector.load %arg11[%c48, %c0_43] : memref<64x128xf32, #tpu.memory_space<vmem>>, vector<8x128xf32>
    %cst_44 = arith.constant dense<0.000000e+00> : vector<8x128xf32>
    %137 = tpu.matmul %134, %13, %cst_44 {dimension_numbers = #tpu.dot_dimension_numbers<[1], [0], [0], [1], [0, 0, 1, 1], [], []>} : vector<8x32xf32>, vector<32x128xf32>, vector<8x128xf32> -> vector<8x128xf32>
    %138 = arith.addf %136, %137 : vector<8x128xf32>
    %139 = vector.extract_strided_slice %138 {offsets = [0, 0], sizes = [8, 96], strides = [1, 1]} : vector<8x128xf32> to vector<8x96xf32>
    %140 = arith.negf %139 : vector<8x96xf32>
    %141 = math.exp %140 : vector<8x96xf32>
    %cst_45 = arith.constant 1.000000e+00 : f32
    %142 = vector.broadcast %cst_45 : f32 to vector<8x96xf32>
    %143 = arith.addf %142, %141 : vector<8x96xf32>
    %144 = arith.divf %142, %143 : vector<8x96xf32>
    %145 = vector.extract_strided_slice %138 {offsets = [0, 96], sizes = [8, 32], strides = [1, 1]} : vector<8x128xf32> to vector<8x32xf32>
    %146 = math.tanh %145 : vector<8x32xf32>
    %147 = vector.extract_strided_slice %144 {offsets = [0, 32], sizes = [8, 32], strides = [1, 1]} : vector<8x96xf32> to vector<8x32xf32>
    %148 = arith.mulf %147, %131 : vector<8x32xf32>
    %149 = vector.extract_strided_slice %144 {offsets = [0, 0], sizes = [8, 32], strides = [1, 1]} : vector<8x96xf32> to vector<8x32xf32>
    %150 = arith.mulf %149, %146 : vector<8x32xf32>
    %151 = arith.addf %148, %150 : vector<8x32xf32>
    %152 = vector.extract_strided_slice %144 {offsets = [0, 64], sizes = [8, 32], strides = [1, 1]} : vector<8x96xf32> to vector<8x32xf32>
    %153 = math.tanh %151 : vector<8x32xf32>
    %154 = arith.mulf %152, %153 : vector<8x32xf32>
    %c48_46 = arith.constant 48 : index
    %c0_47 = arith.constant 0 : index
    %155 = vector.load %arg12[%c48_46, %c0_47] : memref<64x32xf32, #tpu.memory_space<vmem>>, vector<8x32xf32>
    tpu.vector_store %arg12[%c48_46, %c0_47], %154 {strides = array<i32>} : memref<64x32xf32, #tpu.memory_space<vmem>>, vector<8x32xf32>,
    %c56 = arith.constant 56 : index
    %c0_48 = arith.constant 0 : index
    %156 = vector.load %arg11[%c56, %c0_48] : memref<64x128xf32, #tpu.memory_space<vmem>>, vector<8x128xf32>
    %cst_49 = arith.constant dense<0.000000e+00> : vector<8x128xf32>
    %157 = tpu.matmul %154, %13, %cst_49 {dimension_numbers = #tpu.dot_dimension_numbers<[1], [0], [0], [1], [0, 0, 1, 1], [], []>} : vector<8x32xf32>, vector<32x128xf32>, vector<8x128xf32> -> vector<8x128xf32>
    %158 = arith.addf %156, %157 : vector<8x128xf32>
    %159 = vector.extract_strided_slice %158 {offsets = [0, 0], sizes = [8, 96], strides = [1, 1]} : vector<8x128xf32> to vector<8x96xf32>
    %160 = arith.negf %159 : vector<8x96xf32>
    %161 = math.exp %160 : vector<8x96xf32>
    %cst_50 = arith.constant 1.000000e+00 : f32
    %162 = vector.broadcast %cst_50 : f32 to vector<8x96xf32>
    %163 = arith.addf %162, %161 : vector<8x96xf32>
    %164 = arith.divf %162, %163 : vector<8x96xf32>
    %165 = vector.extract_strided_slice %158 {offsets = [0, 96], sizes = [8, 32], strides = [1, 1]} : vector<8x128xf32> to vector<8x32xf32>
    %166 = math.tanh %165 : vector<8x32xf32>
    %167 = vector.extract_strided_slice %164 {offsets = [0, 32], sizes = [8, 32], strides = [1, 1]} : vector<8x96xf32> to vector<8x32xf32>
    %168 = arith.mulf %167, %151 : vector<8x32xf32>
    %169 = vector.extract_strided_slice %164 {offsets = [0, 0], sizes = [8, 32], strides = [1, 1]} : vector<8x96xf32> to vector<8x32xf32>
    %170 = arith.mulf %169, %166 : vector<8x32xf32>
    %171 = arith.addf %168, %170 : vector<8x32xf32>
    %172 = vector.extract_strided_slice %164 {offsets = [0, 64], sizes = [8, 32], strides = [1, 1]} : vector<8x96xf32> to vector<8x32xf32>
    %173 = math.tanh %171 : vector<8x32xf32>
    %174 = arith.mulf %172, %173 : vector<8x32xf32>
    %c56_51 = arith.constant 56 : index
    %c0_52 = arith.constant 0 : index
    %175 = vector.load %arg12[%c56_51, %c0_52] : memref<64x32xf32, #tpu.memory_space<vmem>>, vector<8x32xf32>
    tpu.vector_store %arg12[%c56_51, %c0_52], %174 {strides = array<i32>} : memref<64x32xf32, #tpu.memory_space<vmem>>, vector<8x32xf32>,
    %c0_53 = arith.constant 0 : index
    %c0_54 = arith.constant 0 : index
    %176 = vector.load %arg12[%c0_53, %c0_54] : memref<64x32xf32, #tpu.memory_space<vmem>>, vector<64x32xf32>
    %c0_55 = arith.constant 0 : index
    %c0_56 = arith.constant 0 : index
    %177 = vector.load %arg5[%c0_55, %c0_56] : memref<32x128xf32, #tpu.memory_space<vmem>>, vector<32x128xf32>
    %cst_57 = arith.constant dense<0.000000e+00> : vector<64x128xf32>
    %178 = tpu.matmul %176, %177, %cst_57 {dimension_numbers = #tpu.dot_dimension_numbers<[1], [0], [0], [1], [0, 0, 1, 1], [], []>} : vector<64x32xf32>, vector<32x128xf32>, vector<64x128xf32> -> vector<64x128xf32>
    %c0_58 = arith.constant 0 : index
    %c0_59 = arith.constant 0 : index
    %179 = vector.load %arg7[%c0_58, %c0_59] : memref<1x128xf32, #tpu.memory_space<vmem>>, vector<1x128xf32>
    %180 = vector.broadcast %179 : vector<1x128xf32> to vector<64x128xf32>
    %181 = arith.addf %178, %180 : vector<64x128xf32>
    %c0_60 = arith.constant 0 : index
    %c0_61 = arith.constant 0 : index
    %182 = vector.load %arg11[%c0_60, %c0_61] : memref<64x128xf32, #tpu.memory_space<vmem>>, vector<64x128xf32>
    tpu.vector_store %arg11[%c0_60, %c0_61], %181 {strides = array<i32>} : memref<64x128xf32, #tpu.memory_space<vmem>>, vector<64x128xf32>,
    %c0_62 = arith.constant 0 : index
    %c0_63 = arith.constant 0 : index
    %183 = vector.load %arg6[%c0_62, %c0_63] : memref<32x128xf32, #tpu.memory_space<vmem>>, vector<32x128xf32>
    %cst_64 = arith.constant 0.000000e+00 : f32
    %184 = vector.broadcast %cst_64 : f32 to vector<8x32xf32>
    %cst_65 = arith.constant 0.000000e+00 : f32
    %185 = vector.broadcast %cst_65 : f32 to vector<8x32xf32>
    %c0_66 = arith.constant 0 : index
    %c0_67 = arith.constant 0 : index
    %186 = vector.load %arg11[%c0_66, %c0_67] : memref<64x128xf32, #tpu.memory_space<vmem>>, vector<8x128xf32>
    %cst_68 = arith.constant dense<0.000000e+00> : vector<8x128xf32>
    %187 = tpu.matmul %184, %183, %cst_68 {dimension_numbers = #tpu.dot_dimension_numbers<[1], [0], [0], [1], [0, 0, 1, 1], [], []>} : vector<8x32xf32>, vector<32x128xf32>, vector<8x128xf32> -> vector<8x128xf32>
    %188 = arith.addf %186, %187 : vector<8x128xf32>
    %189 = vector.extract_strided_slice %188 {offsets = [0, 0], sizes = [8, 96], strides = [1, 1]} : vector<8x128xf32> to vector<8x96xf32>
    %190 = arith.negf %189 : vector<8x96xf32>
    %191 = math.exp %190 : vector<8x96xf32>
    %cst_69 = arith.constant 1.000000e+00 : f32
    %192 = vector.broadcast %cst_69 : f32 to vector<8x96xf32>
    %193 = arith.addf %192, %191 : vector<8x96xf32>
    %194 = arith.divf %192, %193 : vector<8x96xf32>
    %195 = vector.extract_strided_slice %188 {offsets = [0, 96], sizes = [8, 32], strides = [1, 1]} : vector<8x128xf32> to vector<8x32xf32>
    %196 = math.tanh %195 : vector<8x32xf32>
    %197 = vector.extract_strided_slice %194 {offsets = [0, 32], sizes = [8, 32], strides = [1, 1]} : vector<8x96xf32> to vector<8x32xf32>
    %198 = arith.mulf %197, %185 : vector<8x32xf32>
    %199 = vector.extract_strided_slice %194 {offsets = [0, 0], sizes = [8, 32], strides = [1, 1]} : vector<8x96xf32> to vector<8x32xf32>
    %200 = arith.mulf %199, %196 : vector<8x32xf32>
    %201 = arith.addf %198, %200 : vector<8x32xf32>
    %202 = vector.extract_strided_slice %194 {offsets = [0, 64], sizes = [8, 32], strides = [1, 1]} : vector<8x96xf32> to vector<8x32xf32>
    %203 = math.tanh %201 : vector<8x32xf32>
    %204 = arith.mulf %202, %203 : vector<8x32xf32>
    %c8_70 = arith.constant 8 : index
    %c0_71 = arith.constant 0 : index
    %205 = vector.load %arg11[%c8_70, %c0_71] : memref<64x128xf32, #tpu.memory_space<vmem>>, vector<8x128xf32>
    %cst_72 = arith.constant dense<0.000000e+00> : vector<8x128xf32>
    %206 = tpu.matmul %204, %183, %cst_72 {dimension_numbers = #tpu.dot_dimension_numbers<[1], [0], [0], [1], [0, 0, 1, 1], [], []>} : vector<8x32xf32>, vector<32x128xf32>, vector<8x128xf32> -> vector<8x128xf32>
    %207 = arith.addf %205, %206 : vector<8x128xf32>
    %208 = vector.extract_strided_slice %207 {offsets = [0, 0], sizes = [8, 96], strides = [1, 1]} : vector<8x128xf32> to vector<8x96xf32>
    %209 = arith.negf %208 : vector<8x96xf32>
    %210 = math.exp %209 : vector<8x96xf32>
    %cst_73 = arith.constant 1.000000e+00 : f32
    %211 = vector.broadcast %cst_73 : f32 to vector<8x96xf32>
    %212 = arith.addf %211, %210 : vector<8x96xf32>
    %213 = arith.divf %211, %212 : vector<8x96xf32>
    %214 = vector.extract_strided_slice %207 {offsets = [0, 96], sizes = [8, 32], strides = [1, 1]} : vector<8x128xf32> to vector<8x32xf32>
    %215 = math.tanh %214 : vector<8x32xf32>
    %216 = vector.extract_strided_slice %213 {offsets = [0, 32], sizes = [8, 32], strides = [1, 1]} : vector<8x96xf32> to vector<8x32xf32>
    %217 = arith.mulf %216, %201 : vector<8x32xf32>
    %218 = vector.extract_strided_slice %213 {offsets = [0, 0], sizes = [8, 32], strides = [1, 1]} : vector<8x96xf32> to vector<8x32xf32>
    %219 = arith.mulf %218, %215 : vector<8x32xf32>
    %220 = arith.addf %217, %219 : vector<8x32xf32>
    %221 = vector.extract_strided_slice %213 {offsets = [0, 64], sizes = [8, 32], strides = [1, 1]} : vector<8x96xf32> to vector<8x32xf32>
    %222 = math.tanh %220 : vector<8x32xf32>
    %223 = arith.mulf %221, %222 : vector<8x32xf32>
    %c16_74 = arith.constant 16 : index
    %c0_75 = arith.constant 0 : index
    %224 = vector.load %arg11[%c16_74, %c0_75] : memref<64x128xf32, #tpu.memory_space<vmem>>, vector<8x128xf32>
    %cst_76 = arith.constant dense<0.000000e+00> : vector<8x128xf32>
    %225 = tpu.matmul %223, %183, %cst_76 {dimension_numbers = #tpu.dot_dimension_numbers<[1], [0], [0], [1], [0, 0, 1, 1], [], []>} : vector<8x32xf32>, vector<32x128xf32>, vector<8x128xf32> -> vector<8x128xf32>
    %226 = arith.addf %224, %225 : vector<8x128xf32>
    %227 = vector.extract_strided_slice %226 {offsets = [0, 0], sizes = [8, 96], strides = [1, 1]} : vector<8x128xf32> to vector<8x96xf32>
    %228 = arith.negf %227 : vector<8x96xf32>
    %229 = math.exp %228 : vector<8x96xf32>
    %cst_77 = arith.constant 1.000000e+00 : f32
    %230 = vector.broadcast %cst_77 : f32 to vector<8x96xf32>
    %231 = arith.addf %230, %229 : vector<8x96xf32>
    %232 = arith.divf %230, %231 : vector<8x96xf32>
    %233 = vector.extract_strided_slice %226 {offsets = [0, 96], sizes = [8, 32], strides = [1, 1]} : vector<8x128xf32> to vector<8x32xf32>
    %234 = math.tanh %233 : vector<8x32xf32>
    %235 = vector.extract_strided_slice %232 {offsets = [0, 32], sizes = [8, 32], strides = [1, 1]} : vector<8x96xf32> to vector<8x32xf32>
    %236 = arith.mulf %235, %220 : vector<8x32xf32>
    %237 = vector.extract_strided_slice %232 {offsets = [0, 0], sizes = [8, 32], strides = [1, 1]} : vector<8x96xf32> to vector<8x32xf32>
    %238 = arith.mulf %237, %234 : vector<8x32xf32>
    %239 = arith.addf %236, %238 : vector<8x32xf32>
    %240 = vector.extract_strided_slice %232 {offsets = [0, 64], sizes = [8, 32], strides = [1, 1]} : vector<8x96xf32> to vector<8x32xf32>
    %241 = math.tanh %239 : vector<8x32xf32>
    %242 = arith.mulf %240, %241 : vector<8x32xf32>
    %c24_78 = arith.constant 24 : index
    %c0_79 = arith.constant 0 : index
    %243 = vector.load %arg11[%c24_78, %c0_79] : memref<64x128xf32, #tpu.memory_space<vmem>>, vector<8x128xf32>
    %cst_80 = arith.constant dense<0.000000e+00> : vector<8x128xf32>
    %244 = tpu.matmul %242, %183, %cst_80 {dimension_numbers = #tpu.dot_dimension_numbers<[1], [0], [0], [1], [0, 0, 1, 1], [], []>} : vector<8x32xf32>, vector<32x128xf32>, vector<8x128xf32> -> vector<8x128xf32>
    %245 = arith.addf %243, %244 : vector<8x128xf32>
    %246 = vector.extract_strided_slice %245 {offsets = [0, 0], sizes = [8, 96], strides = [1, 1]} : vector<8x128xf32> to vector<8x96xf32>
    %247 = arith.negf %246 : vector<8x96xf32>
    %248 = math.exp %247 : vector<8x96xf32>
    %cst_81 = arith.constant 1.000000e+00 : f32
    %249 = vector.broadcast %cst_81 : f32 to vector<8x96xf32>
    %250 = arith.addf %249, %248 : vector<8x96xf32>
    %251 = arith.divf %249, %250 : vector<8x96xf32>
    %252 = vector.extract_strided_slice %245 {offsets = [0, 96], sizes = [8, 32], strides = [1, 1]} : vector<8x128xf32> to vector<8x32xf32>
    %253 = math.tanh %252 : vector<8x32xf32>
    %254 = vector.extract_strided_slice %251 {offsets = [0, 32], sizes = [8, 32], strides = [1, 1]} : vector<8x96xf32> to vector<8x32xf32>
    %255 = arith.mulf %254, %239 : vector<8x32xf32>
    %256 = vector.extract_strided_slice %251 {offsets = [0, 0], sizes = [8, 32], strides = [1, 1]} : vector<8x96xf32> to vector<8x32xf32>
    %257 = arith.mulf %256, %253 : vector<8x32xf32>
    %258 = arith.addf %255, %257 : vector<8x32xf32>
    %259 = vector.extract_strided_slice %251 {offsets = [0, 64], sizes = [8, 32], strides = [1, 1]} : vector<8x96xf32> to vector<8x32xf32>
    %260 = math.tanh %258 : vector<8x32xf32>
    %261 = arith.mulf %259, %260 : vector<8x32xf32>
    %c32_82 = arith.constant 32 : index
    %c0_83 = arith.constant 0 : index
    %262 = vector.load %arg11[%c32_82, %c0_83] : memref<64x128xf32, #tpu.memory_space<vmem>>, vector<8x128xf32>
    %cst_84 = arith.constant dense<0.000000e+00> : vector<8x128xf32>
    %263 = tpu.matmul %261, %183, %cst_84 {dimension_numbers = #tpu.dot_dimension_numbers<[1], [0], [0], [1], [0, 0, 1, 1], [], []>} : vector<8x32xf32>, vector<32x128xf32>, vector<8x128xf32> -> vector<8x128xf32>
    %264 = arith.addf %262, %263 : vector<8x128xf32>
    %265 = vector.extract_strided_slice %264 {offsets = [0, 0], sizes = [8, 96], strides = [1, 1]} : vector<8x128xf32> to vector<8x96xf32>
    %266 = arith.negf %265 : vector<8x96xf32>
    %267 = math.exp %266 : vector<8x96xf32>
    %cst_85 = arith.constant 1.000000e+00 : f32
    %268 = vector.broadcast %cst_85 : f32 to vector<8x96xf32>
    %269 = arith.addf %268, %267 : vector<8x96xf32>
    %270 = arith.divf %268, %269 : vector<8x96xf32>
    %271 = vector.extract_strided_slice %264 {offsets = [0, 96], sizes = [8, 32], strides = [1, 1]} : vector<8x128xf32> to vector<8x32xf32>
    %272 = math.tanh %271 : vector<8x32xf32>
    %273 = vector.extract_strided_slice %270 {offsets = [0, 32], sizes = [8, 32], strides = [1, 1]} : vector<8x96xf32> to vector<8x32xf32>
    %274 = arith.mulf %273, %258 : vector<8x32xf32>
    %275 = vector.extract_strided_slice %270 {offsets = [0, 0], sizes = [8, 32], strides = [1, 1]} : vector<8x96xf32> to vector<8x32xf32>
    %276 = arith.mulf %275, %272 : vector<8x32xf32>
    %277 = arith.addf %274, %276 : vector<8x32xf32>
    %278 = vector.extract_strided_slice %270 {offsets = [0, 64], sizes = [8, 32], strides = [1, 1]} : vector<8x96xf32> to vector<8x32xf32>
    %279 = math.tanh %277 : vector<8x32xf32>
    %280 = arith.mulf %278, %279 : vector<8x32xf32>
    %c40_86 = arith.constant 40 : index
    %c0_87 = arith.constant 0 : index
    %281 = vector.load %arg11[%c40_86, %c0_87] : memref<64x128xf32, #tpu.memory_space<vmem>>, vector<8x128xf32>
    %cst_88 = arith.constant dense<0.000000e+00> : vector<8x128xf32>
    %282 = tpu.matmul %280, %183, %cst_88 {dimension_numbers = #tpu.dot_dimension_numbers<[1], [0], [0], [1], [0, 0, 1, 1], [], []>} : vector<8x32xf32>, vector<32x128xf32>, vector<8x128xf32> -> vector<8x128xf32>
    %283 = arith.addf %281, %282 : vector<8x128xf32>
    %284 = vector.extract_strided_slice %283 {offsets = [0, 0], sizes = [8, 96], strides = [1, 1]} : vector<8x128xf32> to vector<8x96xf32>
    %285 = arith.negf %284 : vector<8x96xf32>
    %286 = math.exp %285 : vector<8x96xf32>
    %cst_89 = arith.constant 1.000000e+00 : f32
    %287 = vector.broadcast %cst_89 : f32 to vector<8x96xf32>
    %288 = arith.addf %287, %286 : vector<8x96xf32>
    %289 = arith.divf %287, %288 : vector<8x96xf32>
    %290 = vector.extract_strided_slice %283 {offsets = [0, 96], sizes = [8, 32], strides = [1, 1]} : vector<8x128xf32> to vector<8x32xf32>
    %291 = math.tanh %290 : vector<8x32xf32>
    %292 = vector.extract_strided_slice %289 {offsets = [0, 32], sizes = [8, 32], strides = [1, 1]} : vector<8x96xf32> to vector<8x32xf32>
    %293 = arith.mulf %292, %277 : vector<8x32xf32>
    %294 = vector.extract_strided_slice %289 {offsets = [0, 0], sizes = [8, 32], strides = [1, 1]} : vector<8x96xf32> to vector<8x32xf32>
    %295 = arith.mulf %294, %291 : vector<8x32xf32>
    %296 = arith.addf %293, %295 : vector<8x32xf32>
    %297 = vector.extract_strided_slice %289 {offsets = [0, 64], sizes = [8, 32], strides = [1, 1]} : vector<8x96xf32> to vector<8x32xf32>
    %298 = math.tanh %296 : vector<8x32xf32>
    %299 = arith.mulf %297, %298 : vector<8x32xf32>
    %c48_90 = arith.constant 48 : index
    %c0_91 = arith.constant 0 : index
    %300 = vector.load %arg11[%c48_90, %c0_91] : memref<64x128xf32, #tpu.memory_space<vmem>>, vector<8x128xf32>
    %cst_92 = arith.constant dense<0.000000e+00> : vector<8x128xf32>
    %301 = tpu.matmul %299, %183, %cst_92 {dimension_numbers = #tpu.dot_dimension_numbers<[1], [0], [0], [1], [0, 0, 1, 1], [], []>} : vector<8x32xf32>, vector<32x128xf32>, vector<8x128xf32> -> vector<8x128xf32>
    %302 = arith.addf %300, %301 : vector<8x128xf32>
    %303 = vector.extract_strided_slice %302 {offsets = [0, 0], sizes = [8, 96], strides = [1, 1]} : vector<8x128xf32> to vector<8x96xf32>
    %304 = arith.negf %303 : vector<8x96xf32>
    %305 = math.exp %304 : vector<8x96xf32>
    %cst_93 = arith.constant 1.000000e+00 : f32
    %306 = vector.broadcast %cst_93 : f32 to vector<8x96xf32>
    %307 = arith.addf %306, %305 : vector<8x96xf32>
    %308 = arith.divf %306, %307 : vector<8x96xf32>
    %309 = vector.extract_strided_slice %302 {offsets = [0, 96], sizes = [8, 32], strides = [1, 1]} : vector<8x128xf32> to vector<8x32xf32>
    %310 = math.tanh %309 : vector<8x32xf32>
    %311 = vector.extract_strided_slice %308 {offsets = [0, 32], sizes = [8, 32], strides = [1, 1]} : vector<8x96xf32> to vector<8x32xf32>
    %312 = arith.mulf %311, %296 : vector<8x32xf32>
    %313 = vector.extract_strided_slice %308 {offsets = [0, 0], sizes = [8, 32], strides = [1, 1]} : vector<8x96xf32> to vector<8x32xf32>
    %314 = arith.mulf %313, %310 : vector<8x32xf32>
    %315 = arith.addf %312, %314 : vector<8x32xf32>
    %316 = vector.extract_strided_slice %308 {offsets = [0, 64], sizes = [8, 32], strides = [1, 1]} : vector<8x96xf32> to vector<8x32xf32>
    %317 = math.tanh %315 : vector<8x32xf32>
    %318 = arith.mulf %316, %317 : vector<8x32xf32>
    %c56_94 = arith.constant 56 : index
    %c0_95 = arith.constant 0 : index
    %319 = vector.load %arg11[%c56_94, %c0_95] : memref<64x128xf32, #tpu.memory_space<vmem>>, vector<8x128xf32>
    %cst_96 = arith.constant dense<0.000000e+00> : vector<8x128xf32>
    %320 = tpu.matmul %318, %183, %cst_96 {dimension_numbers = #tpu.dot_dimension_numbers<[1], [0], [0], [1], [0, 0, 1, 1], [], []>} : vector<8x32xf32>, vector<32x128xf32>, vector<8x128xf32> -> vector<8x128xf32>
    %321 = arith.addf %319, %320 : vector<8x128xf32>
    %322 = vector.extract_strided_slice %321 {offsets = [0, 0], sizes = [8, 96], strides = [1, 1]} : vector<8x128xf32> to vector<8x96xf32>
    %323 = arith.negf %322 : vector<8x96xf32>
    %324 = math.exp %323 : vector<8x96xf32>
    %cst_97 = arith.constant 1.000000e+00 : f32
    %325 = vector.broadcast %cst_97 : f32 to vector<8x96xf32>
    %326 = arith.addf %325, %324 : vector<8x96xf32>
    %327 = arith.divf %325, %326 : vector<8x96xf32>
    %328 = vector.extract_strided_slice %321 {offsets = [0, 96], sizes = [8, 32], strides = [1, 1]} : vector<8x128xf32> to vector<8x32xf32>
    %329 = math.tanh %328 : vector<8x32xf32>
    %330 = vector.extract_strided_slice %327 {offsets = [0, 32], sizes = [8, 32], strides = [1, 1]} : vector<8x96xf32> to vector<8x32xf32>
    %331 = arith.mulf %330, %315 : vector<8x32xf32>
    %332 = vector.extract_strided_slice %327 {offsets = [0, 0], sizes = [8, 32], strides = [1, 1]} : vector<8x96xf32> to vector<8x32xf32>
    %333 = arith.mulf %332, %329 : vector<8x32xf32>
    %334 = arith.addf %331, %333 : vector<8x32xf32>
    %335 = vector.extract_strided_slice %327 {offsets = [0, 64], sizes = [8, 32], strides = [1, 1]} : vector<8x96xf32> to vector<8x32xf32>
    %336 = math.tanh %334 : vector<8x32xf32>
    %337 = arith.mulf %335, %336 : vector<8x32xf32>
    %c0_98 = arith.constant 0 : index
    %c0_99 = arith.constant 0 : index
    %338 = vector.load %arg9[%c0_98, %c0_99] : memref<1x128xf32, #tpu.memory_space<vmem>>, vector<1x128xf32>
    %339 = math.tanh %174 : vector<8x32xf32>
    %c0_100 = arith.constant 0 : index
    %c0_101 = arith.constant 0 : index
    %340 = vector.load %arg8[%c0_100, %c0_101] : memref<128x128xf32, #tpu.memory_space<vmem>>, vector<32x128xf32>
    %cst_102 = arith.constant dense<0.000000e+00> : vector<8x128xf32>
    %341 = tpu.matmul %339, %340, %cst_102 {dimension_numbers = #tpu.dot_dimension_numbers<[1], [0], [0], [1], [0, 0, 1, 1], [], []>} : vector<8x32xf32>, vector<32x128xf32>, vector<8x128xf32> -> vector<8x128xf32>
    %342 = vector.broadcast %338 : vector<1x128xf32> to vector<8x128xf32>
    %343 = arith.addf %342, %341 : vector<8x128xf32>
    %344 = math.tanh %171 : vector<8x32xf32>
    %c32_103 = arith.constant 32 : index
    %c0_104 = arith.constant 0 : index
    %345 = vector.load %arg8[%c32_103, %c0_104] : memref<128x128xf32, #tpu.memory_space<vmem>>, vector<32x128xf32>
    %cst_105 = arith.constant dense<0.000000e+00> : vector<8x128xf32>
    %346 = tpu.matmul %344, %345, %cst_105 {dimension_numbers = #tpu.dot_dimension_numbers<[1], [0], [0], [1], [0, 0, 1, 1], [], []>} : vector<8x32xf32>, vector<32x128xf32>, vector<8x128xf32> -> vector<8x128xf32>
    %347 = arith.addf %343, %346 : vector<8x128xf32>
    %348 = math.tanh %337 : vector<8x32xf32>
    %c64 = arith.constant 64 : index
    %c0_106 = arith.constant 0 : index
    %349 = vector.load %arg8[%c64, %c0_106] : memref<128x128xf32, #tpu.memory_space<vmem>>, vector<32x128xf32>
    %cst_107 = arith.constant dense<0.000000e+00> : vector<8x128xf32>
    %350 = tpu.matmul %348, %349, %cst_107 {dimension_numbers = #tpu.dot_dimension_numbers<[1], [0], [0], [1], [0, 0, 1, 1], [], []>} : vector<8x32xf32>, vector<32x128xf32>, vector<8x128xf32> -> vector<8x128xf32>
    %351 = arith.addf %347, %350 : vector<8x128xf32>
    %352 = math.tanh %334 : vector<8x32xf32>
    %c96 = arith.constant 96 : index
    %c0_108 = arith.constant 0 : index
    %353 = vector.load %arg8[%c96, %c0_108] : memref<128x128xf32, #tpu.memory_space<vmem>>, vector<32x128xf32>
    %cst_109 = arith.constant dense<0.000000e+00> : vector<8x128xf32>
    %354 = tpu.matmul %352, %353, %cst_109 {dimension_numbers = #tpu.dot_dimension_numbers<[1], [0], [0], [1], [0, 0, 1, 1], [], []>} : vector<8x32xf32>, vector<32x128xf32>, vector<8x128xf32> -> vector<8x128xf32>
    %355 = arith.addf %351, %354 : vector<8x128xf32>
    %c0_110 = arith.constant 0 : index
    %c0_111 = arith.constant 0 : index
    %356 = vector.load %arg10[%c0_110, %c0_111] : memref<8x128xf32, #tpu.memory_space<vmem>>, vector<8x128xf32>
    tpu.vector_store %arg10[%c0_110, %c0_111], %355 {strides = array<i32>} : memref<8x128xf32, #tpu.memory_space<vmem>>, vector<8x128xf32>,
    return
  }
  func.func @transform_0(%arg0: i32) -> (i32, i32, i32) {
    %c0_i32 = arith.constant 0 : i32
    %c0_i32_0 = arith.constant 0 : i32
    %c0_i32_1 = arith.constant 0 : i32
    return %arg0, %c0_i32, %c0_i32_0 : i32, i32, i32
  }
  func.func @transform_1(%arg0: i32) -> (i32, i32) {
    %c0_i32 = arith.constant 0 : i32
    %c0_i32_0 = arith.constant 0 : i32
    %c0_i32_1 = arith.constant 0 : i32
    return %c0_i32, %c0_i32_0 : i32, i32
  }
  func.func @transform_2(%arg0: i32) -> (i32, i32) {
    %c0_i32 = arith.constant 0 : i32
    %c0_i32_0 = arith.constant 0 : i32
    %c0_i32_1 = arith.constant 0 : i32
    return %c0_i32, %c0_i32_0 : i32, i32
  }
  func.func @transform_3(%arg0: i32) -> (i32, i32) {
    %c0_i32 = arith.constant 0 : i32
    %c0_i32_0 = arith.constant 0 : i32
    %c0_i32_1 = arith.constant 0 : i32
    return %c0_i32, %c0_i32_0 : i32, i32
  }
  func.func @transform_4(%arg0: i32) -> (i32, i32) {
    %c0_i32 = arith.constant 0 : i32
    %c0_i32_0 = arith.constant 0 : i32
    %c0_i32_1 = arith.constant 0 : i32
    return %c0_i32, %c0_i32_0 : i32, i32
  }
  func.func @transform_5(%arg0: i32) -> (i32, i32) {
    %c0_i32 = arith.constant 0 : i32
    %c0_i32_0 = arith.constant 0 : i32
    %c0_i32_1 = arith.constant 0 : i32
    return %c0_i32, %c0_i32_0 : i32, i32
  }
  func.func @transform_6(%arg0: i32) -> (i32, i32) {
    %c0_i32 = arith.constant 0 : i32
    %c0_i32_0 = arith.constant 0 : i32
    %c0_i32_1 = arith.constant 0 : i32
    return %c0_i32, %c0_i32_0 : i32, i32
  }
  func.func @transform_7(%arg0: i32) -> (i32, i32) {
    %c0_i32 = arith.constant 0 : i32
    %c0_i32_0 = arith.constant 0 : i32
    %c0_i32_1 = arith.constant 0 : i32
    return %c0_i32, %c0_i32_0 : i32, i32
  }
  func.func @transform_8(%arg0: i32) -> (i32, i32) {
    %c0_i32 = arith.constant 0 : i32
    %c0_i32_0 = arith.constant 0 : i32
    %c0_i32_1 = arith.constant 0 : i32
    return %c0_i32, %c0_i32_0 : i32, i32
  }
  func.func @transform_9(%arg0: i32) -> (i32, i32) {
    %c0_i32 = arith.constant 0 : i32
    %c0_i32_0 = arith.constant 0 : i32
    return %arg0, %c0_i32 : i32, i32
  }
}

</mosaic_0001>

<llo_original>
// kernel: tpu_custom_call.1
$region0: #{tpu_custom_call.1}
  #allocation0 [shape = 'u32[]', space=smem, size = 0x4, offset = 0x4, fixed_abs, tag = 'smem constant byte address 0x4 - core index']
  #allocation1 [shape = 'u32[144,128]{1,0:T(1,128)}', space=vmem, size = 0x12000, scoped, tag = 'internal scratch']
  #allocation2 [shape = 'f32[64,128]{1,0:T(8,128)}', space=vmem, size = 0x8000, scoped, tag = 'scratch operand']
  #allocation3 [shape = 'f32[64,32]{1,0:T(8,128)}', space=vmem, size = 0x8000, scoped, tag = 'scratch operand']
  %s0 = inlined_call_operand.vmem [shape: s32[1,64,1], index: 0, kind: input, shape index: {}]
  %s1 = inlined_call_operand.hbm [shape: f32[128,128], index: 1, kind: input, shape index: {}]
  %s2 = inlined_call_operand.vmem [shape: f32[32,128], index: 2, kind: input, shape index: {}]
  %s3 = inlined_call_operand.vmem [shape: f32[1,128], index: 3, kind: input, shape index: {}]
  %s4 = inlined_call_operand.vmem [shape: f32[32,128], index: 4, kind: input, shape index: {}]
  %s5 = inlined_call_operand.hbm [shape: f32[32,128], index: 5, kind: input, shape index: {}]
  %s6 = inlined_call_operand.vmem [shape: f32[1,128], index: 6, kind: input, shape index: {}]
  %s7 = inlined_call_operand.hbm [shape: f32[128,128], index: 7, kind: input, shape index: {}]
  %s8 = inlined_call_operand.vmem [shape: f32[1,128], index: 8, kind: input, shape index: {}]
  %s9 = inlined_call_operand.hbm [shape: f32[8,128], index: 9, kind: output, shape index: {}]
  %s10 = sld [smem:[#allocation0]]
  $region58: #{tpu_custom_call.1} parent=0
    _
  %s12 = ssub.s32 1, %s10
  %s13 = scalar_select 0, %s12, %s10
  $region1: #{tpu_custom_call.1} parent=0
    #allocation4 [shape = 'u8[65536]{0}', space=vmem, size = 0x10000, scoped, tag = 'input window, operand 1, single buffered']
    #allocation5 [shape = 's32[1]{0}', space=sflag, size = 0x4, scoped, tag = 'scoped memory for tpu_custom_call.1']
    #allocation6 [shape = 's32[1]{0}', space=sflag, size = 0x4, scoped, tag = 'scoped memory for tpu_custom_call.1']
    #allocation7 [shape = 'u8[16384]{0}', space=vmem, size = 0x4000, scoped, tag = 'input window, operand 5, single buffered']
    #allocation8 [shape = 's32[1]{0}', space=sflag, size = 0x4, scoped, tag = 'scoped memory for tpu_custom_call.1']
    #allocation9 [shape = 'u8[65536]{0}', space=vmem, size = 0x10000, scoped, tag = 'input window, operand 7, single buffered']
    #allocation10 [shape = 'u8[4096]{0}', space=vmem, size = 0x1000, scoped, tag = 'output window, operand 0, single buffered']
    %14 = vsyncpa [#allocation5], 0
    %15 = vsyncpa [#allocation8], 0
    %16 = vsyncpa [#allocation6], 0
    // Predicated region
    $region2: #{tpu_custom_call.1} parent=1 // pred_check
      _
    $region3: #{tpu_custom_call.1} parent=1 // pred_check_branch
      %18 = sbr.rel (0) target = $region5
    $region4: #{tpu_custom_call.1} parent=1 // pred_region
      _
    $region5: #{tpu_custom_call.1} parent=1 // pred_fallthru
      _
    // Predicated region
    $region6: #{tpu_custom_call.1} parent=1 // pred_check
      _
    $region7: #{tpu_custom_call.1} parent=1 // pred_check_branch
      %20 = sbr.rel (0) target = $region9
    $region8: #{tpu_custom_call.1} parent=1 // pred_region
      %s22 = ssub.s32 2048, 2048
      %23 = vsyncadd [#allocation5], %s22
      %s24 = sshll.u32 [#allocation4], 4
      %s25 = int_to_ptr.vmem [resolvable:$true] %s24
      %30 = dma.hbm_to_vmem [thread:$0]  %s1, 2048, %s25, [#allocation5], 128, 128, 8
    $region9: #{tpu_custom_call.1} parent=1 // pred_fallthru
      _
    // Predicated region
    $region10: #{tpu_custom_call.1} parent=1 // pred_check
      _
    $region11: #{tpu_custom_call.1} parent=1 // pred_check_branch
      %32 = sbr.rel (0) target = $region13
    $region12: #{tpu_custom_call.1} parent=1 // pred_region
      _
    $region13: #{tpu_custom_call.1} parent=1 // pred_fallthru
      _
    // Predicated region
    $region14: #{tpu_custom_call.1} parent=1 // pred_check
      _
    $region15: #{tpu_custom_call.1} parent=1 // pred_check_branch
      %34 = sbr.rel (0) target = $region17
    $region16: #{tpu_custom_call.1} parent=1 // pred_region
      _
    $region17: #{tpu_custom_call.1} parent=1 // pred_fallthru
      _
    // Predicated region
    $region18: #{tpu_custom_call.1} parent=1 // pred_check
      _
    $region19: #{tpu_custom_call.1} parent=1 // pred_check_branch
      %36 = sbr.rel (0) target = $region21
    $region20: #{tpu_custom_call.1} parent=1 // pred_region
      _
    $region21: #{tpu_custom_call.1} parent=1 // pred_fallthru
      _
    // Predicated region
    $region22: #{tpu_custom_call.1} parent=1 // pred_check
      _
    $region23: #{tpu_custom_call.1} parent=1 // pred_check_branch
      %38 = sbr.rel (0) target = $region25
    $region24: #{tpu_custom_call.1} parent=1 // pred_region
      %s40 = ssub.s32 512, 512
      %41 = vsyncadd [#allocation8], %s40
      %s42 = sshll.u32 [#allocation7], 4
      %s43 = int_to_ptr.vmem [resolvable:$true] %s42
      %48 = dma.hbm_to_vmem [thread:$0]  %s5, 512, %s43, [#allocation8], 128, 128, 8
    $region25: #{tpu_custom_call.1} parent=1 // pred_fallthru
      _
    // Predicated region
    $region26: #{tpu_custom_call.1} parent=1 // pred_check
      _
    $region27: #{tpu_custom_call.1} parent=1 // pred_check_branch
      %50 = sbr.rel (0) target = $region29
    $region28: #{tpu_custom_call.1} parent=1 // pred_region
      _
    $region29: #{tpu_custom_call.1} parent=1 // pred_fallthru
      _
    // Predicated region
    $region30: #{tpu_custom_call.1} parent=1 // pred_check
      _
    $region31: #{tpu_custom_call.1} parent=1 // pred_check_branch
      %52 = sbr.rel (0) target = $region33
    $region32: #{tpu_custom_call.1} parent=1 // pred_region
      %s54 = ssub.s32 2048, 2048
      %55 = vsyncadd [#allocation8], %s54
      %s56 = sshll.u32 [#allocation9], 4
      %s57 = int_to_ptr.vmem [resolvable:$true] %s56
      %62 = dma.hbm_to_vmem [thread:$0]  %s7, 2048, %s57, [#allocation8], 128, 128, 8
    $region33: #{tpu_custom_call.1} parent=1 // pred_fallthru
      _
    // Predicated region
    $region34: #{tpu_custom_call.1} parent=1 // pred_check
      _
    $region35: #{tpu_custom_call.1} parent=1 // pred_check_branch
      %64 = sbr.rel (0) target = $region37
    $region36: #{tpu_custom_call.1} parent=1 // pred_region
      _
    $region37: #{tpu_custom_call.1} parent=1 // pred_fallthru
      _
    // Predicated region
    $region38: #{tpu_custom_call.1} parent=1 // pred_check
      _
    $region39: #{tpu_custom_call.1} parent=1 // pred_check_branch
      %66 = sbr.rel (0) target = $region41
    $region40: #{tpu_custom_call.1} parent=1 // pred_region
      %67 = dma.done [#allocation5], 2048
    $region41: #{tpu_custom_call.1} parent=1 // pred_fallthru
      _
    // Predicated region
    $region42: #{tpu_custom_call.1} parent=1 // pred_check
      _
    $region43: #{tpu_custom_call.1} parent=1 // pred_check_branch
      %69 = sbr.rel (0) target = $region45
    $region44: #{tpu_custom_call.1} parent=1 // pred_region
      %70 = dma.done [#allocation8], 512
    $region45: #{tpu_custom_call.1} parent=1 // pred_fallthru
      _
    // Predicated region
    $region46: #{tpu_custom_call.1} parent=1 // pred_check
      _
    $region47: #{tpu_custom_call.1} parent=1 // pred_check_branch
      %72 = sbr.rel (0) target = $region49
    $region48: #{tpu_custom_call.1} parent=1 // pred_region
      %73 = dma.done [#allocation8], 2048
    $region49: #{tpu_custom_call.1} parent=1 // pred_fallthru
      _
    %v74 = vld [vmem:[%s0] sm:$0xff]
    %v75 = vld [vmem:[%s0 + $0x8] sm:$0xff]
    %v76 = vld [vmem:[%s0 + $0x10] sm:$0xff]
    %v77 = vld [vmem:[%s0 + $0x18] sm:$0xff]
    %v78 = vld [vmem:[%s0 + $0x20] sm:$0xff]
    %v79 = vld [vmem:[%s0 + $0x28] sm:$0xff]
    %v80 = vld [vmem:[%s0 + $0x30] sm:$0xff]
    %v81 = vld [vmem:[%s0 + $0x38] sm:$0xff]
    %v82 = vlaneseq
    %v83 = vand.u32 %v82, 127
    %84 = vset.pattern.permute.xlu0 0
    %85 = vperm.xlu0 %84, %v74
    %v86 = vpop.permute.xlu0 %85
    %87 = vset.pattern.permute.xlu0 0
    %88 = vperm.xlu0 %87, %v75
    %v89 = vpop.permute.xlu0 %88
    %90 = vset.pattern.permute.xlu0 0
    %91 = vperm.xlu0 %90, %v76
    %v92 = vpop.permute.xlu0 %91
    %93 = vset.pattern.permute.xlu0 0
    %94 = vperm.xlu0 %93, %v77
    %v95 = vpop.permute.xlu0 %94
    %96 = vset.pattern.permute.xlu0 0
    %97 = vperm.xlu0 %96, %v78
    %v98 = vpop.permute.xlu0 %97
    %99 = vset.pattern.permute.xlu0 0
    %100 = vperm.xlu0 %99, %v79
    %v101 = vpop.permute.xlu0 %100
    %102 = vset.pattern.permute.xlu0 0
    %103 = vperm.xlu0 %102, %v80
    %v104 = vpop.permute.xlu0 %103
    %105 = vset.pattern.permute.xlu0 0
    %106 = vperm.xlu0 %105, %v81
    %v107 = vpop.permute.xlu0 %106
    %vm108 = vcmp.eq.s32.totalorder %v83, %v86
    %vm109 = vcmp.eq.s32.totalorder %v83, %v89
    %vm110 = vcmp.eq.s32.totalorder %v83, %v92
    %vm111 = vcmp.eq.s32.totalorder %v83, %v95
    %vm112 = vcmp.eq.s32.totalorder %v83, %v98
    %vm113 = vcmp.eq.s32.totalorder %v83, %v101
    %vm114 = vcmp.eq.s32.totalorder %v83, %v104
    %vm115 = vcmp.eq.s32.totalorder %v83, %v107
    %v116 = vsel %vm108, 1, 0
    %v117 = vsel %vm109, 1, 0
    %v118 = vsel %vm110, 1, 0
    %v119 = vsel %vm111, 1, 0
    %v120 = vsel %vm112, 1, 0
    %v121 = vsel %vm113, 1, 0
    %v122 = vsel %vm114, 1, 0
    %v123 = vsel %vm115, 1, 0
    %v124 = vcvt.s32.f32 %v116
    %v125 = vcvt.s32.f32 %v117
    %v126 = vcvt.s32.f32 %v118
    %v127 = vcvt.s32.f32 %v119
    %v128 = vcvt.s32.f32 %v120
    %v129 = vcvt.s32.f32 %v121
    %v130 = vcvt.s32.f32 %v122
    %v131 = vcvt.s32.f32 %v123
    %v132 = vld [vmem:[#allocation4] sm:$0xff]
    %v133 = vld [vmem:[#allocation4 + $0x8] sm:$0xff]
    %v134 = vld [vmem:[#allocation4 + $0x10] sm:$0xff]
    %v135 = vld [vmem:[#allocation4 + $0x18] sm:$0xff]
    %v136 = vld [vmem:[#allocation4 + $0x20] sm:$0xff]
    %v137 = vld [vmem:[#allocation4 + $0x28] sm:$0xff]
    %v138 = vld [vmem:[#allocation4 + $0x30] sm:$0xff]
    %v139 = vld [vmem:[#allocation4 + $0x38] sm:$0xff]
    %v140 = vld [vmem:[#allocation4 + $0x40] sm:$0xff]
    %v141 = vld [vmem:[#allocation4 + $0x48] sm:$0xff]
    %v142 = vld [vmem:[#allocation4 + $0x50] sm:$0xff]
    %v143 = vld [vmem:[#allocation4 + $0x58] sm:$0xff]
    %v144 = vld [vmem:[#allocation4 + $0x60] sm:$0xff]
    %v145 = vld [vmem:[#allocation4 + $0x68] sm:$0xff]
    %v146 = vld [vmem:[#allocation4 + $0x70] sm:$0xff]
    %v147 = vld [vmem:[#allocation4 + $0x78] sm:$0xff]
    %v148 = vld [vmem:[%s3] sm:$0x1]
    %v150 = vlaneseq
    %v151 = vshrl.u32 %v150, 7
    %v152 = vsub.s32 0, %v151
    %v153 = vrot.slane %v148, %v152
    %155 = vmatprep.subr.mxu0 0.0
    %156 = vmatpush1.msra.mxu0 %v132
    %157 = vmatprep.subr.mxu0 0.0
    %158 = vmatpush1.msra.mxu0 %v133
    %159 = vmatprep.subr.mxu0 0.0
    %160 = vmatpush1.msra.mxu0 %v134
    %161 = vmatprep.subr.mxu0 0.0
    %162 = vmatpush1.msra.mxu0 %v135
    %163 = vmatprep.subr.mxu0 0.0
    %164 = vmatpush1.msra.mxu0 %v136
    %165 = vmatprep.subr.mxu0 0.0
    %166 = vmatpush1.msra.mxu0 %v137
    %167 = vmatprep.subr.mxu0 0.0
    %168 = vmatpush1.msra.mxu0 %v138
    %169 = vmatprep.subr.mxu0 0.0
    %170 = vmatpush1.msra.mxu0 %v139
    %171 = vmatprep.subr.mxu0 0.0
    %172 = vmatpush1.msra.mxu0 %v140
    %173 = vmatprep.subr.mxu0 0.0
    %174 = vmatpush1.msra.mxu0 %v141
    %175 = vmatprep.subr.mxu0 0.0
    %176 = vmatpush1.msra.mxu0 %v142
    %177 = vmatprep.subr.mxu0 0.0
    %178 = vmatpush1.msra.mxu0 %v143
    %179 = vmatprep.subr.mxu0 0.0
    %180 = vmatpush1.msra.mxu0 %v144
    %181 = vmatprep.subr.mxu0 0.0
    %182 = vmatpush1.msra.mxu0 %v145
    %183 = vmatprep.subr.mxu0 0.0
    %184 = vmatpush1.msra.mxu0 %v146
    %185 = vmatprep.subr.mxu0 0.0
    %186 = vmatpush1.msra.mxu0 %v147
    %187 = vmatprep.subr.mxu0 0.0
    %188 = vmatpush1.msra.mxu0 0.0
    %189 = vmatprep.subr.mxu0 0.0
    %190 = vmatpush1.msra.mxu0 0.0
    %191 = vmatprep.subr.mxu0 0.0
    %192 = vmatpush1.msra.mxu0 0.0
    %193 = vmatprep.subr.mxu0 0.0
    %194 = vmatpush1.msra.mxu0 0.0
    %195 = vmatprep.subr.mxu0 0.0
    %196 = vmatpush1.msra.mxu0 0.0
    %197 = vmatprep.subr.mxu0 0.0
    %198 = vmatpush1.msra.mxu0 0.0
    %199 = vmatprep.subr.mxu0 0.0
    %200 = vmatpush1.msra.mxu0 0.0
    %201 = vmatprep.subr.mxu0 0.0
    %202 = vmatpush1.msra.mxu0 0.0
    %203 = vmatprep.subr.mxu0 0.0
    %204 = vmatpush1.msra.mxu0 0.0
    %205 = vmatprep.subr.mxu0 0.0
    %206 = vmatpush1.msra.mxu0 0.0
    %207 = vmatprep.subr.mxu0 0.0
    %208 = vmatpush1.msra.mxu0 0.0
    %209 = vmatprep.subr.mxu0 0.0
    %210 = vmatpush1.msra.mxu0 0.0
    %211 = vmatprep.subr.mxu0 0.0
    %212 = vmatpush1.msra.mxu0 0.0
    %213 = vmatprep.subr.mxu0 0.0
    %214 = vmatpush1.msra.mxu0 0.0
    %215 = vmatprep.subr.mxu0 0.0
    %216 = vmatpush1.msra.mxu0 0.0
    %217 = vmatprep.subr.mxu0 0.0
    %218 = vmatpush1.msra.mxu0 0.0
    %219 = vmatprep.mubr.f32.mxu0 0.0
    %220 = vmatmul.mubr.f32.gmra.mrb[0].mxu0 %v124
    %v221 = vpop.f32.mrb[0].mxu0
    %v222 = vadd.f32 %v153, %v221
    %v223 = vpop.f32.mrb[0].mxu0
    %224 = vmatprep.mubr.f32.mxu0 0.0
    %225 = vmatmul.mubr.f32.gmra.mrb[0].mxu0 %v125
    %v226 = vpop.f32.mrb[0].mxu0
    %v227 = vadd.f32 %v153, %v226
    %v228 = vpop.f32.mrb[0].mxu0
    %229 = vmatprep.mubr.f32.mxu0 0.0
    %230 = vmatmul.mubr.f32.gmra.mrb[0].mxu0 %v126
    %v231 = vpop.f32.mrb[0].mxu0
    %v232 = vadd.f32 %v153, %v231
    %v233 = vpop.f32.mrb[0].mxu0
    %234 = vmatprep.mubr.f32.mxu0 0.0
    %235 = vmatmul.mubr.f32.gmra.mrb[0].mxu0 %v127
    %v236 = vpop.f32.mrb[0].mxu0
    %v237 = vadd.f32 %v153, %v236
    %v238 = vpop.f32.mrb[0].mxu0
    %239 = vmatprep.mubr.f32.mxu0 0.0
    %240 = vmatmul.mubr.f32.gmra.mrb[0].mxu0 %v128
    %v241 = vpop.f32.mrb[0].mxu0
    %v242 = vadd.f32 %v153, %v241
    %v243 = vpop.f32.mrb[0].mxu0
    %244 = vmatprep.mubr.f32.mxu0 0.0
    %245 = vmatmul.mubr.f32.gmra.mrb[0].mxu0 %v129
    %v246 = vpop.f32.mrb[0].mxu0
    %v247 = vadd.f32 %v153, %v246
    %v248 = vpop.f32.mrb[0].mxu0
    %249 = vmatprep.mubr.f32.mxu0 0.0
    %250 = vmatmul.mubr.f32.gmra.mrb[0].mxu0 %v130
    %v251 = vpop.f32.mrb[0].mxu0
    %v252 = vadd.f32 %v153, %v251
    %v253 = vpop.f32.mrb[0].mxu0
    %254 = vmatprep.mubr.f32.mxu0 0.0
    %255 = vmatmul.mubr.f32.gmra.mrb[0].mxu0 %v131
    %v256 = vpop.f32.mrb[0].mxu0
    %v257 = vadd.f32 %v153, %v256
    %v258 = vpop.f32.mrb[0].mxu0
    %259 = vdwg.mxu0
    %260 = vst [vmem:[#allocation2] sm:$0xff] %v222
    %261 = vst [vmem:[#allocation2 + $0x8] sm:$0xff] %v227
    %262 = vst [vmem:[#allocation2 + $0x10] sm:$0xff] %v232
    %263 = vst [vmem:[#allocation2 + $0x18] sm:$0xff] %v237
    %264 = vst [vmem:[#allocation2 + $0x20] sm:$0xff] %v242
    %265 = vst [vmem:[#allocation2 + $0x28] sm:$0xff] %v247
    %266 = vst [vmem:[#allocation2 + $0x30] sm:$0xff] %v252
    %267 = vst [vmem:[#allocation2 + $0x38] sm:$0xff] %v257
    %v268 = vld [vmem:[%s2] sm:$0xff]
    %v269 = vld [vmem:[%s2 + $0x8] sm:$0xff]
    %v270 = vld [vmem:[%s2 + $0x10] sm:$0xff]
    %v271 = vld [vmem:[%s2 + $0x18] sm:$0xff]
    %v272 = vld [vmem:[#allocation2] sm:$0xff]
    %vm273 = vcmask 261120
    %v275 = vsel %vm273, 0.0, 0
    %277 = vmatprep.subr.mxu0 0.0
    %278 = vmatpush1.msra.mxu0 %v268
    %279 = vmatprep.subr.mxu0 0.0
    %280 = vmatpush1.msra.mxu0 %v269
    %281 = vmatprep.subr.mxu0 0.0
    %282 = vmatpush1.msra.mxu0 %v270
    %283 = vmatprep.subr.mxu0 0.0
    %284 = vmatpush1.msra.mxu0 %v271
    %285 = vmatprep.subr.mxu0 0.0
    %286 = vmatpush1.msra.mxu0 0.0
    %287 = vmatprep.subr.mxu0 0.0
    %288 = vmatpush1.msra.mxu0 0.0
    %289 = vmatprep.subr.mxu0 0.0
    %290 = vmatpush1.msra.mxu0 0.0
    %291 = vmatprep.subr.mxu0 0.0
    %292 = vmatpush1.msra.mxu0 0.0
    %293 = vmatprep.subr.mxu0 0.0
    %294 = vmatpush1.msra.mxu0 0.0
    %295 = vmatprep.subr.mxu0 0.0
    %296 = vmatpush1.msra.mxu0 0.0
    %297 = vmatprep.subr.mxu0 0.0
    %298 = vmatpush1.msra.mxu0 0.0
    %299 = vmatprep.subr.mxu0 0.0
    %300 = vmatpush1.msra.mxu0 0.0
    %301 = vmatprep.subr.mxu0 0.0
    %302 = vmatpush1.msra.mxu0 0.0
    %303 = vmatprep.subr.mxu0 0.0
    %304 = vmatpush1.msra.mxu0 0.0
    %305 = vmatprep.subr.mxu0 0.0
    %306 = vmatpush1.msra.mxu0 0.0
    %307 = vmatprep.subr.mxu0 0.0
    %308 = vmatpush1.msra.mxu0 0.0
    %309 = vmatprep.subr.mxu0 0.0
    %310 = vmatpush1.msra.mxu0 0.0
    %311 = vmatprep.subr.mxu0 0.0
    %312 = vmatpush1.msra.mxu0 0.0
    %313 = vmatprep.subr.mxu0 0.0
    %314 = vmatpush1.msra.mxu0 0.0
    %315 = vmatprep.subr.mxu0 0.0
    %316 = vmatpush1.msra.mxu0 0.0
    %317 = vmatprep.subr.mxu0 0.0
    %318 = vmatpush1.msra.mxu0 0.0
    %319 = vmatprep.subr.mxu0 0.0
    %320 = vmatpush1.msra.mxu0 0.0
    %321 = vmatprep.subr.mxu0 0.0
    %322 = vmatpush1.msra.mxu0 0.0
    %323 = vmatprep.subr.mxu0 0.0
    %324 = vmatpush1.msra.mxu0 0.0
    %325 = vmatprep.subr.mxu0 0.0
    %326 = vmatpush1.msra.mxu0 0.0
    %327 = vmatprep.subr.mxu0 0.0
    %328 = vmatpush1.msra.mxu0 0.0
    %329 = vmatprep.subr.mxu0 0.0
    %330 = vmatpush1.msra.mxu0 0.0
    %331 = vmatprep.subr.mxu0 0.0
    %332 = vmatpush1.msra.mxu0 0.0
    %333 = vmatprep.subr.mxu0 0.0
    %334 = vmatpush1.msra.mxu0 0.0
    %335 = vmatprep.subr.mxu0 0.0
    %336 = vmatpush1.msra.mxu0 0.0
    %337 = vmatprep.subr.mxu0 0.0
    %338 = vmatpush1.msra.mxu0 0.0
    %339 = vmatprep.subr.mxu0 0.0
    %340 = vmatpush1.msra.mxu0 0.0
    %341 = vmatprep.mubr.f32.mxu0 0.0
    %342 = vmatmul.mubr.f32.gmra.mrb[0].mxu0 %v275
    %v343 = vpop.f32.mrb[0].mxu0
    %v344 = vadd.f32 0.0, %v343
    %v345 = vpop.f32.mrb[0].mxu0
    %346 = vdwg.mxu0
    %v347 = vadd.f32 %v272, %v344
    %v348 = vxor.u32 %v347, 2147483648
    %v349 = vmul.f32 %v348, 1.442695
    %v350 = vpow.pop %v349
    %v351 = vadd.f32 %v350, 1.0
    %v352 = vrcp.pop %v351
    %v353 = vmul.f32 1.0, %v352
    %v354 = vtanh.pop %v347
    %v355 = vmul.f32 %v353, 0.0
    %357 = vrot.lane.b32.xlu0 %v354, 32
    %v358 = vpop.permute.xlu0 %357
    %v360 = vmul.f32 %v353, %v358
    %362 = vrot.lane.b32.xlu0 %v360, 32
    %v363 = vpop.permute.xlu0 %362
    %v365 = vadd.f32 %v355, %v363
    %v366 = vtanh.pop %v365
    %368 = vrot.lane.b32.xlu0 %v366, 32
    %v369 = vpop.permute.xlu0 %368
    %v371 = vmul.f32 %v353, %v369
    %373 = vrot.lane.b32.xlu0 %v371, 64
    %v374 = vpop.permute.xlu0 %373
    %376 = vst.msk [vmem:[#allocation3] sm:$0xff] %vm273, %v374
    %v377 = vld [vmem:[#allocation2 + $0x8] sm:$0xff]
    %v378 = vsel %vm273, %v374, 0
    %380 = vmatprep.subr.mxu0 0.0
    %381 = vmatpush1.msra.mxu0 %v268
    %382 = vmatprep.subr.mxu0 0.0
    %383 = vmatpush1.msra.mxu0 %v269
    %384 = vmatprep.subr.mxu0 0.0
    %385 = vmatpush1.msra.mxu0 %v270
    %386 = vmatprep.subr.mxu0 0.0
    %387 = vmatpush1.msra.mxu0 %v271
    %388 = vmatprep.subr.mxu0 0.0
    %389 = vmatpush1.msra.mxu0 0.0
    %390 = vmatprep.subr.mxu0 0.0
    %391 = vmatpush1.msra.mxu0 0.0
    %392 = vmatprep.subr.mxu0 0.0
    %393 = vmatpush1.msra.mxu0 0.0
    %394 = vmatprep.subr.mxu0 0.0
    %395 = vmatpush1.msra.mxu0 0.0
    %396 = vmatprep.subr.mxu0 0.0
    %397 = vmatpush1.msra.mxu0 0.0
    %398 = vmatprep.subr.mxu0 0.0
    %399 = vmatpush1.msra.mxu0 0.0
    %400 = vmatprep.subr.mxu0 0.0
    %401 = vmatpush1.msra.mxu0 0.0
    %402 = vmatprep.subr.mxu0 0.0
    %403 = vmatpush1.msra.mxu0 0.0
    %404 = vmatprep.subr.mxu0 0.0
    %405 = vmatpush1.msra.mxu0 0.0
    %406 = vmatprep.subr.mxu0 0.0
    %407 = vmatpush1.msra.mxu0 0.0
    %408 = vmatprep.subr.mxu0 0.0
    %409 = vmatpush1.msra.mxu0 0.0
    %410 = vmatprep.subr.mxu0 0.0
    %411 = vmatpush1.msra.mxu0 0.0
    %412 = vmatprep.subr.mxu0 0.0
    %413 = vmatpush1.msra.mxu0 0.0
    %414 = vmatprep.subr.mxu0 0.0
    %415 = vmatpush1.msra.mxu0 0.0
    %416 = vmatprep.subr.mxu0 0.0
    %417 = vmatpush1.msra.mxu0 0.0
    %418 = vmatprep.subr.mxu0 0.0
    %419 = vmatpush1.msra.mxu0 0.0
    %420 = vmatprep.subr.mxu0 0.0
    %421 = vmatpush1.msra.mxu0 0.0
    %422 = vmatprep.subr.mxu0 0.0
    %423 = vmatpush1.msra.mxu0 0.0
    %424 = vmatprep.subr.mxu0 0.0
    %425 = vmatpush1.msra.mxu0 0.0
    %426 = vmatprep.subr.mxu0 0.0
    %427 = vmatpush1.msra.mxu0 0.0
    %428 = vmatprep.subr.mxu0 0.0
    %429 = vmatpush1.msra.mxu0 0.0
    %430 = vmatprep.subr.mxu0 0.0
    %431 = vmatpush1.msra.mxu0 0.0
    %432 = vmatprep.subr.mxu0 0.0
    %433 = vmatpush1.msra.mxu0 0.0
    %434 = vmatprep.subr.mxu0 0.0
    %435 = vmatpush1.msra.mxu0 0.0
    %436 = vmatprep.subr.mxu0 0.0
    %437 = vmatpush1.msra.mxu0 0.0
    %438 = vmatprep.subr.mxu0 0.0
    %439 = vmatpush1.msra.mxu0 0.0
    %440 = vmatprep.subr.mxu0 0.0
    %441 = vmatpush1.msra.mxu0 0.0
    %442 = vmatprep.subr.mxu0 0.0
    %443 = vmatpush1.msra.mxu0 0.0
    %444 = vmatprep.mubr.f32.mxu0 0.0
    %445 = vmatmul.mubr.f32.gmra.mrb[0].mxu0 %v378
    %v446 = vpop.f32.mrb[0].mxu0
    %v447 = vadd.f32 0.0, %v446
    %v448 = vpop.f32.mrb[0].mxu0
    %449 = vdwg.mxu0
    %v450 = vadd.f32 %v377, %v447
    %v451 = vxor.u32 %v450, 2147483648
    %v452 = vmul.f32 %v451, 1.442695
    %v453 = vpow.pop %v452
    %v454 = vadd.f32 %v453, 1.0
    %v455 = vrcp.pop %v454
    %v456 = vmul.f32 1.0, %v455
    %v457 = vtanh.pop %v450
    %v458 = vmul.f32 %v456, %v365
    %460 = vrot.lane.b32.xlu0 %v457, 32
    %v461 = vpop.permute.xlu0 %460
    %v463 = vmul.f32 %v456, %v461
    %465 = vrot.lane.b32.xlu0 %v463, 32
    %v466 = vpop.permute.xlu0 %465
    %v468 = vadd.f32 %v458, %v466
    %v469 = vtanh.pop %v468
    %471 = vrot.lane.b32.xlu0 %v469, 32
    %v472 = vpop.permute.xlu0 %471
    %v474 = vmul.f32 %v456, %v472
    %476 = vrot.lane.b32.xlu0 %v474, 64
    %v477 = vpop.permute.xlu0 %476
    %479 = vst.msk [vmem:[#allocation3 + $0x8] sm:$0xff] %vm273, %v477
    %v480 = vld [vmem:[#allocation2 + $0x10] sm:$0xff]
    %v481 = vsel %vm273, %v477, 0
    %483 = vmatprep.subr.mxu0 0.0
    %484 = vmatpush1.msra.mxu0 %v268
    %485 = vmatprep.subr.mxu0 0.0
    %486 = vmatpush1.msra.mxu0 %v269
    %487 = vmatprep.subr.mxu0 0.0
    %488 = vmatpush1.msra.mxu0 %v270
    %489 = vmatprep.subr.mxu0 0.0
    %490 = vmatpush1.msra.mxu0 %v271
    %491 = vmatprep.subr.mxu0 0.0
    %492 = vmatpush1.msra.mxu0 0.0
    %493 = vmatprep.subr.mxu0 0.0
    %494 = vmatpush1.msra.mxu0 0.0
    %495 = vmatprep.subr.mxu0 0.0
    %496 = vmatpush1.msra.mxu0 0.0
    %497 = vmatprep.subr.mxu0 0.0
    %498 = vmatpush1.msra.mxu0 0.0
    %499 = vmatprep.subr.mxu0 0.0
    %500 = vmatpush1.msra.mxu0 0.0
    %501 = vmatprep.subr.mxu0 0.0
    %502 = vmatpush1.msra.mxu0 0.0
    %503 = vmatprep.subr.mxu0 0.0
    %504 = vmatpush1.msra.mxu0 0.0
    %505 = vmatprep.subr.mxu0 0.0
    %506 = vmatpush1.msra.mxu0 0.0
    %507 = vmatprep.subr.mxu0 0.0
    %508 = vmatpush1.msra.mxu0 0.0
    %509 = vmatprep.subr.mxu0 0.0
    %510 = vmatpush1.msra.mxu0 0.0
    %511 = vmatprep.subr.mxu0 0.0
    %512 = vmatpush1.msra.mxu0 0.0
    %513 = vmatprep.subr.mxu0 0.0
    %514 = vmatpush1.msra.mxu0 0.0
    %515 = vmatprep.subr.mxu0 0.0
    %516 = vmatpush1.msra.mxu0 0.0
    %517 = vmatprep.subr.mxu0 0.0
    %518 = vmatpush1.msra.mxu0 0.0
    %519 = vmatprep.subr.mxu0 0.0
    %520 = vmatpush1.msra.mxu0 0.0
    %521 = vmatprep.subr.mxu0 0.0
    %522 = vmatpush1.msra.mxu0 0.0
    %523 = vmatprep.subr.mxu0 0.0
    %524 = vmatpush1.msra.mxu0 0.0
    %525 = vmatprep.subr.mxu0 0.0
    %526 = vmatpush1.msra.mxu0 0.0
    %527 = vmatprep.subr.mxu0 0.0
    %528 = vmatpush1.msra.mxu0 0.0
    %529 = vmatprep.subr.mxu0 0.0
    %530 = vmatpush1.msra.mxu0 0.0
    %531 = vmatprep.subr.mxu0 0.0
    %532 = vmatpush1.msra.mxu0 0.0
    %533 = vmatprep.subr.mxu0 0.0
    %534 = vmatpush1.msra.mxu0 0.0
    %535 = vmatprep.subr.mxu0 0.0
    %536 = vmatpush1.msra.mxu0 0.0
    %537 = vmatprep.subr.mxu0 0.0
    %538 = vmatpush1.msra.mxu0 0.0
    %539 = vmatprep.subr.mxu0 0.0
    %540 = vmatpush1.msra.mxu0 0.0
    %541 = vmatprep.subr.mxu0 0.0
    %542 = vmatpush1.msra.mxu0 0.0
    %543 = vmatprep.subr.mxu0 0.0
    %544 = vmatpush1.msra.mxu0 0.0
    %545 = vmatprep.subr.mxu0 0.0
    %546 = vmatpush1.msra.mxu0 0.0
    %547 = vmatprep.mubr.f32.mxu0 0.0
    %548 = vmatmul.mubr.f32.gmra.mrb[0].mxu0 %v481
    %v549 = vpop.f32.mrb[0].mxu0
    %v550 = vadd.f32 0.0, %v549
    %v551 = vpop.f32.mrb[0].mxu0
    %552 = vdwg.mxu0
    %v553 = vadd.f32 %v480, %v550
    %v554 = vxor.u32 %v553, 2147483648
    %v555 = vmul.f32 %v554, 1.442695
    %v556 = vpow.pop %v555
    %v557 = vadd.f32 %v556, 1.0
    %v558 = vrcp.pop %v557
    %v559 = vmul.f32 1.0, %v558
    %v560 = vtanh.pop %v553
    %v561 = vmul.f32 %v559, %v468
    %563 = vrot.lane.b32.xlu0 %v560, 32
    %v564 = vpop.permute.xlu0 %563
    %v566 = vmul.f32 %v559, %v564
    %568 = vrot.lane.b32.xlu0 %v566, 32
    %v569 = vpop.permute.xlu0 %568
    %v571 = vadd.f32 %v561, %v569
    %v572 = vtanh.pop %v571
    %574 = vrot.lane.b32.xlu0 %v572, 32
    %v575 = vpop.permute.xlu0 %574
    %v577 = vmul.f32 %v559, %v575
    %579 = vrot.lane.b32.xlu0 %v577, 64
    %v580 = vpop.permute.xlu0 %579
    %582 = vst.msk [vmem:[#allocation3 + $0x10] sm:$0xff] %vm273, %v580
    %v583 = vld [vmem:[#allocation2 + $0x18] sm:$0xff]
    %v584 = vsel %vm273, %v580, 0
    %586 = vmatprep.subr.mxu0 0.0
    %587 = vmatpush1.msra.mxu0 %v268
    %588 = vmatprep.subr.mxu0 0.0
    %589 = vmatpush1.msra.mxu0 %v269
    %590 = vmatprep.subr.mxu0 0.0
    %591 = vmatpush1.msra.mxu0 %v270
    %592 = vmatprep.subr.mxu0 0.0
    %593 = vmatpush1.msra.mxu0 %v271
    %594 = vmatprep.subr.mxu0 0.0
    %595 = vmatpush1.msra.mxu0 0.0
    %596 = vmatprep.subr.mxu0 0.0
    %597 = vmatpush1.msra.mxu0 0.0
    %598 = vmatprep.subr.mxu0 0.0
    %599 = vmatpush1.msra.mxu0 0.0
    %600 = vmatprep.subr.mxu0 0.0
    %601 = vmatpush1.msra.mxu0 0.0
    %602 = vmatprep.subr.mxu0 0.0
    %603 = vmatpush1.msra.mxu0 0.0
    %604 = vmatprep.subr.mxu0 0.0
    %605 = vmatpush1.msra.mxu0 0.0
    %606 = vmatprep.subr.mxu0 0.0
    %607 = vmatpush1.msra.mxu0 0.0
    %608 = vmatprep.subr.mxu0 0.0
    %609 = vmatpush1.msra.mxu0 0.0
    %610 = vmatprep.subr.mxu0 0.0
    %611 = vmatpush1.msra.mxu0 0.0
    %612 = vmatprep.subr.mxu0 0.0
    %613 = vmatpush1.msra.mxu0 0.0
    %614 = vmatprep.subr.mxu0 0.0
    %615 = vmatpush1.msra.mxu0 0.0
    %616 = vmatprep.subr.mxu0 0.0
    %617 = vmatpush1.msra.mxu0 0.0
    %618 = vmatprep.subr.mxu0 0.0
    %619 = vmatpush1.msra.mxu0 0.0
    %620 = vmatprep.subr.mxu0 0.0
    %621 = vmatpush1.msra.mxu0 0.0
    %622 = vmatprep.subr.mxu0 0.0
    %623 = vmatpush1.msra.mxu0 0.0
    %624 = vmatprep.subr.mxu0 0.0
    %625 = vmatpush1.msra.mxu0 0.0
    %626 = vmatprep.subr.mxu0 0.0
    %627 = vmatpush1.msra.mxu0 0.0
    %628 = vmatprep.subr.mxu0 0.0
    %629 = vmatpush1.msra.mxu0 0.0
    %630 = vmatprep.subr.mxu0 0.0
    %631 = vmatpush1.msra.mxu0 0.0
    %632 = vmatprep.subr.mxu0 0.0
    %633 = vmatpush1.msra.mxu0 0.0
    %634 = vmatprep.subr.mxu0 0.0
    %635 = vmatpush1.msra.mxu0 0.0
    %636 = vmatprep.subr.mxu0 0.0
    %637 = vmatpush1.msra.mxu0 0.0
    %638 = vmatprep.subr.mxu0 0.0
    %639 = vmatpush1.msra.mxu0 0.0
    %640 = vmatprep.subr.mxu0 0.0
    %641 = vmatpush1.msra.mxu0 0.0
    %642 = vmatprep.subr.mxu0 0.0
    %643 = vmatpush1.msra.mxu0 0.0
    %644 = vmatprep.subr.mxu0 0.0
    %645 = vmatpush1.msra.mxu0 0.0
    %646 = vmatprep.subr.mxu0 0.0
    %647 = vmatpush1.msra.mxu0 0.0
    %648 = vmatprep.subr.mxu0 0.0
    %649 = vmatpush1.msra.mxu0 0.0
    %650 = vmatprep.mubr.f32.mxu0 0.0
    %651 = vmatmul.mubr.f32.gmra.mrb[0].mxu0 %v584
    %v652 = vpop.f32.mrb[0].mxu0
    %v653 = vadd.f32 0.0, %v652
    %v654 = vpop.f32.mrb[0].mxu0
    %655 = vdwg.mxu0
    %v656 = vadd.f32 %v583, %v653
    %v657 = vxor.u32 %v656, 2147483648
    %v658 = vmul.f32 %v657, 1.442695
    %v659 = vpow.pop %v658
    %v660 = vadd.f32 %v659, 1.0
    %v661 = vrcp.pop %v660
    %v662 = vmul.f32 1.0, %v661
    %v663 = vtanh.pop %v656
    %v664 = vmul.f32 %v662, %v571
    %666 = vrot.lane.b32.xlu0 %v663, 32
    %v667 = vpop.permute.xlu0 %666
    %v669 = vmul.f32 %v662, %v667
    %671 = vrot.lane.b32.xlu0 %v669, 32
    %v672 = vpop.permute.xlu0 %671
    %v674 = vadd.f32 %v664, %v672
    %v675 = vtanh.pop %v674
    %677 = vrot.lane.b32.xlu0 %v675, 32
    %v678 = vpop.permute.xlu0 %677
    %v680 = vmul.f32 %v662, %v678
    %682 = vrot.lane.b32.xlu0 %v680, 64
    %v683 = vpop.permute.xlu0 %682
    %685 = vst.msk [vmem:[#allocation3 + $0x18] sm:$0xff] %vm273, %v683
    %v686 = vld [vmem:[#allocation2 + $0x20] sm:$0xff]
    %v687 = vsel %vm273, %v683, 0
    %689 = vmatprep.subr.mxu0 0.0
    %690 = vmatpush1.msra.mxu0 %v268
    %691 = vmatprep.subr.mxu0 0.0
    %692 = vmatpush1.msra.mxu0 %v269
    %693 = vmatprep.subr.mxu0 0.0
    %694 = vmatpush1.msra.mxu0 %v270
    %695 = vmatprep.subr.mxu0 0.0
    %696 = vmatpush1.msra.mxu0 %v271
    %697 = vmatprep.subr.mxu0 0.0
    %698 = vmatpush1.msra.mxu0 0.0
    %699 = vmatprep.subr.mxu0 0.0
    %700 = vmatpush1.msra.mxu0 0.0
    %701 = vmatprep.subr.mxu0 0.0
    %702 = vmatpush1.msra.mxu0 0.0
    %703 = vmatprep.subr.mxu0 0.0
    %704 = vmatpush1.msra.mxu0 0.0
    %705 = vmatprep.subr.mxu0 0.0
    %706 = vmatpush1.msra.mxu0 0.0
    %707 = vmatprep.subr.mxu0 0.0
    %708 = vmatpush1.msra.mxu0 0.0
    %709 = vmatprep.subr.mxu0 0.0
    %710 = vmatpush1.msra.mxu0 0.0
    %711 = vmatprep.subr.mxu0 0.0
    %712 = vmatpush1.msra.mxu0 0.0
    %713 = vmatprep.subr.mxu0 0.0
    %714 = vmatpush1.msra.mxu0 0.0
    %715 = vmatprep.subr.mxu0 0.0
    %716 = vmatpush1.msra.mxu0 0.0
    %717 = vmatprep.subr.mxu0 0.0
    %718 = vmatpush1.msra.mxu0 0.0
    %719 = vmatprep.subr.mxu0 0.0
    %720 = vmatpush1.msra.mxu0 0.0
    %721 = vmatprep.subr.mxu0 0.0
    %722 = vmatpush1.msra.mxu0 0.0
    %723 = vmatprep.subr.mxu0 0.0
    %724 = vmatpush1.msra.mxu0 0.0
    %725 = vmatprep.subr.mxu0 0.0
    %726 = vmatpush1.msra.mxu0 0.0
    %727 = vmatprep.subr.mxu0 0.0
    %728 = vmatpush1.msra.mxu0 0.0
    %729 = vmatprep.subr.mxu0 0.0
    %730 = vmatpush1.msra.mxu0 0.0
    %731 = vmatprep.subr.mxu0 0.0
    %732 = vmatpush1.msra.mxu0 0.0
    %733 = vmatprep.subr.mxu0 0.0
    %734 = vmatpush1.msra.mxu0 0.0
    %735 = vmatprep.subr.mxu0 0.0
    %736 = vmatpush1.msra.mxu0 0.0
    %737 = vmatprep.subr.mxu0 0.0
    %738 = vmatpush1.msra.mxu0 0.0
    %739 = vmatprep.subr.mxu0 0.0
    %740 = vmatpush1.msra.mxu0 0.0
    %741 = vmatprep.subr.mxu0 0.0
    %742 = vmatpush1.msra.mxu0 0.0
    %743 = vmatprep.subr.mxu0 0.0
    %744 = vmatpush1.msra.mxu0 0.0
    %745 = vmatprep.subr.mxu0 0.0
    %746 = vmatpush1.msra.mxu0 0.0
    %747 = vmatprep.subr.mxu0 0.0
    %748 = vmatpush1.msra.mxu0 0.0
    %749 = vmatprep.subr.mxu0 0.0
    %750 = vmatpush1.msra.mxu0 0.0
    %751 = vmatprep.subr.mxu0 0.0
    %752 = vmatpush1.msra.mxu0 0.0
    %753 = vmatprep.mubr.f32.mxu0 0.0
    %754 = vmatmul.mubr.f32.gmra.mrb[0].mxu0 %v687
    %v755 = vpop.f32.mrb[0].mxu0
    %v756 = vadd.f32 0.0, %v755
    %v757 = vpop.f32.mrb[0].mxu0
    %758 = vdwg.mxu0
    %v759 = vadd.f32 %v686, %v756
    %v760 = vxor.u32 %v759, 2147483648
    %v761 = vmul.f32 %v760, 1.442695
    %v762 = vpow.pop %v761
    %v763 = vadd.f32 %v762, 1.0
    %v764 = vrcp.pop %v763
    %v765 = vmul.f32 1.0, %v764
    %v766 = vtanh.pop %v759
    %v767 = vmul.f32 %v765, %v674
    %769 = vrot.lane.b32.xlu0 %v766, 32
    %v770 = vpop.permute.xlu0 %769
    %v772 = vmul.f32 %v765, %v770
    %774 = vrot.lane.b32.xlu0 %v772, 32
    %v775 = vpop.permute.xlu0 %774
    %v777 = vadd.f32 %v767, %v775
    %v778 = vtanh.pop %v777
    %780 = vrot.lane.b32.xlu0 %v778, 32
    %v781 = vpop.permute.xlu0 %780
    %v783 = vmul.f32 %v765, %v781
    %785 = vrot.lane.b32.xlu0 %v783, 64
    %v786 = vpop.permute.xlu0 %785
    %788 = vst.msk [vmem:[#allocation3 + $0x20] sm:$0xff] %vm273, %v786
    %v789 = vld [vmem:[#allocation2 + $0x28] sm:$0xff]
    %v790 = vsel %vm273, %v786, 0
    %792 = vmatprep.subr.mxu0 0.0
    %793 = vmatpush1.msra.mxu0 %v268
    %794 = vmatprep.subr.mxu0 0.0
    %795 = vmatpush1.msra.mxu0 %v269
    %796 = vmatprep.subr.mxu0 0.0
    %797 = vmatpush1.msra.mxu0 %v270
    %798 = vmatprep.subr.mxu0 0.0
    %799 = vmatpush1.msra.mxu0 %v271
    %800 = vmatprep.subr.mxu0 0.0
    %801 = vmatpush1.msra.mxu0 0.0
    %802 = vmatprep.subr.mxu0 0.0
    %803 = vmatpush1.msra.mxu0 0.0
    %804 = vmatprep.subr.mxu0 0.0
    %805 = vmatpush1.msra.mxu0 0.0
    %806 = vmatprep.subr.mxu0 0.0
    %807 = vmatpush1.msra.mxu0 0.0
    %808 = vmatprep.subr.mxu0 0.0
    %809 = vmatpush1.msra.mxu0 0.0
    %810 = vmatprep.subr.mxu0 0.0
    %811 = vmatpush1.msra.mxu0 0.0
    %812 = vmatprep.subr.mxu0 0.0
    %813 = vmatpush1.msra.mxu0 0.0
    %814 = vmatprep.subr.mxu0 0.0
    %815 = vmatpush1.msra.mxu0 0.0
    %816 = vmatprep.subr.mxu0 0.0
    %817 = vmatpush1.msra.mxu0 0.0
    %818 = vmatprep.subr.mxu0 0.0
    %819 = vmatpush1.msra.mxu0 0.0
    %820 = vmatprep.subr.mxu0 0.0
    %821 = vmatpush1.msra.mxu0 0.0
    %822 = vmatprep.subr.mxu0 0.0
    %823 = vmatpush1.msra.mxu0 0.0
    %824 = vmatprep.subr.mxu0 0.0
    %825 = vmatpush1.msra.mxu0 0.0
    %826 = vmatprep.subr.mxu0 0.0
    %827 = vmatpush1.msra.mxu0 0.0
    %828 = vmatprep.subr.mxu0 0.0
    %829 = vmatpush1.msra.mxu0 0.0
    %830 = vmatprep.subr.mxu0 0.0
    %831 = vmatpush1.msra.mxu0 0.0
    %832 = vmatprep.subr.mxu0 0.0
    %833 = vmatpush1.msra.mxu0 0.0
    %834 = vmatprep.subr.mxu0 0.0
    %835 = vmatpush1.msra.mxu0 0.0
    %836 = vmatprep.subr.mxu0 0.0
    %837 = vmatpush1.msra.mxu0 0.0
    %838 = vmatprep.subr.mxu0 0.0
    %839 = vmatpush1.msra.mxu0 0.0
    %840 = vmatprep.subr.mxu0 0.0
    %841 = vmatpush1.msra.mxu0 0.0
    %842 = vmatprep.subr.mxu0 0.0
    %843 = vmatpush1.msra.mxu0 0.0
    %844 = vmatprep.subr.mxu0 0.0
    %845 = vmatpush1.msra.mxu0 0.0
    %846 = vmatprep.subr.mxu0 0.0
    %847 = vmatpush1.msra.mxu0 0.0
    %848 = vmatprep.subr.mxu0 0.0
    %849 = vmatpush1.msra.mxu0 0.0
    %850 = vmatprep.subr.mxu0 0.0
    %851 = vmatpush1.msra.mxu0 0.0
    %852 = vmatprep.subr.mxu0 0.0
    %853 = vmatpush1.msra.mxu0 0.0
    %854 = vmatprep.subr.mxu0 0.0
    %855 = vmatpush1.msra.mxu0 0.0
    %856 = vmatprep.mubr.f32.mxu0 0.0
    %857 = vmatmul.mubr.f32.gmra.mrb[0].mxu0 %v790
    %v858 = vpop.f32.mrb[0].mxu0
    %v859 = vadd.f32 0.0, %v858
    %v860 = vpop.f32.mrb[0].mxu0
    %861 = vdwg.mxu0
    %v862 = vadd.f32 %v789, %v859
    %v863 = vxor.u32 %v862, 2147483648
    %v864 = vmul.f32 %v863, 1.442695
    %v865 = vpow.pop %v864
    %v866 = vadd.f32 %v865, 1.0
    %v867 = vrcp.pop %v866
    %v868 = vmul.f32 1.0, %v867
    %v869 = vtanh.pop %v862
    %v870 = vmul.f32 %v868, %v777
    %872 = vrot.lane.b32.xlu0 %v869, 32
    %v873 = vpop.permute.xlu0 %872
    %v875 = vmul.f32 %v868, %v873
    %877 = vrot.lane.b32.xlu0 %v875, 32
    %v878 = vpop.permute.xlu0 %877
    %v880 = vadd.f32 %v870, %v878
    %v881 = vtanh.pop %v880
    %883 = vrot.lane.b32.xlu0 %v881, 32
    %v884 = vpop.permute.xlu0 %883
    %v886 = vmul.f32 %v868, %v884
    %888 = vrot.lane.b32.xlu0 %v886, 64
    %v889 = vpop.permute.xlu0 %888
    %891 = vst.msk [vmem:[#allocation3 + $0x28] sm:$0xff] %vm273, %v889
    %v892 = vld [vmem:[#allocation2 + $0x30] sm:$0xff]
    %v893 = vsel %vm273, %v889, 0
    %895 = vmatprep.subr.mxu0 0.0
    %896 = vmatpush1.msra.mxu0 %v268
    %897 = vmatprep.subr.mxu0 0.0
    %898 = vmatpush1.msra.mxu0 %v269
    %899 = vmatprep.subr.mxu0 0.0
    %900 = vmatpush1.msra.mxu0 %v270
    %901 = vmatprep.subr.mxu0 0.0
    %902 = vmatpush1.msra.mxu0 %v271
    %903 = vmatprep.subr.mxu0 0.0
    %904 = vmatpush1.msra.mxu0 0.0
    %905 = vmatprep.subr.mxu0 0.0
    %906 = vmatpush1.msra.mxu0 0.0
    %907 = vmatprep.subr.mxu0 0.0
    %908 = vmatpush1.msra.mxu0 0.0
    %909 = vmatprep.subr.mxu0 0.0
    %910 = vmatpush1.msra.mxu0 0.0
    %911 = vmatprep.subr.mxu0 0.0
    %912 = vmatpush1.msra.mxu0 0.0
    %913 = vmatprep.subr.mxu0 0.0
    %914 = vmatpush1.msra.mxu0 0.0
    %915 = vmatprep.subr.mxu0 0.0
    %916 = vmatpush1.msra.mxu0 0.0
    %917 = vmatprep.subr.mxu0 0.0
    %918 = vmatpush1.msra.mxu0 0.0
    %919 = vmatprep.subr.mxu0 0.0
    %920 = vmatpush1.msra.mxu0 0.0
    %921 = vmatprep.subr.mxu0 0.0
    %922 = vmatpush1.msra.mxu0 0.0
    %923 = vmatprep.subr.mxu0 0.0
    %924 = vmatpush1.msra.mxu0 0.0
    %925 = vmatprep.subr.mxu0 0.0
    %926 = vmatpush1.msra.mxu0 0.0
    %927 = vmatprep.subr.mxu0 0.0
    %928 = vmatpush1.msra.mxu0 0.0
    %929 = vmatprep.subr.mxu0 0.0
    %930 = vmatpush1.msra.mxu0 0.0
    %931 = vmatprep.subr.mxu0 0.0
    %932 = vmatpush1.msra.mxu0 0.0
    %933 = vmatprep.subr.mxu0 0.0
    %934 = vmatpush1.msra.mxu0 0.0
    %935 = vmatprep.subr.mxu0 0.0
    %936 = vmatpush1.msra.mxu0 0.0
    %937 = vmatprep.subr.mxu0 0.0
    %938 = vmatpush1.msra.mxu0 0.0
    %939 = vmatprep.subr.mxu0 0.0
    %940 = vmatpush1.msra.mxu0 0.0
    %941 = vmatprep.subr.mxu0 0.0
    %942 = vmatpush1.msra.mxu0 0.0
    %943 = vmatprep.subr.mxu0 0.0
    %944 = vmatpush1.msra.mxu0 0.0
    %945 = vmatprep.subr.mxu0 0.0
    %946 = vmatpush1.msra.mxu0 0.0
    %947 = vmatprep.subr.mxu0 0.0
    %948 = vmatpush1.msra.mxu0 0.0
    %949 = vmatprep.subr.mxu0 0.0
    %950 = vmatpush1.msra.mxu0 0.0
    %951 = vmatprep.subr.mxu0 0.0
    %952 = vmatpush1.msra.mxu0 0.0
    %953 = vmatprep.subr.mxu0 0.0
    %954 = vmatpush1.msra.mxu0 0.0
    %955 = vmatprep.subr.mxu0 0.0
    %956 = vmatpush1.msra.mxu0 0.0
    %957 = vmatprep.subr.mxu0 0.0
    %958 = vmatpush1.msra.mxu0 0.0
    %959 = vmatprep.mubr.f32.mxu0 0.0
    %960 = vmatmul.mubr.f32.gmra.mrb[0].mxu0 %v893
    %v961 = vpop.f32.mrb[0].mxu0
    %v962 = vadd.f32 0.0, %v961
    %v963 = vpop.f32.mrb[0].mxu0
    %964 = vdwg.mxu0
    %v965 = vadd.f32 %v892, %v962
    %v966 = vxor.u32 %v965, 2147483648
    %v967 = vmul.f32 %v966, 1.442695
    %v968 = vpow.pop %v967
    %v969 = vadd.f32 %v968, 1.0
    %v970 = vrcp.pop %v969
    %v971 = vmul.f32 1.0, %v970
    %v972 = vtanh.pop %v965
    %v973 = vmul.f32 %v971, %v880
    %975 = vrot.lane.b32.xlu0 %v972, 32
    %v976 = vpop.permute.xlu0 %975
    %v978 = vmul.f32 %v971, %v976
    %980 = vrot.lane.b32.xlu0 %v978, 32
    %v981 = vpop.permute.xlu0 %980
    %v983 = vadd.f32 %v973, %v981
    %v984 = vtanh.pop %v983
    %986 = vrot.lane.b32.xlu0 %v984, 32
    %v987 = vpop.permute.xlu0 %986
    %v989 = vmul.f32 %v971, %v987
    %991 = vrot.lane.b32.xlu0 %v989, 64
    %v992 = vpop.permute.xlu0 %991
    %994 = vst.msk [vmem:[#allocation3 + $0x30] sm:$0xff] %vm273, %v992
    %v995 = vld [vmem:[#allocation2 + $0x38] sm:$0xff]
    %v996 = vsel %vm273, %v992, 0
    %998 = vmatprep.subr.mxu0 0.0
    %999 = vmatpush1.msra.mxu0 %v268
    %1000 = vmatprep.subr.mxu0 0.0
    %1001 = vmatpush1.msra.mxu0 %v269
    %1002 = vmatprep.subr.mxu0 0.0
    %1003 = vmatpush1.msra.mxu0 %v270
    %1004 = vmatprep.subr.mxu0 0.0
    %1005 = vmatpush1.msra.mxu0 %v271
    %1006 = vmatprep.subr.mxu0 0.0
    %1007 = vmatpush1.msra.mxu0 0.0
    %1008 = vmatprep.subr.mxu0 0.0
    %1009 = vmatpush1.msra.mxu0 0.0
    %1010 = vmatprep.subr.mxu0 0.0
    %1011 = vmatpush1.msra.mxu0 0.0
    %1012 = vmatprep.subr.mxu0 0.0
    %1013 = vmatpush1.msra.mxu0 0.0
    %1014 = vmatprep.subr.mxu0 0.0
    %1015 = vmatpush1.msra.mxu0 0.0
    %1016 = vmatprep.subr.mxu0 0.0
    %1017 = vmatpush1.msra.mxu0 0.0
    %1018 = vmatprep.subr.mxu0 0.0
    %1019 = vmatpush1.msra.mxu0 0.0
    %1020 = vmatprep.subr.mxu0 0.0
    %1021 = vmatpush1.msra.mxu0 0.0
    %1022 = vmatprep.subr.mxu0 0.0
    %1023 = vmatpush1.msra.mxu0 0.0
    %1024 = vmatprep.subr.mxu0 0.0
    %1025 = vmatpush1.msra.mxu0 0.0
    %1026 = vmatprep.subr.mxu0 0.0
    %1027 = vmatpush1.msra.mxu0 0.0
    %1028 = vmatprep.subr.mxu0 0.0
    %1029 = vmatpush1.msra.mxu0 0.0
    %1030 = vmatprep.subr.mxu0 0.0
    %1031 = vmatpush1.msra.mxu0 0.0
    %1032 = vmatprep.subr.mxu0 0.0
    %1033 = vmatpush1.msra.mxu0 0.0
    %1034 = vmatprep.subr.mxu0 0.0
    %1035 = vmatpush1.msra.mxu0 0.0
    %1036 = vmatprep.subr.mxu0 0.0
    %1037 = vmatpush1.msra.mxu0 0.0
    %1038 = vmatprep.subr.mxu0 0.0
    %1039 = vmatpush1.msra.mxu0 0.0
    %1040 = vmatprep.subr.mxu0 0.0
    %1041 = vmatpush1.msra.mxu0 0.0
    %1042 = vmatprep.subr.mxu0 0.0
    %1043 = vmatpush1.msra.mxu0 0.0
    %1044 = vmatprep.subr.mxu0 0.0
    %1045 = vmatpush1.msra.mxu0 0.0
    %1046 = vmatprep.subr.mxu0 0.0
    %1047 = vmatpush1.msra.mxu0 0.0
    %1048 = vmatprep.subr.mxu0 0.0
    %1049 = vmatpush1.msra.mxu0 0.0
    %1050 = vmatprep.subr.mxu0 0.0
    %1051 = vmatpush1.msra.mxu0 0.0
    %1052 = vmatprep.subr.mxu0 0.0
    %1053 = vmatpush1.msra.mxu0 0.0
    %1054 = vmatprep.subr.mxu0 0.0
    %1055 = vmatpush1.msra.mxu0 0.0
    %1056 = vmatprep.subr.mxu0 0.0
    %1057 = vmatpush1.msra.mxu0 0.0
    %1058 = vmatprep.subr.mxu0 0.0
    %1059 = vmatpush1.msra.mxu0 0.0
    %1060 = vmatprep.subr.mxu0 0.0
    %1061 = vmatpush1.msra.mxu0 0.0
    %1062 = vmatprep.mubr.f32.mxu0 0.0
    %1063 = vmatmul.mubr.f32.gmra.mrb[0].mxu0 %v996
    %v1064 = vpop.f32.mrb[0].mxu0
    %v1065 = vadd.f32 0.0, %v1064
    %v1066 = vpop.f32.mrb[0].mxu0
    %1067 = vdwg.mxu0
    %v1068 = vadd.f32 %v995, %v1065
    %v1069 = vxor.u32 %v1068, 2147483648
    %v1070 = vmul.f32 %v1069, 1.442695
    %v1071 = vpow.pop %v1070
    %v1072 = vadd.f32 %v1071, 1.0
    %v1073 = vrcp.pop %v1072
    %v1074 = vmul.f32 1.0, %v1073
    %v1075 = vtanh.pop %v1068
    %v1076 = vmul.f32 %v1074, %v983
    %1078 = vrot.lane.b32.xlu0 %v1075, 32
    %v1079 = vpop.permute.xlu0 %1078
    %v1081 = vmul.f32 %v1074, %v1079
    %1083 = vrot.lane.b32.xlu0 %v1081, 32
    %v1084 = vpop.permute.xlu0 %1083
    %v1086 = vadd.f32 %v1076, %v1084
    %v1087 = vtanh.pop %v1086
    %1089 = vrot.lane.b32.xlu0 %v1087, 32
    %v1090 = vpop.permute.xlu0 %1089
    %v1092 = vmul.f32 %v1074, %v1090
    %1094 = vrot.lane.b32.xlu0 %v1092, 64
    %v1095 = vpop.permute.xlu0 %1094
    %1097 = vst.msk [vmem:[#allocation3 + $0x38] sm:$0xff] %vm273, %v1095
    %v1098 = vld [vmem:[#allocation3] sm:$0xff]
    %v1099 = vld [vmem:[#allocation3 + $0x8] sm:$0xff]
    %v1100 = vld [vmem:[#allocation3 + $0x10] sm:$0xff]
    %v1101 = vld [vmem:[#allocation3 + $0x18] sm:$0xff]
    %v1102 = vld [vmem:[#allocation3 + $0x20] sm:$0xff]
    %v1103 = vld [vmem:[#allocation3 + $0x28] sm:$0xff]
    %v1104 = vld [vmem:[#allocation3 + $0x30] sm:$0xff]
    %v1105 = vld [vmem:[#allocation3 + $0x38] sm:$0xff]
    %v1106 = vld [vmem:[%s4] sm:$0xff]
    %v1107 = vld [vmem:[%s4 + $0x8] sm:$0xff]
    %v1108 = vld [vmem:[%s4 + $0x10] sm:$0xff]
    %v1109 = vld [vmem:[%s4 + $0x18] sm:$0xff]
    %v1110 = vld [vmem:[%s6] sm:$0x1]
    %v1112 = vlaneseq
    %v1113 = vshrl.u32 %v1112, 7
    %v1114 = vsub.s32 0, %v1113
    %v1115 = vrot.slane %v1110, %v1114
    %v1118 = vsel %vm273, %v1098, 0
    %v1121 = vsel %vm273, %v1099, 0
    %v1124 = vsel %vm273, %v1100, 0
    %v1127 = vsel %vm273, %v1101, 0
    %v1130 = vsel %vm273, %v1102, 0
    %v1133 = vsel %vm273, %v1103, 0
    %v1136 = vsel %vm273, %v1104, 0
    %v1139 = vsel %vm273, %v1105, 0
    %1141 = vmatprep.subr.mxu0 0.0
    %1142 = vmatpush1.msra.mxu0 %v1106
    %1143 = vmatprep.subr.mxu0 0.0
    %1144 = vmatpush1.msra.mxu0 %v1107
    %1145 = vmatprep.subr.mxu0 0.0
    %1146 = vmatpush1.msra.mxu0 %v1108
    %1147 = vmatprep.subr.mxu0 0.0
    %1148 = vmatpush1.msra.mxu0 %v1109
    %1149 = vmatprep.subr.mxu0 0.0
    %1150 = vmatpush1.msra.mxu0 0.0
    %1151 = vmatprep.subr.mxu0 0.0
    %1152 = vmatpush1.msra.mxu0 0.0
    %1153 = vmatprep.subr.mxu0 0.0
    %1154 = vmatpush1.msra.mxu0 0.0
    %1155 = vmatprep.subr.mxu0 0.0
    %1156 = vmatpush1.msra.mxu0 0.0
    %1157 = vmatprep.subr.mxu0 0.0
    %1158 = vmatpush1.msra.mxu0 0.0
    %1159 = vmatprep.subr.mxu0 0.0
    %1160 = vmatpush1.msra.mxu0 0.0
    %1161 = vmatprep.subr.mxu0 0.0
    %1162 = vmatpush1.msra.mxu0 0.0
    %1163 = vmatprep.subr.mxu0 0.0
    %1164 = vmatpush1.msra.mxu0 0.0
    %1165 = vmatprep.subr.mxu0 0.0
    %1166 = vmatpush1.msra.mxu0 0.0
    %1167 = vmatprep.subr.mxu0 0.0
    %1168 = vmatpush1.msra.mxu0 0.0
    %1169 = vmatprep.subr.mxu0 0.0
    %1170 = vmatpush1.msra.mxu0 0.0
    %1171 = vmatprep.subr.mxu0 0.0
    %1172 = vmatpush1.msra.mxu0 0.0
    %1173 = vmatprep.subr.mxu0 0.0
    %1174 = vmatpush1.msra.mxu0 0.0
    %1175 = vmatprep.subr.mxu0 0.0
    %1176 = vmatpush1.msra.mxu0 0.0
    %1177 = vmatprep.subr.mxu0 0.0
    %1178 = vmatpush1.msra.mxu0 0.0
    %1179 = vmatprep.subr.mxu0 0.0
    %1180 = vmatpush1.msra.mxu0 0.0
    %1181 = vmatprep.subr.mxu0 0.0
    %1182 = vmatpush1.msra.mxu0 0.0
    %1183 = vmatprep.subr.mxu0 0.0
    %1184 = vmatpush1.msra.mxu0 0.0
    %1185 = vmatprep.subr.mxu0 0.0
    %1186 = vmatpush1.msra.mxu0 0.0
    %1187 = vmatprep.subr.mxu0 0.0
    %1188 = vmatpush1.msra.mxu0 0.0
    %1189 = vmatprep.subr.mxu0 0.0
    %1190 = vmatpush1.msra.mxu0 0.0
    %1191 = vmatprep.subr.mxu0 0.0
    %1192 = vmatpush1.msra.mxu0 0.0
    %1193 = vmatprep.subr.mxu0 0.0
    %1194 = vmatpush1.msra.mxu0 0.0
    %1195 = vmatprep.subr.mxu0 0.0
    %1196 = vmatpush1.msra.mxu0 0.0
    %1197 = vmatprep.subr.mxu0 0.0
    %1198 = vmatpush1.msra.mxu0 0.0
    %1199 = vmatprep.subr.mxu0 0.0
    %1200 = vmatpush1.msra.mxu0 0.0
    %1201 = vmatprep.subr.mxu0 0.0
    %1202 = vmatpush1.msra.mxu0 0.0
    %1203 = vmatprep.subr.mxu0 0.0
    %1204 = vmatpush1.msra.mxu0 0.0
    %1205 = vmatprep.mubr.f32.mxu0 0.0
    %1206 = vmatmul.mubr.f32.gmra.mrb[0].mxu0 %v1118
    %v1207 = vpop.f32.mrb[0].mxu0
    %v1208 = vadd.f32 %v1115, %v1207
    %v1209 = vpop.f32.mrb[0].mxu0
    %1210 = vmatprep.mubr.f32.mxu0 0.0
    %1211 = vmatmul.mubr.f32.gmra.mrb[0].mxu0 %v1121
    %v1212 = vpop.f32.mrb[0].mxu0
    %v1213 = vadd.f32 %v1115, %v1212
    %v1214 = vpop.f32.mrb[0].mxu0
    %1215 = vmatprep.mubr.f32.mxu0 0.0
    %1216 = vmatmul.mubr.f32.gmra.mrb[0].mxu0 %v1124
    %v1217 = vpop.f32.mrb[0].mxu0
    %v1218 = vadd.f32 %v1115, %v1217
    %v1219 = vpop.f32.mrb[0].mxu0
    %1220 = vmatprep.mubr.f32.mxu0 0.0
    %1221 = vmatmul.mubr.f32.gmra.mrb[0].mxu0 %v1127
    %v1222 = vpop.f32.mrb[0].mxu0
    %v1223 = vadd.f32 %v1115, %v1222
    %v1224 = vpop.f32.mrb[0].mxu0
    %1225 = vmatprep.mubr.f32.mxu0 0.0
    %1226 = vmatmul.mubr.f32.gmra.mrb[0].mxu0 %v1130
    %v1227 = vpop.f32.mrb[0].mxu0
    %v1228 = vadd.f32 %v1115, %v1227
    %v1229 = vpop.f32.mrb[0].mxu0
    %1230 = vmatprep.mubr.f32.mxu0 0.0
    %1231 = vmatmul.mubr.f32.gmra.mrb[0].mxu0 %v1133
    %v1232 = vpop.f32.mrb[0].mxu0
    %v1233 = vadd.f32 %v1115, %v1232
    %v1234 = vpop.f32.mrb[0].mxu0
    %1235 = vmatprep.mubr.f32.mxu0 0.0
    %1236 = vmatmul.mubr.f32.gmra.mrb[0].mxu0 %v1136
    %v1237 = vpop.f32.mrb[0].mxu0
    %v1238 = vadd.f32 %v1115, %v1237
    %v1239 = vpop.f32.mrb[0].mxu0
    %1240 = vmatprep.mubr.f32.mxu0 0.0
    %1241 = vmatmul.mubr.f32.gmra.mrb[0].mxu0 %v1139
    %v1242 = vpop.f32.mrb[0].mxu0
    %v1243 = vadd.f32 %v1115, %v1242
    %v1244 = vpop.f32.mrb[0].mxu0
    %1245 = vdwg.mxu0
    %1246 = vst [vmem:[#allocation2] sm:$0xff] %v1208
    %1247 = vst [vmem:[#allocation2 + $0x8] sm:$0xff] %v1213
    %1248 = vst [vmem:[#allocation2 + $0x10] sm:$0xff] %v1218
    %1249 = vst [vmem:[#allocation2 + $0x18] sm:$0xff] %v1223
    %1250 = vst [vmem:[#allocation2 + $0x20] sm:$0xff] %v1228
    %1251 = vst [vmem:[#allocation2 + $0x28] sm:$0xff] %v1233
    %1252 = vst [vmem:[#allocation2 + $0x30] sm:$0xff] %v1238
    %1253 = vst [vmem:[#allocation2 + $0x38] sm:$0xff] %v1243
    %v1254 = vld [vmem:[#allocation7] sm:$0xff]
    %v1255 = vld [vmem:[#allocation7 + $0x8] sm:$0xff]
    %v1256 = vld [vmem:[#allocation7 + $0x10] sm:$0xff]
    %v1257 = vld [vmem:[#allocation7 + $0x18] sm:$0xff]
    %v1258 = vld [vmem:[#allocation2] sm:$0xff]
    %1259 = vmatprep.subr.mxu0 0.0
    %1260 = vmatpush1.msra.mxu0 %v1254
    %1261 = vmatprep.subr.mxu0 0.0
    %1262 = vmatpush1.msra.mxu0 %v1255
    %1263 = vmatprep.subr.mxu0 0.0
    %1264 = vmatpush1.msra.mxu0 %v1256
    %1265 = vmatprep.subr.mxu0 0.0
    %1266 = vmatpush1.msra.mxu0 %v1257
    %1267 = vmatprep.subr.mxu0 0.0
    %1268 = vmatpush1.msra.mxu0 0.0
    %1269 = vmatprep.subr.mxu0 0.0
    %1270 = vmatpush1.msra.mxu0 0.0
    %1271 = vmatprep.subr.mxu0 0.0
    %1272 = vmatpush1.msra.mxu0 0.0
    %1273 = vmatprep.subr.mxu0 0.0
    %1274 = vmatpush1.msra.mxu0 0.0
    %1275 = vmatprep.subr.mxu0 0.0
    %1276 = vmatpush1.msra.mxu0 0.0
    %1277 = vmatprep.subr.mxu0 0.0
    %1278 = vmatpush1.msra.mxu0 0.0
    %1279 = vmatprep.subr.mxu0 0.0
    %1280 = vmatpush1.msra.mxu0 0.0
    %1281 = vmatprep.subr.mxu0 0.0
    %1282 = vmatpush1.msra.mxu0 0.0
    %1283 = vmatprep.subr.mxu0 0.0
    %1284 = vmatpush1.msra.mxu0 0.0
    %1285 = vmatprep.subr.mxu0 0.0
    %1286 = vmatpush1.msra.mxu0 0.0
    %1287 = vmatprep.subr.mxu0 0.0
    %1288 = vmatpush1.msra.mxu0 0.0
    %1289 = vmatprep.subr.mxu0 0.0
    %1290 = vmatpush1.msra.mxu0 0.0
    %1291 = vmatprep.subr.mxu0 0.0
    %1292 = vmatpush1.msra.mxu0 0.0
    %1293 = vmatprep.subr.mxu0 0.0
    %1294 = vmatpush1.msra.mxu0 0.0
    %1295 = vmatprep.subr.mxu0 0.0
    %1296 = vmatpush1.msra.mxu0 0.0
    %1297 = vmatprep.subr.mxu0 0.0
    %1298 = vmatpush1.msra.mxu0 0.0
    %1299 = vmatprep.subr.mxu0 0.0
    %1300 = vmatpush1.msra.mxu0 0.0
    %1301 = vmatprep.subr.mxu0 0.0
    %1302 = vmatpush1.msra.mxu0 0.0
    %1303 = vmatprep.subr.mxu0 0.0
    %1304 = vmatpush1.msra.mxu0 0.0
    %1305 = vmatprep.subr.mxu0 0.0
    %1306 = vmatpush1.msra.mxu0 0.0
    %1307 = vmatprep.subr.mxu0 0.0
    %1308 = vmatpush1.msra.mxu0 0.0
    %1309 = vmatprep.subr.mxu0 0.0
    %1310 = vmatpush1.msra.mxu0 0.0
    %1311 = vmatprep.subr.mxu0 0.0
    %1312 = vmatpush1.msra.mxu0 0.0
    %1313 = vmatprep.subr.mxu0 0.0
    %1314 = vmatpush1.msra.mxu0 0.0
    %1315 = vmatprep.subr.mxu0 0.0
    %1316 = vmatpush1.msra.mxu0 0.0
    %1317 = vmatprep.subr.mxu0 0.0
    %1318 = vmatpush1.msra.mxu0 0.0
    %1319 = vmatprep.subr.mxu0 0.0
    %1320 = vmatpush1.msra.mxu0 0.0
    %1321 = vmatprep.subr.mxu0 0.0
    %1322 = vmatpush1.msra.mxu0 0.0
    %1323 = vmatprep.mubr.f32.mxu0 0.0
    %1324 = vmatmul.mubr.f32.gmra.mrb[0].mxu0 %v275
    %v1325 = vpop.f32.mrb[0].mxu0
    %v1326 = vadd.f32 0.0, %v1325
    %v1327 = vpop.f32.mrb[0].mxu0
    %1328 = vdwg.mxu0
    %v1329 = vadd.f32 %v1258, %v1326
    %v1330 = vxor.u32 %v1329, 2147483648
    %v1331 = vmul.f32 %v1330, 1.442695
    %v1332 = vpow.pop %v1331
    %v1333 = vadd.f32 %v1332, 1.0
    %v1334 = vrcp.pop %v1333
    %v1335 = vmul.f32 1.0, %v1334
    %v1336 = vtanh.pop %v1329
    %v1337 = vmul.f32 %v1335, 0.0
    %1339 = vrot.lane.b32.xlu0 %v1336, 32
    %v1340 = vpop.permute.xlu0 %1339
    %v1342 = vmul.f32 %v1335, %v1340
    %1344 = vrot.lane.b32.xlu0 %v1342, 32
    %v1345 = vpop.permute.xlu0 %1344
    %v1347 = vadd.f32 %v1337, %v1345
    %v1348 = vtanh.pop %v1347
    %1350 = vrot.lane.b32.xlu0 %v1348, 32
    %v1351 = vpop.permute.xlu0 %1350
    %v1353 = vmul.f32 %v1335, %v1351
    %v1354 = vld [vmem:[#allocation2 + $0x8] sm:$0xff]
    %1356 = vrot.lane.b32.xlu0 %v1353, 64
    %v1357 = vpop.permute.xlu0 %1356
    %v1358 = vsel %vm273, %v1357, 0
    %1360 = vmatprep.subr.mxu0 0.0
    %1361 = vmatpush1.msra.mxu0 %v1254
    %1362 = vmatprep.subr.mxu0 0.0
    %1363 = vmatpush1.msra.mxu0 %v1255
    %1364 = vmatprep.subr.mxu0 0.0
    %1365 = vmatpush1.msra.mxu0 %v1256
    %1366 = vmatprep.subr.mxu0 0.0
    %1367 = vmatpush1.msra.mxu0 %v1257
    %1368 = vmatprep.subr.mxu0 0.0
    %1369 = vmatpush1.msra.mxu0 0.0
    %1370 = vmatprep.subr.mxu0 0.0
    %1371 = vmatpush1.msra.mxu0 0.0
    %1372 = vmatprep.subr.mxu0 0.0
    %1373 = vmatpush1.msra.mxu0 0.0
    %1374 = vmatprep.subr.mxu0 0.0
    %1375 = vmatpush1.msra.mxu0 0.0
    %1376 = vmatprep.subr.mxu0 0.0
    %1377 = vmatpush1.msra.mxu0 0.0
    %1378 = vmatprep.subr.mxu0 0.0
    %1379 = vmatpush1.msra.mxu0 0.0
    %1380 = vmatprep.subr.mxu0 0.0
    %1381 = vmatpush1.msra.mxu0 0.0
    %1382 = vmatprep.subr.mxu0 0.0
    %1383 = vmatpush1.msra.mxu0 0.0
    %1384 = vmatprep.subr.mxu0 0.0
    %1385 = vmatpush1.msra.mxu0 0.0
    %1386 = vmatprep.subr.mxu0 0.0
    %1387 = vmatpush1.msra.mxu0 0.0
    %1388 = vmatprep.subr.mxu0 0.0
    %1389 = vmatpush1.msra.mxu0 0.0
    %1390 = vmatprep.subr.mxu0 0.0
    %1391 = vmatpush1.msra.mxu0 0.0
    %1392 = vmatprep.subr.mxu0 0.0
    %1393 = vmatpush1.msra.mxu0 0.0
    %1394 = vmatprep.subr.mxu0 0.0
    %1395 = vmatpush1.msra.mxu0 0.0
    %1396 = vmatprep.subr.mxu0 0.0
    %1397 = vmatpush1.msra.mxu0 0.0
    %1398 = vmatprep.subr.mxu0 0.0
    %1399 = vmatpush1.msra.mxu0 0.0
    %1400 = vmatprep.subr.mxu0 0.0
    %1401 = vmatpush1.msra.mxu0 0.0
    %1402 = vmatprep.subr.mxu0 0.0
    %1403 = vmatpush1.msra.mxu0 0.0
    %1404 = vmatprep.subr.mxu0 0.0
    %1405 = vmatpush1.msra.mxu0 0.0
    %1406 = vmatprep.subr.mxu0 0.0
    %1407 = vmatpush1.msra.mxu0 0.0
    %1408 = vmatprep.subr.mxu0 0.0
    %1409 = vmatpush1.msra.mxu0 0.0
    %1410 = vmatprep.subr.mxu0 0.0
    %1411 = vmatpush1.msra.mxu0 0.0
    %1412 = vmatprep.subr.mxu0 0.0
    %1413 = vmatpush1.msra.mxu0 0.0
    %1414 = vmatprep.subr.mxu0 0.0
    %1415 = vmatpush1.msra.mxu0 0.0
    %1416 = vmatprep.subr.mxu0 0.0
    %1417 = vmatpush1.msra.mxu0 0.0
    %1418 = vmatprep.subr.mxu0 0.0
    %1419 = vmatpush1.msra.mxu0 0.0
    %1420 = vmatprep.subr.mxu0 0.0
    %1421 = vmatpush1.msra.mxu0 0.0
    %1422 = vmatprep.subr.mxu0 0.0
    %1423 = vmatpush1.msra.mxu0 0.0
    %1424 = vmatprep.mubr.f32.mxu0 0.0
    %1425 = vmatmul.mubr.f32.gmra.mrb[0].mxu0 %v1358
    %v1426 = vpop.f32.mrb[0].mxu0
    %v1427 = vadd.f32 0.0, %v1426
    %v1428 = vpop.f32.mrb[0].mxu0
    %1429 = vdwg.mxu0
    %v1430 = vadd.f32 %v1354, %v1427
    %v1431 = vxor.u32 %v1430, 2147483648
    %v1432 = vmul.f32 %v1431, 1.442695
    %v1433 = vpow.pop %v1432
    %v1434 = vadd.f32 %v1433, 1.0
    %v1435 = vrcp.pop %v1434
    %v1436 = vmul.f32 1.0, %v1435
    %v1437 = vtanh.pop %v1430
    %v1438 = vmul.f32 %v1436, %v1347
    %1440 = vrot.lane.b32.xlu0 %v1437, 32
    %v1441 = vpop.permute.xlu0 %1440
    %v1443 = vmul.f32 %v1436, %v1441
    %1445 = vrot.lane.b32.xlu0 %v1443, 32
    %v1446 = vpop.permute.xlu0 %1445
    %v1448 = vadd.f32 %v1438, %v1446
    %v1449 = vtanh.pop %v1448
    %1451 = vrot.lane.b32.xlu0 %v1449, 32
    %v1452 = vpop.permute.xlu0 %1451
    %v1454 = vmul.f32 %v1436, %v1452
    %v1455 = vld [vmem:[#allocation2 + $0x10] sm:$0xff]
    %1457 = vrot.lane.b32.xlu0 %v1454, 64
    %v1458 = vpop.permute.xlu0 %1457
    %v1459 = vsel %vm273, %v1458, 0
    %1461 = vmatprep.subr.mxu0 0.0
    %1462 = vmatpush1.msra.mxu0 %v1254
    %1463 = vmatprep.subr.mxu0 0.0
    %1464 = vmatpush1.msra.mxu0 %v1255
    %1465 = vmatprep.subr.mxu0 0.0
    %1466 = vmatpush1.msra.mxu0 %v1256
    %1467 = vmatprep.subr.mxu0 0.0
    %1468 = vmatpush1.msra.mxu0 %v1257
    %1469 = vmatprep.subr.mxu0 0.0
    %1470 = vmatpush1.msra.mxu0 0.0
    %1471 = vmatprep.subr.mxu0 0.0
    %1472 = vmatpush1.msra.mxu0 0.0
    %1473 = vmatprep.subr.mxu0 0.0
    %1474 = vmatpush1.msra.mxu0 0.0
    %1475 = vmatprep.subr.mxu0 0.0
    %1476 = vmatpush1.msra.mxu0 0.0
    %1477 = vmatprep.subr.mxu0 0.0
    %1478 = vmatpush1.msra.mxu0 0.0
    %1479 = vmatprep.subr.mxu0 0.0
    %1480 = vmatpush1.msra.mxu0 0.0
    %1481 = vmatprep.subr.mxu0 0.0
    %1482 = vmatpush1.msra.mxu0 0.0
    %1483 = vmatprep.subr.mxu0 0.0
    %1484 = vmatpush1.msra.mxu0 0.0
    %1485 = vmatprep.subr.mxu0 0.0
    %1486 = vmatpush1.msra.mxu0 0.0
    %1487 = vmatprep.subr.mxu0 0.0
    %1488 = vmatpush1.msra.mxu0 0.0
    %1489 = vmatprep.subr.mxu0 0.0
    %1490 = vmatpush1.msra.mxu0 0.0
    %1491 = vmatprep.subr.mxu0 0.0
    %1492 = vmatpush1.msra.mxu0 0.0
    %1493 = vmatprep.subr.mxu0 0.0
    %1494 = vmatpush1.msra.mxu0 0.0
    %1495 = vmatprep.subr.mxu0 0.0
    %1496 = vmatpush1.msra.mxu0 0.0
    %1497 = vmatprep.subr.mxu0 0.0
    %1498 = vmatpush1.msra.mxu0 0.0
    %1499 = vmatprep.subr.mxu0 0.0
    %1500 = vmatpush1.msra.mxu0 0.0
    %1501 = vmatprep.subr.mxu0 0.0
    %1502 = vmatpush1.msra.mxu0 0.0
    %1503 = vmatprep.subr.mxu0 0.0
    %1504 = vmatpush1.msra.mxu0 0.0
    %1505 = vmatprep.subr.mxu0 0.0
    %1506 = vmatpush1.msra.mxu0 0.0
    %1507 = vmatprep.subr.mxu0 0.0
    %1508 = vmatpush1.msra.mxu0 0.0
    %1509 = vmatprep.subr.mxu0 0.0
    %1510 = vmatpush1.msra.mxu0 0.0
    %1511 = vmatprep.subr.mxu0 0.0
    %1512 = vmatpush1.msra.mxu0 0.0
    %1513 = vmatprep.subr.mxu0 0.0
    %1514 = vmatpush1.msra.mxu0 0.0
    %1515 = vmatprep.subr.mxu0 0.0
    %1516 = vmatpush1.msra.mxu0 0.0
    %1517 = vmatprep.subr.mxu0 0.0
    %1518 = vmatpush1.msra.mxu0 0.0
    %1519 = vmatprep.subr.mxu0 0.0
    %1520 = vmatpush1.msra.mxu0 0.0
    %1521 = vmatprep.subr.mxu0 0.0
    %1522 = vmatpush1.msra.mxu0 0.0
    %1523 = vmatprep.subr.mxu0 0.0
    %1524 = vmatpush1.msra.mxu0 0.0
    %1525 = vmatprep.mubr.f32.mxu0 0.0
    %1526 = vmatmul.mubr.f32.gmra.mrb[0].mxu0 %v1459
    %v1527 = vpop.f32.mrb[0].mxu0
    %v1528 = vadd.f32 0.0, %v1527
    %v1529 = vpop.f32.mrb[0].mxu0
    %1530 = vdwg.mxu0
    %v1531 = vadd.f32 %v1455, %v1528
    %v1532 = vxor.u32 %v1531, 2147483648
    %v1533 = vmul.f32 %v1532, 1.442695
    %v1534 = vpow.pop %v1533
    %v1535 = vadd.f32 %v1534, 1.0
    %v1536 = vrcp.pop %v1535
    %v1537 = vmul.f32 1.0, %v1536
    %v1538 = vtanh.pop %v1531
    %v1539 = vmul.f32 %v1537, %v1448
    %1541 = vrot.lane.b32.xlu0 %v1538, 32
    %v1542 = vpop.permute.xlu0 %1541
    %v1544 = vmul.f32 %v1537, %v1542
    %1546 = vrot.lane.b32.xlu0 %v1544, 32
    %v1547 = vpop.permute.xlu0 %1546
    %v1549 = vadd.f32 %v1539, %v1547
    %v1550 = vtanh.pop %v1549
    %1552 = vrot.lane.b32.xlu0 %v1550, 32
    %v1553 = vpop.permute.xlu0 %1552
    %v1555 = vmul.f32 %v1537, %v1553
    %v1556 = vld [vmem:[#allocation2 + $0x18] sm:$0xff]
    %1558 = vrot.lane.b32.xlu0 %v1555, 64
    %v1559 = vpop.permute.xlu0 %1558
    %v1560 = vsel %vm273, %v1559, 0
    %1562 = vmatprep.subr.mxu0 0.0
    %1563 = vmatpush1.msra.mxu0 %v1254
    %1564 = vmatprep.subr.mxu0 0.0
    %1565 = vmatpush1.msra.mxu0 %v1255
    %1566 = vmatprep.subr.mxu0 0.0
    %1567 = vmatpush1.msra.mxu0 %v1256
    %1568 = vmatprep.subr.mxu0 0.0
    %1569 = vmatpush1.msra.mxu0 %v1257
    %1570 = vmatprep.subr.mxu0 0.0
    %1571 = vmatpush1.msra.mxu0 0.0
    %1572 = vmatprep.subr.mxu0 0.0
    %1573 = vmatpush1.msra.mxu0 0.0
    %1574 = vmatprep.subr.mxu0 0.0
    %1575 = vmatpush1.msra.mxu0 0.0
    %1576 = vmatprep.subr.mxu0 0.0
    %1577 = vmatpush1.msra.mxu0 0.0
    %1578 = vmatprep.subr.mxu0 0.0
    %1579 = vmatpush1.msra.mxu0 0.0
    %1580 = vmatprep.subr.mxu0 0.0
    %1581 = vmatpush1.msra.mxu0 0.0
    %1582 = vmatprep.subr.mxu0 0.0
    %1583 = vmatpush1.msra.mxu0 0.0
    %1584 = vmatprep.subr.mxu0 0.0
    %1585 = vmatpush1.msra.mxu0 0.0
    %1586 = vmatprep.subr.mxu0 0.0
    %1587 = vmatpush1.msra.mxu0 0.0
    %1588 = vmatprep.subr.mxu0 0.0
    %1589 = vmatpush1.msra.mxu0 0.0
    %1590 = vmatprep.subr.mxu0 0.0
    %1591 = vmatpush1.msra.mxu0 0.0
    %1592 = vmatprep.subr.mxu0 0.0
    %1593 = vmatpush1.msra.mxu0 0.0
    %1594 = vmatprep.subr.mxu0 0.0
    %1595 = vmatpush1.msra.mxu0 0.0
    %1596 = vmatprep.subr.mxu0 0.0
    %1597 = vmatpush1.msra.mxu0 0.0
    %1598 = vmatprep.subr.mxu0 0.0
    %1599 = vmatpush1.msra.mxu0 0.0
    %1600 = vmatprep.subr.mxu0 0.0
    %1601 = vmatpush1.msra.mxu0 0.0
    %1602 = vmatprep.subr.mxu0 0.0
    %1603 = vmatpush1.msra.mxu0 0.0
    %1604 = vmatprep.subr.mxu0 0.0
    %1605 = vmatpush1.msra.mxu0 0.0
    %1606 = vmatprep.subr.mxu0 0.0
    %1607 = vmatpush1.msra.mxu0 0.0
    %1608 = vmatprep.subr.mxu0 0.0
    %1609 = vmatpush1.msra.mxu0 0.0
    %1610 = vmatprep.subr.mxu0 0.0
    %1611 = vmatpush1.msra.mxu0 0.0
    %1612 = vmatprep.subr.mxu0 0.0
    %1613 = vmatpush1.msra.mxu0 0.0
    %1614 = vmatprep.subr.mxu0 0.0
    %1615 = vmatpush1.msra.mxu0 0.0
    %1616 = vmatprep.subr.mxu0 0.0
    %1617 = vmatpush1.msra.mxu0 0.0
    %1618 = vmatprep.subr.mxu0 0.0
    %1619 = vmatpush1.msra.mxu0 0.0
    %1620 = vmatprep.subr.mxu0 0.0
    %1621 = vmatpush1.msra.mxu0 0.0
    %1622 = vmatprep.subr.mxu0 0.0
    %1623 = vmatpush1.msra.mxu0 0.0
    %1624 = vmatprep.subr.mxu0 0.0
    %1625 = vmatpush1.msra.mxu0 0.0
    %1626 = vmatprep.mubr.f32.mxu0 0.0
    %1627 = vmatmul.mubr.f32.gmra.mrb[0].mxu0 %v1560
    %v1628 = vpop.f32.mrb[0].mxu0
    %v1629 = vadd.f32 0.0, %v1628
    %v1630 = vpop.f32.mrb[0].mxu0
    %1631 = vdwg.mxu0
    %v1632 = vadd.f32 %v1556, %v1629
    %v1633 = vxor.u32 %v1632, 2147483648
    %v1634 = vmul.f32 %v1633, 1.442695
    %v1635 = vpow.pop %v1634
    %v1636 = vadd.f32 %v1635, 1.0
    %v1637 = vrcp.pop %v1636
    %v1638 = vmul.f32 1.0, %v1637
    %v1639 = vtanh.pop %v1632
    %v1640 = vmul.f32 %v1638, %v1549
    %1642 = vrot.lane.b32.xlu0 %v1639, 32
    %v1643 = vpop.permute.xlu0 %1642
    %v1645 = vmul.f32 %v1638, %v1643
    %1647 = vrot.lane.b32.xlu0 %v1645, 32
    %v1648 = vpop.permute.xlu0 %1647
    %v1650 = vadd.f32 %v1640, %v1648
    %v1651 = vtanh.pop %v1650
    %1653 = vrot.lane.b32.xlu0 %v1651, 32
    %v1654 = vpop.permute.xlu0 %1653
    %v1656 = vmul.f32 %v1638, %v1654
    %v1657 = vld [vmem:[#allocation2 + $0x20] sm:$0xff]
    %1659 = vrot.lane.b32.xlu0 %v1656, 64
    %v1660 = vpop.permute.xlu0 %1659
    %v1661 = vsel %vm273, %v1660, 0
    %1663 = vmatprep.subr.mxu0 0.0
    %1664 = vmatpush1.msra.mxu0 %v1254
    %1665 = vmatprep.subr.mxu0 0.0
    %1666 = vmatpush1.msra.mxu0 %v1255
    %1667 = vmatprep.subr.mxu0 0.0
    %1668 = vmatpush1.msra.mxu0 %v1256
    %1669 = vmatprep.subr.mxu0 0.0
    %1670 = vmatpush1.msra.mxu0 %v1257
    %1671 = vmatprep.subr.mxu0 0.0
    %1672 = vmatpush1.msra.mxu0 0.0
    %1673 = vmatprep.subr.mxu0 0.0
    %1674 = vmatpush1.msra.mxu0 0.0
    %1675 = vmatprep.subr.mxu0 0.0
    %1676 = vmatpush1.msra.mxu0 0.0
    %1677 = vmatprep.subr.mxu0 0.0
    %1678 = vmatpush1.msra.mxu0 0.0
    %1679 = vmatprep.subr.mxu0 0.0
    %1680 = vmatpush1.msra.mxu0 0.0
    %1681 = vmatprep.subr.mxu0 0.0
    %1682 = vmatpush1.msra.mxu0 0.0
    %1683 = vmatprep.subr.mxu0 0.0
    %1684 = vmatpush1.msra.mxu0 0.0
    %1685 = vmatprep.subr.mxu0 0.0
    %1686 = vmatpush1.msra.mxu0 0.0
    %1687 = vmatprep.subr.mxu0 0.0
    %1688 = vmatpush1.msra.mxu0 0.0
    %1689 = vmatprep.subr.mxu0 0.0
    %1690 = vmatpush1.msra.mxu0 0.0
    %1691 = vmatprep.subr.mxu0 0.0
    %1692 = vmatpush1.msra.mxu0 0.0
    %1693 = vmatprep.subr.mxu0 0.0
    %1694 = vmatpush1.msra.mxu0 0.0
    %1695 = vmatprep.subr.mxu0 0.0
    %1696 = vmatpush1.msra.mxu0 0.0
    %1697 = vmatprep.subr.mxu0 0.0
    %1698 = vmatpush1.msra.mxu0 0.0
    %1699 = vmatprep.subr.mxu0 0.0
    %1700 = vmatpush1.msra.mxu0 0.0
    %1701 = vmatprep.subr.mxu0 0.0
    %1702 = vmatpush1.msra.mxu0 0.0
    %1703 = vmatprep.subr.mxu0 0.0
    %1704 = vmatpush1.msra.mxu0 0.0
    %1705 = vmatprep.subr.mxu0 0.0
    %1706 = vmatpush1.msra.mxu0 0.0
    %1707 = vmatprep.subr.mxu0 0.0
    %1708 = vmatpush1.msra.mxu0 0.0
    %1709 = vmatprep.subr.mxu0 0.0
    %1710 = vmatpush1.msra.mxu0 0.0
    %1711 = vmatprep.subr.mxu0 0.0
    %1712 = vmatpush1.msra.mxu0 0.0
    %1713 = vmatprep.subr.mxu0 0.0
    %1714 = vmatpush1.msra.mxu0 0.0
    %1715 = vmatprep.subr.mxu0 0.0
    %1716 = vmatpush1.msra.mxu0 0.0
    %1717 = vmatprep.subr.mxu0 0.0
    %1718 = vmatpush1.msra.mxu0 0.0
    %1719 = vmatprep.subr.mxu0 0.0
    %1720 = vmatpush1.msra.mxu0 0.0
    %1721 = vmatprep.subr.mxu0 0.0
    %1722 = vmatpush1.msra.mxu0 0.0
    %1723 = vmatprep.subr.mxu0 0.0
    %1724 = vmatpush1.msra.mxu0 0.0
    %1725 = vmatprep.subr.mxu0 0.0
    %1726 = vmatpush1.msra.mxu0 0.0
    %1727 = vmatprep.mubr.f32.mxu0 0.0
    %1728 = vmatmul.mubr.f32.gmra.mrb[0].mxu0 %v1661
    %v1729 = vpop.f32.mrb[0].mxu0
    %v1730 = vadd.f32 0.0, %v1729
    %v1731 = vpop.f32.mrb[0].mxu0
    %1732 = vdwg.mxu0
    %v1733 = vadd.f32 %v1657, %v1730
    %v1734 = vxor.u32 %v1733, 2147483648
    %v1735 = vmul.f32 %v1734, 1.442695
    %v1736 = vpow.pop %v1735
    %v1737 = vadd.f32 %v1736, 1.0
    %v1738 = vrcp.pop %v1737
    %v1739 = vmul.f32 1.0, %v1738
    %v1740 = vtanh.pop %v1733
    %v1741 = vmul.f32 %v1739, %v1650
    %1743 = vrot.lane.b32.xlu0 %v1740, 32
    %v1744 = vpop.permute.xlu0 %1743
    %v1746 = vmul.f32 %v1739, %v1744
    %1748 = vrot.lane.b32.xlu0 %v1746, 32
    %v1749 = vpop.permute.xlu0 %1748
    %v1751 = vadd.f32 %v1741, %v1749
    %v1752 = vtanh.pop %v1751
    %1754 = vrot.lane.b32.xlu0 %v1752, 32
    %v1755 = vpop.permute.xlu0 %1754
    %v1757 = vmul.f32 %v1739, %v1755
    %v1758 = vld [vmem:[#allocation2 + $0x28] sm:$0xff]
    %1760 = vrot.lane.b32.xlu0 %v1757, 64
    %v1761 = vpop.permute.xlu0 %1760
    %v1762 = vsel %vm273, %v1761, 0
    %1764 = vmatprep.subr.mxu0 0.0
    %1765 = vmatpush1.msra.mxu0 %v1254
    %1766 = vmatprep.subr.mxu0 0.0
    %1767 = vmatpush1.msra.mxu0 %v1255
    %1768 = vmatprep.subr.mxu0 0.0
    %1769 = vmatpush1.msra.mxu0 %v1256
    %1770 = vmatprep.subr.mxu0 0.0
    %1771 = vmatpush1.msra.mxu0 %v1257
    %1772 = vmatprep.subr.mxu0 0.0
    %1773 = vmatpush1.msra.mxu0 0.0
    %1774 = vmatprep.subr.mxu0 0.0
    %1775 = vmatpush1.msra.mxu0 0.0
    %1776 = vmatprep.subr.mxu0 0.0
    %1777 = vmatpush1.msra.mxu0 0.0
    %1778 = vmatprep.subr.mxu0 0.0
    %1779 = vmatpush1.msra.mxu0 0.0
    %1780 = vmatprep.subr.mxu0 0.0
    %1781 = vmatpush1.msra.mxu0 0.0
    %1782 = vmatprep.subr.mxu0 0.0
    %1783 = vmatpush1.msra.mxu0 0.0
    %1784 = vmatprep.subr.mxu0 0.0
    %1785 = vmatpush1.msra.mxu0 0.0
    %1786 = vmatprep.subr.mxu0 0.0
    %1787 = vmatpush1.msra.mxu0 0.0
    %1788 = vmatprep.subr.mxu0 0.0
    %1789 = vmatpush1.msra.mxu0 0.0
    %1790 = vmatprep.subr.mxu0 0.0
    %1791 = vmatpush1.msra.mxu0 0.0
    %1792 = vmatprep.subr.mxu0 0.0
    %1793 = vmatpush1.msra.mxu0 0.0
    %1794 = vmatprep.subr.mxu0 0.0
    %1795 = vmatpush1.msra.mxu0 0.0
    %1796 = vmatprep.subr.mxu0 0.0
    %1797 = vmatpush1.msra.mxu0 0.0
    %1798 = vmatprep.subr.mxu0 0.0
    %1799 = vmatpush1.msra.mxu0 0.0
    %1800 = vmatprep.subr.mxu0 0.0
    %1801 = vmatpush1.msra.mxu0 0.0
    %1802 = vmatprep.subr.mxu0 0.0
    %1803 = vmatpush1.msra.mxu0 0.0
    %1804 = vmatprep.subr.mxu0 0.0
    %1805 = vmatpush1.msra.mxu0 0.0
    %1806 = vmatprep.subr.mxu0 0.0
    %1807 = vmatpush1.msra.mxu0 0.0
    %1808 = vmatprep.subr.mxu0 0.0
    %1809 = vmatpush1.msra.mxu0 0.0
    %1810 = vmatprep.subr.mxu0 0.0
    %1811 = vmatpush1.msra.mxu0 0.0
    %1812 = vmatprep.subr.mxu0 0.0
    %1813 = vmatpush1.msra.mxu0 0.0
    %1814 = vmatprep.subr.mxu0 0.0
    %1815 = vmatpush1.msra.mxu0 0.0
    %1816 = vmatprep.subr.mxu0 0.0
    %1817 = vmatpush1.msra.mxu0 0.0
    %1818 = vmatprep.subr.mxu0 0.0
    %1819 = vmatpush1.msra.mxu0 0.0
    %1820 = vmatprep.subr.mxu0 0.0
    %1821 = vmatpush1.msra.mxu0 0.0
    %1822 = vmatprep.subr.mxu0 0.0
    %1823 = vmatpush1.msra.mxu0 0.0
    %1824 = vmatprep.subr.mxu0 0.0
    %1825 = vmatpush1.msra.mxu0 0.0
    %1826 = vmatprep.subr.mxu0 0.0
    %1827 = vmatpush1.msra.mxu0 0.0
    %1828 = vmatprep.mubr.f32.mxu0 0.0
    %1829 = vmatmul.mubr.f32.gmra.mrb[0].mxu0 %v1762
    %v1830 = vpop.f32.mrb[0].mxu0
    %v1831 = vadd.f32 0.0, %v1830
    %v1832 = vpop.f32.mrb[0].mxu0
    %1833 = vdwg.mxu0
    %v1834 = vadd.f32 %v1758, %v1831
    %v1835 = vxor.u32 %v1834, 2147483648
    %v1836 = vmul.f32 %v1835, 1.442695
    %v1837 = vpow.pop %v1836
    %v1838 = vadd.f32 %v1837, 1.0
    %v1839 = vrcp.pop %v1838
    %v1840 = vmul.f32 1.0, %v1839
    %v1841 = vtanh.pop %v1834
    %v1842 = vmul.f32 %v1840, %v1751
    %1844 = vrot.lane.b32.xlu0 %v1841, 32
    %v1845 = vpop.permute.xlu0 %1844
    %v1847 = vmul.f32 %v1840, %v1845
    %1849 = vrot.lane.b32.xlu0 %v1847, 32
    %v1850 = vpop.permute.xlu0 %1849
    %v1852 = vadd.f32 %v1842, %v1850
    %v1853 = vtanh.pop %v1852
    %1855 = vrot.lane.b32.xlu0 %v1853, 32
    %v1856 = vpop.permute.xlu0 %1855
    %v1858 = vmul.f32 %v1840, %v1856
    %v1859 = vld [vmem:[#allocation2 + $0x30] sm:$0xff]
    %1861 = vrot.lane.b32.xlu0 %v1858, 64
    %v1862 = vpop.permute.xlu0 %1861
    %v1863 = vsel %vm273, %v1862, 0
    %1865 = vmatprep.subr.mxu0 0.0
    %1866 = vmatpush1.msra.mxu0 %v1254
    %1867 = vmatprep.subr.mxu0 0.0
    %1868 = vmatpush1.msra.mxu0 %v1255
    %1869 = vmatprep.subr.mxu0 0.0
    %1870 = vmatpush1.msra.mxu0 %v1256
    %1871 = vmatprep.subr.mxu0 0.0
    %1872 = vmatpush1.msra.mxu0 %v1257
    %1873 = vmatprep.subr.mxu0 0.0
    %1874 = vmatpush1.msra.mxu0 0.0
    %1875 = vmatprep.subr.mxu0 0.0
    %1876 = vmatpush1.msra.mxu0 0.0
    %1877 = vmatprep.subr.mxu0 0.0
    %1878 = vmatpush1.msra.mxu0 0.0
    %1879 = vmatprep.subr.mxu0 0.0
    %1880 = vmatpush1.msra.mxu0 0.0
    %1881 = vmatprep.subr.mxu0 0.0
    %1882 = vmatpush1.msra.mxu0 0.0
    %1883 = vmatprep.subr.mxu0 0.0
    %1884 = vmatpush1.msra.mxu0 0.0
    %1885 = vmatprep.subr.mxu0 0.0
    %1886 = vmatpush1.msra.mxu0 0.0
    %1887 = vmatprep.subr.mxu0 0.0
    %1888 = vmatpush1.msra.mxu0 0.0
    %1889 = vmatprep.subr.mxu0 0.0
    %1890 = vmatpush1.msra.mxu0 0.0
    %1891 = vmatprep.subr.mxu0 0.0
    %1892 = vmatpush1.msra.mxu0 0.0
    %1893 = vmatprep.subr.mxu0 0.0
    %1894 = vmatpush1.msra.mxu0 0.0
    %1895 = vmatprep.subr.mxu0 0.0
    %1896 = vmatpush1.msra.mxu0 0.0
    %1897 = vmatprep.subr.mxu0 0.0
    %1898 = vmatpush1.msra.mxu0 0.0
    %1899 = vmatprep.subr.mxu0 0.0
    %1900 = vmatpush1.msra.mxu0 0.0
    %1901 = vmatprep.subr.mxu0 0.0
    %1902 = vmatpush1.msra.mxu0 0.0
    %1903 = vmatprep.subr.mxu0 0.0
    %1904 = vmatpush1.msra.mxu0 0.0
    %1905 = vmatprep.subr.mxu0 0.0
    %1906 = vmatpush1.msra.mxu0 0.0
    %1907 = vmatprep.subr.mxu0 0.0
    %1908 = vmatpush1.msra.mxu0 0.0
    %1909 = vmatprep.subr.mxu0 0.0
    %1910 = vmatpush1.msra.mxu0 0.0
    %1911 = vmatprep.subr.mxu0 0.0
    %1912 = vmatpush1.msra.mxu0 0.0
    %1913 = vmatprep.subr.mxu0 0.0
    %1914 = vmatpush1.msra.mxu0 0.0
    %1915 = vmatprep.subr.mxu0 0.0
    %1916 = vmatpush1.msra.mxu0 0.0
    %1917 = vmatprep.subr.mxu0 0.0
    %1918 = vmatpush1.msra.mxu0 0.0
    %1919 = vmatprep.subr.mxu0 0.0
    %1920 = vmatpush1.msra.mxu0 0.0
    %1921 = vmatprep.subr.mxu0 0.0
    %1922 = vmatpush1.msra.mxu0 0.0
    %1923 = vmatprep.subr.mxu0 0.0
    %1924 = vmatpush1.msra.mxu0 0.0
    %1925 = vmatprep.subr.mxu0 0.0
    %1926 = vmatpush1.msra.mxu0 0.0
    %1927 = vmatprep.subr.mxu0 0.0
    %1928 = vmatpush1.msra.mxu0 0.0
    %1929 = vmatprep.mubr.f32.mxu0 0.0
    %1930 = vmatmul.mubr.f32.gmra.mrb[0].mxu0 %v1863
    %v1931 = vpop.f32.mrb[0].mxu0
    %v1932 = vadd.f32 0.0, %v1931
    %v1933 = vpop.f32.mrb[0].mxu0
    %1934 = vdwg.mxu0
    %v1935 = vadd.f32 %v1859, %v1932
    %v1936 = vxor.u32 %v1935, 2147483648
    %v1937 = vmul.f32 %v1936, 1.442695
    %v1938 = vpow.pop %v1937
    %v1939 = vadd.f32 %v1938, 1.0
    %v1940 = vrcp.pop %v1939
    %v1941 = vmul.f32 1.0, %v1940
    %v1942 = vtanh.pop %v1935
    %v1943 = vmul.f32 %v1941, %v1852
    %1945 = vrot.lane.b32.xlu0 %v1942, 32
    %v1946 = vpop.permute.xlu0 %1945
    %v1948 = vmul.f32 %v1941, %v1946
    %1950 = vrot.lane.b32.xlu0 %v1948, 32
    %v1951 = vpop.permute.xlu0 %1950
    %v1953 = vadd.f32 %v1943, %v1951
    %v1954 = vtanh.pop %v1953
    %1956 = vrot.lane.b32.xlu0 %v1954, 32
    %v1957 = vpop.permute.xlu0 %1956
    %v1959 = vmul.f32 %v1941, %v1957
    %v1960 = vld [vmem:[#allocation2 + $0x38] sm:$0xff]
    %1962 = vrot.lane.b32.xlu0 %v1959, 64
    %v1963 = vpop.permute.xlu0 %1962
    %v1964 = vsel %vm273, %v1963, 0
    %1966 = vmatprep.subr.mxu0 0.0
    %1967 = vmatpush1.msra.mxu0 %v1254
    %1968 = vmatprep.subr.mxu0 0.0
    %1969 = vmatpush1.msra.mxu0 %v1255
    %1970 = vmatprep.subr.mxu0 0.0
    %1971 = vmatpush1.msra.mxu0 %v1256
    %1972 = vmatprep.subr.mxu0 0.0
    %1973 = vmatpush1.msra.mxu0 %v1257
    %1974 = vmatprep.subr.mxu0 0.0
    %1975 = vmatpush1.msra.mxu0 0.0
    %1976 = vmatprep.subr.mxu0 0.0
    %1977 = vmatpush1.msra.mxu0 0.0
    %1978 = vmatprep.subr.mxu0 0.0
    %1979 = vmatpush1.msra.mxu0 0.0
    %1980 = vmatprep.subr.mxu0 0.0
    %1981 = vmatpush1.msra.mxu0 0.0
    %1982 = vmatprep.subr.mxu0 0.0
    %1983 = vmatpush1.msra.mxu0 0.0
    %1984 = vmatprep.subr.mxu0 0.0
    %1985 = vmatpush1.msra.mxu0 0.0
    %1986 = vmatprep.subr.mxu0 0.0
    %1987 = vmatpush1.msra.mxu0 0.0
    %1988 = vmatprep.subr.mxu0 0.0
    %1989 = vmatpush1.msra.mxu0 0.0
    %1990 = vmatprep.subr.mxu0 0.0
    %1991 = vmatpush1.msra.mxu0 0.0
    %1992 = vmatprep.subr.mxu0 0.0
    %1993 = vmatpush1.msra.mxu0 0.0
    %1994 = vmatprep.subr.mxu0 0.0
    %1995 = vmatpush1.msra.mxu0 0.0
    %1996 = vmatprep.subr.mxu0 0.0
    %1997 = vmatpush1.msra.mxu0 0.0
    %1998 = vmatprep.subr.mxu0 0.0
    %1999 = vmatpush1.msra.mxu0 0.0
    %2000 = vmatprep.subr.mxu0 0.0
    %2001 = vmatpush1.msra.mxu0 0.0
    %2002 = vmatprep.subr.mxu0 0.0
    %2003 = vmatpush1.msra.mxu0 0.0
    %2004 = vmatprep.subr.mxu0 0.0
    %2005 = vmatpush1.msra.mxu0 0.0
    %2006 = vmatprep.subr.mxu0 0.0
    %2007 = vmatpush1.msra.mxu0 0.0
    %2008 = vmatprep.subr.mxu0 0.0
    %2009 = vmatpush1.msra.mxu0 0.0
    %2010 = vmatprep.subr.mxu0 0.0
    %2011 = vmatpush1.msra.mxu0 0.0
    %2012 = vmatprep.subr.mxu0 0.0
    %2013 = vmatpush1.msra.mxu0 0.0
    %2014 = vmatprep.subr.mxu0 0.0
    %2015 = vmatpush1.msra.mxu0 0.0
    %2016 = vmatprep.subr.mxu0 0.0
    %2017 = vmatpush1.msra.mxu0 0.0
    %2018 = vmatprep.subr.mxu0 0.0
    %2019 = vmatpush1.msra.mxu0 0.0
    %2020 = vmatprep.subr.mxu0 0.0
    %2021 = vmatpush1.msra.mxu0 0.0
    %2022 = vmatprep.subr.mxu0 0.0
    %2023 = vmatpush1.msra.mxu0 0.0
    %2024 = vmatprep.subr.mxu0 0.0
    %2025 = vmatpush1.msra.mxu0 0.0
    %2026 = vmatprep.subr.mxu0 0.0
    %2027 = vmatpush1.msra.mxu0 0.0
    %2028 = vmatprep.subr.mxu0 0.0
    %2029 = vmatpush1.msra.mxu0 0.0
    %2030 = vmatprep.mubr.f32.mxu0 0.0
    %2031 = vmatmul.mubr.f32.gmra.mrb[0].mxu0 %v1964
    %v2032 = vpop.f32.mrb[0].mxu0
    %v2033 = vadd.f32 0.0, %v2032
    %v2034 = vpop.f32.mrb[0].mxu0
    %2035 = vdwg.mxu0
    %v2036 = vadd.f32 %v1960, %v2033
    %v2037 = vxor.u32 %v2036, 2147483648
    %v2038 = vmul.f32 %v2037, 1.442695
    %v2039 = vpow.pop %v2038
    %v2040 = vadd.f32 %v2039, 1.0
    %v2041 = vrcp.pop %v2040
    %v2042 = vmul.f32 1.0, %v2041
    %v2043 = vtanh.pop %v2036
    %v2044 = vmul.f32 %v2042, %v1953
    %2046 = vrot.lane.b32.xlu0 %v2043, 32
    %v2047 = vpop.permute.xlu0 %2046
    %v2049 = vmul.f32 %v2042, %v2047
    %2051 = vrot.lane.b32.xlu0 %v2049, 32
    %v2052 = vpop.permute.xlu0 %2051
    %v2054 = vadd.f32 %v2044, %v2052
    %v2055 = vtanh.pop %v2054
    %2057 = vrot.lane.b32.xlu0 %v2055, 32
    %v2058 = vpop.permute.xlu0 %2057
    %v2060 = vmul.f32 %v2042, %v2058
    %v2061 = vld [vmem:[%s8] sm:$0x1]
    %v2062 = vtanh.pop %v1092
    %v2063 = vld [vmem:[#allocation9] sm:$0xff]
    %v2064 = vld [vmem:[#allocation9 + $0x8] sm:$0xff]
    %v2065 = vld [vmem:[#allocation9 + $0x10] sm:$0xff]
    %v2066 = vld [vmem:[#allocation9 + $0x18] sm:$0xff]
    %2068 = vrot.lane.b32.xlu0 %v2062, 64
    %v2069 = vpop.permute.xlu0 %2068
    %v2070 = vsel %vm273, %v2069, 0
    %2072 = vmatprep.subr.mxu0 0.0
    %2073 = vmatpush1.msra.mxu0 %v2063
    %2074 = vmatprep.subr.mxu0 0.0
    %2075 = vmatpush1.msra.mxu0 %v2064
    %2076 = vmatprep.subr.mxu0 0.0
    %2077 = vmatpush1.msra.mxu0 %v2065
    %2078 = vmatprep.subr.mxu0 0.0
    %2079 = vmatpush1.msra.mxu0 %v2066
    %2080 = vmatprep.subr.mxu0 0.0
    %2081 = vmatpush1.msra.mxu0 0.0
    %2082 = vmatprep.subr.mxu0 0.0
    %2083 = vmatpush1.msra.mxu0 0.0
    %2084 = vmatprep.subr.mxu0 0.0
    %2085 = vmatpush1.msra.mxu0 0.0
    %2086 = vmatprep.subr.mxu0 0.0
    %2087 = vmatpush1.msra.mxu0 0.0
    %2088 = vmatprep.subr.mxu0 0.0
    %2089 = vmatpush1.msra.mxu0 0.0
    %2090 = vmatprep.subr.mxu0 0.0
    %2091 = vmatpush1.msra.mxu0 0.0
    %2092 = vmatprep.subr.mxu0 0.0
    %2093 = vmatpush1.msra.mxu0 0.0
    %2094 = vmatprep.subr.mxu0 0.0
    %2095 = vmatpush1.msra.mxu0 0.0
    %2096 = vmatprep.subr.mxu0 0.0
    %2097 = vmatpush1.msra.mxu0 0.0
    %2098 = vmatprep.subr.mxu0 0.0
    %2099 = vmatpush1.msra.mxu0 0.0
    %2100 = vmatprep.subr.mxu0 0.0
    %2101 = vmatpush1.msra.mxu0 0.0
    %2102 = vmatprep.subr.mxu0 0.0
    %2103 = vmatpush1.msra.mxu0 0.0
    %2104 = vmatprep.subr.mxu0 0.0
    %2105 = vmatpush1.msra.mxu0 0.0
    %2106 = vmatprep.subr.mxu0 0.0
    %2107 = vmatpush1.msra.mxu0 0.0
    %2108 = vmatprep.subr.mxu0 0.0
    %2109 = vmatpush1.msra.mxu0 0.0
    %2110 = vmatprep.subr.mxu0 0.0
    %2111 = vmatpush1.msra.mxu0 0.0
    %2112 = vmatprep.subr.mxu0 0.0
    %2113 = vmatpush1.msra.mxu0 0.0
    %2114 = vmatprep.subr.mxu0 0.0
    %2115 = vmatpush1.msra.mxu0 0.0
    %2116 = vmatprep.subr.mxu0 0.0
    %2117 = vmatpush1.msra.mxu0 0.0
    %2118 = vmatprep.subr.mxu0 0.0
    %2119 = vmatpush1.msra.mxu0 0.0
    %2120 = vmatprep.subr.mxu0 0.0
    %2121 = vmatpush1.msra.mxu0 0.0
    %2122 = vmatprep.subr.mxu0 0.0
    %2123 = vmatpush1.msra.mxu0 0.0
    %2124 = vmatprep.subr.mxu0 0.0
    %2125 = vmatpush1.msra.mxu0 0.0
    %2126 = vmatprep.subr.mxu0 0.0
    %2127 = vmatpush1.msra.mxu0 0.0
    %2128 = vmatprep.subr.mxu0 0.0
    %2129 = vmatpush1.msra.mxu0 0.0
    %2130 = vmatprep.subr.mxu0 0.0
    %2131 = vmatpush1.msra.mxu0 0.0
    %2132 = vmatprep.subr.mxu0 0.0
    %2133 = vmatpush1.msra.mxu0 0.0
    %2134 = vmatprep.subr.mxu0 0.0
    %2135 = vmatpush1.msra.mxu0 0.0
    %2136 = vmatprep.mubr.f32.mxu0 0.0
    %2137 = vmatmul.mubr.f32.gmra.mrb[0].mxu0 %v2070
    %v2138 = vpop.f32.mrb[0].mxu0
    %v2139 = vadd.f32 0.0, %v2138
    %v2140 = vpop.f32.mrb[0].mxu0
    %2141 = vdwg.mxu0
    %v2143 = vlaneseq
    %v2144 = vshrl.u32 %v2143, 7
    %v2145 = vsub.s32 0, %v2144
    %v2146 = vrot.slane %v2061, %v2145
    %v2148 = vadd.f32 %v2146, %v2139
    %v2149 = vld [vmem:[#allocation9 + $0x20] sm:$0xff]
    %v2150 = vld [vmem:[#allocation9 + $0x28] sm:$0xff]
    %v2151 = vld [vmem:[#allocation9 + $0x30] sm:$0xff]
    %v2152 = vld [vmem:[#allocation9 + $0x38] sm:$0xff]
    %2153 = vrot.lane.b32.xlu0 %v1087, 96
    %v2154 = vpop.permute.xlu0 %2153
    %v2155 = vsel %vm273, %v2154, 0
    %2157 = vmatprep.subr.mxu0 0.0
    %2158 = vmatpush1.msra.mxu0 %v2149
    %2159 = vmatprep.subr.mxu0 0.0
    %2160 = vmatpush1.msra.mxu0 %v2150
    %2161 = vmatprep.subr.mxu0 0.0
    %2162 = vmatpush1.msra.mxu0 %v2151
    %2163 = vmatprep.subr.mxu0 0.0
    %2164 = vmatpush1.msra.mxu0 %v2152
    %2165 = vmatprep.subr.mxu0 0.0
    %2166 = vmatpush1.msra.mxu0 0.0
    %2167 = vmatprep.subr.mxu0 0.0
    %2168 = vmatpush1.msra.mxu0 0.0
    %2169 = vmatprep.subr.mxu0 0.0
    %2170 = vmatpush1.msra.mxu0 0.0
    %2171 = vmatprep.subr.mxu0 0.0
    %2172 = vmatpush1.msra.mxu0 0.0
    %2173 = vmatprep.subr.mxu0 0.0
    %2174 = vmatpush1.msra.mxu0 0.0
    %2175 = vmatprep.subr.mxu0 0.0
    %2176 = vmatpush1.msra.mxu0 0.0
    %2177 = vmatprep.subr.mxu0 0.0
    %2178 = vmatpush1.msra.mxu0 0.0
    %2179 = vmatprep.subr.mxu0 0.0
    %2180 = vmatpush1.msra.mxu0 0.0
    %2181 = vmatprep.subr.mxu0 0.0
    %2182 = vmatpush1.msra.mxu0 0.0
    %2183 = vmatprep.subr.mxu0 0.0
    %2184 = vmatpush1.msra.mxu0 0.0
    %2185 = vmatprep.subr.mxu0 0.0
    %2186 = vmatpush1.msra.mxu0 0.0
    %2187 = vmatprep.subr.mxu0 0.0
    %2188 = vmatpush1.msra.mxu0 0.0
    %2189 = vmatprep.subr.mxu0 0.0
    %2190 = vmatpush1.msra.mxu0 0.0
    %2191 = vmatprep.subr.mxu0 0.0
    %2192 = vmatpush1.msra.mxu0 0.0
    %2193 = vmatprep.subr.mxu0 0.0
    %2194 = vmatpush1.msra.mxu0 0.0
    %2195 = vmatprep.subr.mxu0 0.0
    %2196 = vmatpush1.msra.mxu0 0.0
    %2197 = vmatprep.subr.mxu0 0.0
    %2198 = vmatpush1.msra.mxu0 0.0
    %2199 = vmatprep.subr.mxu0 0.0
    %2200 = vmatpush1.msra.mxu0 0.0
    %2201 = vmatprep.subr.mxu0 0.0
    %2202 = vmatpush1.msra.mxu0 0.0
    %2203 = vmatprep.subr.mxu0 0.0
    %2204 = vmatpush1.msra.mxu0 0.0
    %2205 = vmatprep.subr.mxu0 0.0
    %2206 = vmatpush1.msra.mxu0 0.0
    %2207 = vmatprep.subr.mxu0 0.0
    %2208 = vmatpush1.msra.mxu0 0.0
    %2209 = vmatprep.subr.mxu0 0.0
    %2210 = vmatpush1.msra.mxu0 0.0
    %2211 = vmatprep.subr.mxu0 0.0
    %2212 = vmatpush1.msra.mxu0 0.0
    %2213 = vmatprep.subr.mxu0 0.0
    %2214 = vmatpush1.msra.mxu0 0.0
    %2215 = vmatprep.subr.mxu0 0.0
    %2216 = vmatpush1.msra.mxu0 0.0
    %2217 = vmatprep.subr.mxu0 0.0
    %2218 = vmatpush1.msra.mxu0 0.0
    %2219 = vmatprep.subr.mxu0 0.0
    %2220 = vmatpush1.msra.mxu0 0.0
    %2221 = vmatprep.mubr.f32.mxu0 0.0
    %2222 = vmatmul.mubr.f32.gmra.mrb[0].mxu0 %v2155
    %v2223 = vpop.f32.mrb[0].mxu0
    %v2224 = vadd.f32 0.0, %v2223
    %v2225 = vpop.f32.mrb[0].mxu0
    %2226 = vdwg.mxu0
    %v2227 = vadd.f32 %v2148, %v2224
    %v2228 = vtanh.pop %v2060
    %v2229 = vld [vmem:[#allocation9 + $0x40] sm:$0xff]
    %v2230 = vld [vmem:[#allocation9 + $0x48] sm:$0xff]
    %v2231 = vld [vmem:[#allocation9 + $0x50] sm:$0xff]
    %v2232 = vld [vmem:[#allocation9 + $0x58] sm:$0xff]
    %2234 = vrot.lane.b32.xlu0 %v2228, 64
    %v2235 = vpop.permute.xlu0 %2234
    %v2236 = vsel %vm273, %v2235, 0
    %2238 = vmatprep.subr.mxu0 0.0
    %2239 = vmatpush1.msra.mxu0 %v2229
    %2240 = vmatprep.subr.mxu0 0.0
    %2241 = vmatpush1.msra.mxu0 %v2230
    %2242 = vmatprep.subr.mxu0 0.0
    %2243 = vmatpush1.msra.mxu0 %v2231
    %2244 = vmatprep.subr.mxu0 0.0
    %2245 = vmatpush1.msra.mxu0 %v2232
    %2246 = vmatprep.subr.mxu0 0.0
    %2247 = vmatpush1.msra.mxu0 0.0
    %2248 = vmatprep.subr.mxu0 0.0
    %2249 = vmatpush1.msra.mxu0 0.0
    %2250 = vmatprep.subr.mxu0 0.0
    %2251 = vmatpush1.msra.mxu0 0.0
    %2252 = vmatprep.subr.mxu0 0.0
    %2253 = vmatpush1.msra.mxu0 0.0
    %2254 = vmatprep.subr.mxu0 0.0
    %2255 = vmatpush1.msra.mxu0 0.0
    %2256 = vmatprep.subr.mxu0 0.0
    %2257 = vmatpush1.msra.mxu0 0.0
    %2258 = vmatprep.subr.mxu0 0.0
    %2259 = vmatpush1.msra.mxu0 0.0
    %2260 = vmatprep.subr.mxu0 0.0
    %2261 = vmatpush1.msra.mxu0 0.0
    %2262 = vmatprep.subr.mxu0 0.0
    %2263 = vmatpush1.msra.mxu0 0.0
    %2264 = vmatprep.subr.mxu0 0.0
    %2265 = vmatpush1.msra.mxu0 0.0
    %2266 = vmatprep.subr.mxu0 0.0
    %2267 = vmatpush1.msra.mxu0 0.0
    %2268 = vmatprep.subr.mxu0 0.0
    %2269 = vmatpush1.msra.mxu0 0.0
    %2270 = vmatprep.subr.mxu0 0.0
    %2271 = vmatpush1.msra.mxu0 0.0
    %2272 = vmatprep.subr.mxu0 0.0
    %2273 = vmatpush1.msra.mxu0 0.0
    %2274 = vmatprep.subr.mxu0 0.0
    %2275 = vmatpush1.msra.mxu0 0.0
    %2276 = vmatprep.subr.mxu0 0.0
    %2277 = vmatpush1.msra.mxu0 0.0
    %2278 = vmatprep.subr.mxu0 0.0
    %2279 = vmatpush1.msra.mxu0 0.0
    %2280 = vmatprep.subr.mxu0 0.0
    %2281 = vmatpush1.msra.mxu0 0.0
    %2282 = vmatprep.subr.mxu0 0.0
    %2283 = vmatpush1.msra.mxu0 0.0
    %2284 = vmatprep.subr.mxu0 0.0
    %2285 = vmatpush1.msra.mxu0 0.0
    %2286 = vmatprep.subr.mxu0 0.0
    %2287 = vmatpush1.msra.mxu0 0.0
    %2288 = vmatprep.subr.mxu0 0.0
    %2289 = vmatpush1.msra.mxu0 0.0
    %2290 = vmatprep.subr.mxu0 0.0
    %2291 = vmatpush1.msra.mxu0 0.0
    %2292 = vmatprep.subr.mxu0 0.0
    %2293 = vmatpush1.msra.mxu0 0.0
    %2294 = vmatprep.subr.mxu0 0.0
    %2295 = vmatpush1.msra.mxu0 0.0
    %2296 = vmatprep.subr.mxu0 0.0
    %2297 = vmatpush1.msra.mxu0 0.0
    %2298 = vmatprep.subr.mxu0 0.0
    %2299 = vmatpush1.msra.mxu0 0.0
    %2300 = vmatprep.subr.mxu0 0.0
    %2301 = vmatpush1.msra.mxu0 0.0
    %2302 = vmatprep.mubr.f32.mxu0 0.0
    %2303 = vmatmul.mubr.f32.gmra.mrb[0].mxu0 %v2236
    %v2304 = vpop.f32.mrb[0].mxu0
    %v2305 = vadd.f32 0.0, %v2304
    %v2306 = vpop.f32.mrb[0].mxu0
    %2307 = vdwg.mxu0
    %v2308 = vadd.f32 %v2227, %v2305
    %v2309 = vld [vmem:[#allocation9 + $0x60] sm:$0xff]
    %v2310 = vld [vmem:[#allocation9 + $0x68] sm:$0xff]
    %v2311 = vld [vmem:[#allocation9 + $0x70] sm:$0xff]
    %v2312 = vld [vmem:[#allocation9 + $0x78] sm:$0xff]
    %2313 = vrot.lane.b32.xlu0 %v2055, 96
    %v2314 = vpop.permute.xlu0 %2313
    %v2315 = vsel %vm273, %v2314, 0
    %2317 = vmatprep.subr.mxu0 0.0
    %2318 = vmatpush1.msra.mxu0 %v2309
    %2319 = vmatprep.subr.mxu0 0.0
    %2320 = vmatpush1.msra.mxu0 %v2310
    %2321 = vmatprep.subr.mxu0 0.0
    %2322 = vmatpush1.msra.mxu0 %v2311
    %2323 = vmatprep.subr.mxu0 0.0
    %2324 = vmatpush1.msra.mxu0 %v2312
    %2325 = vmatprep.subr.mxu0 0.0
    %2326 = vmatpush1.msra.mxu0 0.0
    %2327 = vmatprep.subr.mxu0 0.0
    %2328 = vmatpush1.msra.mxu0 0.0
    %2329 = vmatprep.subr.mxu0 0.0
    %2330 = vmatpush1.msra.mxu0 0.0
    %2331 = vmatprep.subr.mxu0 0.0
    %2332 = vmatpush1.msra.mxu0 0.0
    %2333 = vmatprep.subr.mxu0 0.0
    %2334 = vmatpush1.msra.mxu0 0.0
    %2335 = vmatprep.subr.mxu0 0.0
    %2336 = vmatpush1.msra.mxu0 0.0
    %2337 = vmatprep.subr.mxu0 0.0
    %2338 = vmatpush1.msra.mxu0 0.0
    %2339 = vmatprep.subr.mxu0 0.0
    %2340 = vmatpush1.msra.mxu0 0.0
    %2341 = vmatprep.subr.mxu0 0.0
    %2342 = vmatpush1.msra.mxu0 0.0
    %2343 = vmatprep.subr.mxu0 0.0
    %2344 = vmatpush1.msra.mxu0 0.0
    %2345 = vmatprep.subr.mxu0 0.0
    %2346 = vmatpush1.msra.mxu0 0.0
    %2347 = vmatprep.subr.mxu0 0.0
    %2348 = vmatpush1.msra.mxu0 0.0
    %2349 = vmatprep.subr.mxu0 0.0
    %2350 = vmatpush1.msra.mxu0 0.0
    %2351 = vmatprep.subr.mxu0 0.0
    %2352 = vmatpush1.msra.mxu0 0.0
    %2353 = vmatprep.subr.mxu0 0.0
    %2354 = vmatpush1.msra.mxu0 0.0
    %2355 = vmatprep.subr.mxu0 0.0
    %2356 = vmatpush1.msra.mxu0 0.0
    %2357 = vmatprep.subr.mxu0 0.0
    %2358 = vmatpush1.msra.mxu0 0.0
    %2359 = vmatprep.subr.mxu0 0.0
    %2360 = vmatpush1.msra.mxu0 0.0
    %2361 = vmatprep.subr.mxu0 0.0
    %2362 = vmatpush1.msra.mxu0 0.0
    %2363 = vmatprep.subr.mxu0 0.0
    %2364 = vmatpush1.msra.mxu0 0.0
    %2365 = vmatprep.subr.mxu0 0.0
    %2366 = vmatpush1.msra.mxu0 0.0
    %2367 = vmatprep.subr.mxu0 0.0
    %2368 = vmatpush1.msra.mxu0 0.0
    %2369 = vmatprep.subr.mxu0 0.0
    %2370 = vmatpush1.msra.mxu0 0.0
    %2371 = vmatprep.subr.mxu0 0.0
    %2372 = vmatpush1.msra.mxu0 0.0
    %2373 = vmatprep.subr.mxu0 0.0
    %2374 = vmatpush1.msra.mxu0 0.0
    %2375 = vmatprep.subr.mxu0 0.0
    %2376 = vmatpush1.msra.mxu0 0.0
    %2377 = vmatprep.subr.mxu0 0.0
    %2378 = vmatpush1.msra.mxu0 0.0
    %2379 = vmatprep.subr.mxu0 0.0
    %2380 = vmatpush1.msra.mxu0 0.0
    %2381 = vmatprep.mubr.f32.mxu0 0.0
    %2382 = vmatmul.mubr.f32.gmra.mrb[0].mxu0 %v2315
    %v2383 = vpop.f32.mrb[0].mxu0
    %v2384 = vadd.f32 0.0, %v2383
    %v2385 = vpop.f32.mrb[0].mxu0
    %2386 = vdwg.mxu0
    %v2387 = vadd.f32 %v2308, %v2384
    %2388 = vst [vmem:[#allocation10] sm:$0xff] %v2387
    // Predicated region
    $region50: #{tpu_custom_call.1} parent=1 // pred_check
      _
    $region51: #{tpu_custom_call.1} parent=1 // pred_check_branch
      %2390 = sbr.rel (0) target = $region53
    $region52: #{tpu_custom_call.1} parent=1 // pred_region
      %s2392 = ssub.s32 128, 128
      %2393 = vsyncadd [#allocation6], %s2392
      %s2395 = sshll.u32 [#allocation10], 4
      %s2396 = int_to_ptr.vmem [resolvable:$true] %s2395
      %2398 = dma.vmem_to_hbm [thread:$0]  %s2396, 128, %s9, [#allocation6]
    $region53: #{tpu_custom_call.1} parent=1 // pred_fallthru
      _
    // Predicated region
    $region54: #{tpu_custom_call.1} parent=1 // pred_check
      _
    $region55: #{tpu_custom_call.1} parent=1 // pred_check_branch
      %2400 = sbr.rel (0) target = $region57
    $region56: #{tpu_custom_call.1} parent=1 // pred_region
      %2401 = dma.done [#allocation6], 128
    $region57: #{tpu_custom_call.1} parent=1 // pred_fallthru
      _
    %2402 = vsyncpa [#allocation5], 1
    %2403 = vsyncpa [#allocation8], 1
    %2404 = vsyncpa [#allocation6], 1

</llo_original>
